<compile_context>
chip_gen: v7x
topology: tpu7x:2x2x1
jax: 0.10.0
libtpu: 0.0.40
codegen_flags: <defaults>
</compile_context>

<pallas_src>
import functools

import jax
import jax.numpy as jnp
from jax.experimental import pallas as pl
from jax.experimental.pallas import tpu as pltpu


# ----------------------------------- kernel -----------------------------------

def gru_encoder_kernel(gi0_ref,
                       whh0_hbm, w1_hbm, wout_hbm,
                       bhh0n_ref, b4_ref, bout_ref,
                       out_ref,
                       h0_ref, h1_ref,
                       whh0_v, w1_v, wout_v,
                       wsem,
                       *, seq_len, unroll):
    c = pl.program_id(0)
    TT = gi0_ref.shape[0]
    Bp, Hp = h0_ref.shape
    f32 = jnp.float32

    @pl.when(c == 0)
    def _init():
        h0_ref[...] = jnp.zeros_like(h0_ref)
        h1_ref[...] = jnp.zeros_like(h1_ref)
        # Constant weights: load ONCE into single-buffered VMEM scratch.
        cp_whh0 = pltpu.make_async_copy(whh0_hbm, whh0_v, wsem.at[0])
        cp_w1 = pltpu.make_async_copy(w1_hbm, w1_v, wsem.at[1])
        cp_wout = pltpu.make_async_copy(wout_hbm, wout_v, wsem.at[2])
        cp_whh0.start()
        cp_w1.start()
        cp_wout.start()                      # started now; waited only on the final grid step
        cp_whh0.wait()                       # recurrent weights are needed for chunk 0
        cp_w1.wait()

    # Loop-invariant bias broadcasts, hoisted out of the (unrolled) time loop.
    bhh0n = jnp.broadcast_to(bhh0n_ref[...], (Bp, Hp))
    b4 = jnp.broadcast_to(b4_ref[...], (Bp, 4 * Hp))

    # Valid timesteps in this chunk (only the last chunk can be partial).
    valid = jnp.minimum(TT, seq_len - c * TT)
    need_mask = (seq_len % TT) != 0          # static python bool

    def step(i, carry):
        h0, h1 = carry
        gi0_t = gi0_ref[i]                                           # (Bp, 3Hp), biases pre-folded

        # ---- layer 0: only the truly sequential h0 @ Whh0 remains in the loop ----
        gh0 = jnp.dot(h0, whh0_v[...], preferred_element_type=f32)
        r0 = jax.nn.sigmoid(gi0_t[:, 0 * Hp:1 * Hp] + gh0[:, 0 * Hp:1 * Hp])
        z0 = jax.nn.sigmoid(gi0_t[:, 1 * Hp:2 * Hp] + gh0[:, 1 * Hp:2 * Hp])
        n0 = jnp.tanh(gi0_t[:, 2 * Hp:3 * Hp] + r0 * (gh0[:, 2 * Hp:3 * Hp] + bhh0n))
        h0n = (1.0 - z0) * n0 + z0 * h0

        # ---- layer 1: single fused matmul [h0 | h1] @ W1f, gate cols [r|z|n_in|n_hid] ----
        h01 = jnp.concatenate([h0n, h1], axis=-1)                    # (Bp, 2Hp)
        g1 = jnp.dot(h01, w1_v[...], preferred_element_type=f32) + b4
        r1 = jax.nn.sigmoid(g1[:, 0 * Hp:1 * Hp])
        z1 = jax.nn.sigmoid(g1[:, 1 * Hp:2 * Hp])
        n1 = jnp.tanh(g1[:, 2 * Hp:3 * Hp] + r1 * g1[:, 3 * Hp:4 * Hp])
        h1n = (1.0 - z1) * n1 + z1 * h1

        if need_mask:
            keep = i < valid
            h0n = jnp.where(keep, h0n, h0)
            h1n = jnp.where(keep, h1n, h1)
        return h0n, h1n

    h0, h1 = jax.lax.fori_loop(0, TT, step, (h0_ref[...], h1_ref[...]),
                               unroll=unroll)
    h0_ref[...] = h0
    h1_ref[...] = h1

    @pl.when(c == pl.num_programs(0) - 1)
    def _final():
        # Deferred wait: wout bytes never sat on the chunk-0 startup bubble.
        pltpu.make_async_copy(wout_hbm, wout_v, wsem.at[2]).wait()
        out_ref[...] = (jnp.dot(h1, wout_v[...], preferred_element_type=f32)
                        + bout_ref[...]).astype(out_ref.dtype)


# ----------------------------- wrapper / layout prep -----------------------------

def _round_up(n, m):
    return ((n + m - 1) // m) * m


def _pad_gate_cols(w, Hp):
    """Gate-concatenated [r|z|n] (K, 3H) -> (K, 3Hp) with each gate block 128-lane aligned."""
    K, three_h = w.shape
    H = three_h // 3
    out = jnp.zeros((K, 3 * Hp), w.dtype)
    for g in range(3):
        out = out.at[:, g * Hp:g * Hp + H].set(w[:, g * H:(g + 1) * H])
    return out


def _pad_rows(w, rows):
    return jnp.zeros((rows, w.shape[1]), w.dtype).at[:w.shape[0]].set(w)


def _build_fused_layer1(wih1, whh1, bih1, bhh1, H, Hp):
    """Fused layer-1 weight (2Hp, 4Hp) and bias (1, 4Hp).

    Column blocks: [r_sum | z_sum | n_input | n_hidden].  The n gate is kept block-diagonal
    (input rows feed n_input, hidden rows feed n_hidden) so the PyTorch formula
    n = tanh(W_in x + b_in + r * (W_hn h + b_hn)) is preserved exactly.
    """
    w = jnp.zeros((2 * Hp, 4 * Hp), jnp.float32)
    # h0 (input-side) rows
    w = w.at[0:H, 0 * Hp:0 * Hp + H].set(wih1[:, 0 * H:1 * H])
    w = w.at[0:H, 1 * Hp:1 * Hp + H].set(wih1[:, 1 * H:2 * H])
    w = w.at[0:H, 2 * Hp:2 * Hp + H].set(wih1[:, 2 * H:3 * H])
    # h1 (hidden-side) rows
    w = w.at[Hp:Hp + H, 0 * Hp:0 * Hp + H].set(whh1[:, 0 * H:1 * H])
    w = w.at[Hp:Hp + H, 1 * Hp:1 * Hp + H].set(whh1[:, 1 * H:2 * H])
    w = w.at[Hp:Hp + H, 3 * Hp:3 * Hp + H].set(whh1[:, 2 * H:3 * H])

    b = jnp.zeros((1, 4 * Hp), jnp.float32)
    b = b.at[:, 0 * Hp:0 * Hp + H].set(bih1[:, 0 * H:1 * H] + bhh1[:, 0 * H:1 * H])
    b = b.at[:, 1 * Hp:1 * Hp + H].set(bih1[:, 1 * H:2 * H] + bhh1[:, 1 * H:2 * H])
    b = b.at[:, 2 * Hp:2 * Hp + H].set(bih1[:, 2 * H:3 * H])   # n-gate input bias
    b = b.at[:, 3 * Hp:3 * Hp + H].set(bhh1[:, 2 * H:3 * H])   # n-gate hidden bias (inside r*(.))
    return w, b


def gru_encoder_forward(x, params, *, max_tt=32):
    """x: (B, T, D) float32 (batch_first, like PyTorch). Returns (B, D) float32."""
    B, T, D = x.shape
    H = params["whh0"].shape[0]
    f32 = jnp.float32

    Hp = _round_up(H, 128)          # 128-lane-aligned gate blocks
    Bp = _round_up(max(B, 8), 8)    # sublane-aligned batch
    TT = min(T, max_tt)             # timesteps per grid step
    n_chunks = pl.cdiv(T, TT)
    Tpad = n_chunks * TT
    unroll = min(TT, 8)             # tunable; capped to bound live vreg ranges at large Hp

    # ---- layout prep: gate-aligned zero padding, bias folding (all f32) ----
    wih0 = _pad_gate_cols(params["wih0"], Hp)                        # (D, 3Hp)
    whh0 = _pad_rows(_pad_gate_cols(params["whh0"], Hp), Hp)         # (Hp, 3Hp)
    wout = _pad_rows(params["wout"], Hp)                             # (Hp, D)
    w1f, b4 = _build_fused_layer1(params["wih1"], params["whh1"],
                                  params["bih1"], params["bhh1"], H, Hp)

    bih0 = _pad_gate_cols(params["bih0"], Hp)                        # (1, 3Hp)
    bhh0 = _pad_gate_cols(params["bhh0"], Hp)
    bhh0_rz = bhh0.at[:, 2 * Hp:].set(0.0)      # hh-bias of r,z folded into gi0
    bhh0n = bhh0[:, 2 * Hp:]                    # (1, Hp)  n-gate hh-bias stays inside r*(.)

    # ---- hoisted, time-parallel layer-0 input projection ----
    # Transpose x to time-major FIRST (moves B*T*D elements, not T*Bp*3Hp).
    xt = jnp.swapaxes(x.astype(f32), 0, 1)                           # (T, B, D)
    xt = jnp.zeros((T, Bp, D), f32).at[:, :B, :].set(xt)
    gi0 = jnp.einsum("tbd,dg->tbg", xt, wih0, preferred_element_type=f32)
    gi0 = gi0 + (bih0 + bhh0_rz)[None]                               # (T, Bp, 3Hp)
    if Tpad != T:
        # Zero time padding is never *applied*: the kernel masks steps >= T - c*TT.
        gi0 = jnp.concatenate([gi0, jnp.zeros((Tpad - T, Bp, 3 * Hp), f32)], axis=0)

    # ---- VMEM budget derived from actual footprint (cap fits v7x's 64 MiB physical VMEM) ----
    bytes_weights = 4 * (Hp * 3 * Hp + 2 * Hp * 4 * Hp + Hp * D)
    bytes_stream = 2 * 4 * (TT * Bp * 3 * Hp)        # double-buffered gi0 chunk
    bytes_state = 4 * (2 * Bp * Hp + Bp * 4 * Hp + Bp * D)
    vmem_limit = int(min(max(int(1.5 * (bytes_weights + bytes_stream + bytes_state)) + (8 << 20),
                             32 << 20),
                         56 << 20))

    grid_spec = pltpu.PrefetchScalarGridSpec(
        num_scalar_prefetch=0,
        grid=(n_chunks,),
        in_specs=[
            pl.BlockSpec((TT, Bp, 3 * Hp), lambda c: (c, 0, 0)),  # gi0 chunk (pipelined)
            pl.BlockSpec(memory_space=pl.ANY),                    # whh0 (HBM, copied once)
            pl.BlockSpec(memory_space=pl.ANY),                    # fused [wih1;whh1]
            pl.BlockSpec(memory_space=pl.ANY),                    # wout
            pl.BlockSpec((1, Hp), lambda c: (0, 0)),              # bhh0n
            pl.BlockSpec((1, 4 * Hp), lambda c: (0, 0)),          # fused layer-1 bias
            pl.BlockSpec((1, D), lambda c: (0, 0)),               # bout
        ],
        out_specs=pl.BlockSpec((Bp, D), lambda c: (0, 0)),
        scratch_shapes=[
            pltpu.VMEM((Bp, Hp), f32),          # h0 carry
            pltpu.VMEM((Bp, Hp), f32),          # h1 carry
            pltpu.VMEM((Hp, 3 * Hp), f32),      # whh0 (single-buffered weights)
            pltpu.VMEM((2 * Hp, 4 * Hp), f32),  # fused layer-1 weight
            pltpu.VMEM((Hp, D), f32),           # wout
            pltpu.SemaphoreType.DMA((3,)),      # weight-load semaphores
        ],
    )

    kernel = functools.partial(gru_encoder_kernel, seq_len=T, unroll=unroll)

    out = pl.pallas_call(
        kernel,
        out_shape=jax.ShapeDtypeStruct((Bp, D), f32),
        grid_spec=grid_spec,
        compiler_params=pltpu.CompilerParams(
            dimension_semantics=("arbitrary",),      # hidden state carried across time chunks
            vmem_limit_bytes=vmem_limit,
        ),
    )(gi0, whh0, w1f, wout, bhh0n, b4, params["bout"])

    return out[:B]


# ----------------------------- params & reference -----------------------------

def init_params(key, dimension, hidden_units):
    """Deterministic parameter init mirroring nn.GRU(dim, H, 2) + nn.Linear(H, dim)."""
    D, H = dimension, hidden_units
    ks = jax.random.split(key, 10)
    s = 1.0 / jnp.sqrt(jnp.float32(H))          # PyTorch GRU default: U(-1/sqrt(H), 1/sqrt(H))
    u = lambda k, shape: jax.random.uniform(k, shape, jnp.float32, -s, s)
    xav = jnp.sqrt(6.0 / (H + D))               # xavier_uniform for linear_out.weight

    return {
        # stored pre-transposed: x @ W_ih^T -> (D, 3H), h @ W_hh^T -> (H, 3H); gates [r|z|n]
        "wih0": u(ks[0], (D, 3 * H)),
        "whh0": u(ks[1], (H, 3 * H)),
        "bih0": u(ks[2], (1, 3 * H)),
        "bhh0": u(ks[3], (1, 3 * H)),
        "wih1": u(ks[4], (H, 3 * H)),
        "whh1": u(ks[5], (H, 3 * H)),
        "bih1": u(ks[6], (1, 3 * H)),
        "bhh1": u(ks[7], (1, 3 * H)),
        "wout": jax.random.uniform(ks[8], (H, D), jnp.float32, -xav, xav),
        "bout": u(ks[9], (1, D)),
    }


def ref_forward(x, p):
    """Pure-JAX f32 reference of torch.nn.GRU math (gate order r,z,n) + Linear."""
    B, T, D = x.shape
    H = p["whh0"].shape[0]

    def cell(gi, h, whh, bhh):
        gh = jnp.dot(h, whh) + bhh
        r = jax.nn.sigmoid(gi[:, :H] + gh[:, :H])
        z = jax.nn.sigmoid(gi[:, H:2 * H] + gh[:, H:2 * H])
        n = jnp.tanh(gi[:, 2 * H:] + r * gh[:, 2 * H:])
        return (1.0 - z) * n + z * h

    h0 = jnp.zeros((B, H), jnp.float32)
    h1 = jnp.zeros((B, H), jnp.float32)
    for t in range(T):
        gi0 = jnp.dot(x[:, t], p["wih0"]) + p["bih0"]
        h0 = cell(gi0, h0, p["whh0"], p["bhh0"])
        gi1 = jnp.dot(h0, p["wih1"]) + p["bih1"]
        h1 = cell(gi1, h1, p["whh1"], p["bhh1"])
    return jnp.dot(h1, p["wout"]) + p["bout"]


if __name__ == "__main__":
    B, T, D, H = 2, 8, 4, 32
    key = jax.random.PRNGKey(0)
    k_x, k_p = jax.random.split(key)

    x = jax.random.normal(k_x, (B, T, D), jnp.float32)
    params = init_params(k_p, D, H)

    out = jax.jit(gru_encoder_forward)(x, params)
    out = jax.block_until_ready(out)

    ref = ref_forward(x, params)
    assert out.shape == (B, D)
    err = jnp.max(jnp.abs(out - ref))
    # Kernel and reference are both f32; residual differences come only from
    # accumulation/association order (fused layer-1 matmul, hoisted gi0).
    assert jnp.allclose(out, ref, atol=1e-3, rtol=1e-3), f"mismatch: max abs err = {err}"

    print("KERNEL_OK")
</pallas_src>

<mosaic_0001>
module attributes {stable_mosaic.version = 11 : i64} {
  func.func @gru_encoder_kernel(%arg0: i32, %arg1: memref<8x8x384xf32, #tpu.memory_space<vmem>>, %arg2: memref<128x384xf32, #tpu.memory_space<any>>, %arg3: memref<256x512xf32, #tpu.memory_space<any>>, %arg4: memref<128x4xf32, #tpu.memory_space<any>>, %arg5: memref<1x128xf32, #tpu.memory_space<vmem>>, %arg6: memref<1x512xf32, #tpu.memory_space<vmem>>, %arg7: memref<1x4xf32, #tpu.memory_space<vmem>>, %arg8: memref<8x4xf32, #tpu.memory_space<vmem>>, %arg9: memref<8x128xf32, #tpu.memory_space<vmem>>, %arg10: memref<8x128xf32, #tpu.memory_space<vmem>>, %arg11: memref<128x384xf32, #tpu.memory_space<vmem>>, %arg12: memref<256x512xf32, #tpu.memory_space<vmem>>, %arg13: memref<128x4xf32, #tpu.memory_space<vmem>>, %arg14: memref<3x!tpu.dma_semaphore, #tpu.memory_space<semaphore_mem>>) attributes {dimension_semantics = [#tpu.dimension_semantics<arbitrary>], iteration_bounds = array<i64: 1>, scalar_prefetch = 0 : i64, scratch_operands = 6 : i64, tpu.core_type = #tpu.core_type<tc>, window_params = [{transform_indices = @transform_0, window_bounds = array<i64: 8, 8, 384>}, {}, {}, {}, {pipeline_mode = #tpu.pipeline_mode<synchronous>, transform_indices = @transform_4, window_bounds = array<i64: 1, 128>}, {pipeline_mode = #tpu.pipeline_mode<synchronous>, transform_indices = @transform_5, window_bounds = array<i64: 1, 512>}, {pipeline_mode = #tpu.pipeline_mode<synchronous>, transform_indices = @transform_6, window_bounds = array<i64: 1, 4>}, {pipeline_mode = #tpu.pipeline_mode<synchronous>, transform_indices = @transform_7, window_bounds = array<i64: 8, 4>}]} {
    %c0_i32 = arith.constant 0 : i32
    %0 = arith.cmpi eq, %arg0, %c0_i32 : i32
    %1 = arith.extui %0 : i1 to i32
    %c0_i32_0 = arith.constant 0 : i32
    %2 = arith.cmpi ne, %1, %c0_i32_0 : i32
    scf.if %2 {
      %cst_126 = arith.constant 0.000000e+00 : f32
      %480 = vector.broadcast %cst_126 : f32 to vector<8x128xf32>
      %c0_127 = arith.constant 0 : index
      %c0_128 = arith.constant 0 : index
      %481 = vector.load %arg9[%c0_127, %c0_128] : memref<8x128xf32, #tpu.memory_space<vmem>>, vector<8x128xf32>
      tpu.vector_store %arg9[%c0_127, %c0_128], %480 {strides = array<i32>} : memref<8x128xf32, #tpu.memory_space<vmem>>, vector<8x128xf32>,
      %cst_129 = arith.constant 0.000000e+00 : f32
      %482 = vector.broadcast %cst_129 : f32 to vector<8x128xf32>
      %c0_130 = arith.constant 0 : index
      %c0_131 = arith.constant 0 : index
      %483 = vector.load %arg10[%c0_130, %c0_131] : memref<8x128xf32, #tpu.memory_space<vmem>>, vector<8x128xf32>
      tpu.vector_store %arg10[%c0_130, %c0_131], %482 {strides = array<i32>} : memref<8x128xf32, #tpu.memory_space<vmem>>, vector<8x128xf32>,
      %c0_i32_132 = arith.constant 0 : i32
      %484 = tpu.memref_slice %arg14[%c0_i32_132] : memref<3x!tpu.dma_semaphore, #tpu.memory_space<semaphore_mem>> -> memref<1x!tpu.dma_semaphore, #tpu.memory_space<semaphore_mem>>
      %485 = tpu.memref_squeeze %484 : memref<1x!tpu.dma_semaphore, #tpu.memory_space<semaphore_mem>> -> memref<!tpu.dma_semaphore, #tpu.memory_space<semaphore_mem>>
      tpu.enqueue_dma source(%arg2 : memref<128x384xf32, #tpu.memory_space<any>>) target(%arg11 : memref<128x384xf32, #tpu.memory_space<vmem>>) target_semaphore(%485 : memref<!tpu.dma_semaphore, #tpu.memory_space<semaphore_mem>>)
      %c1_i32_133 = arith.constant 1 : i32
      %486 = tpu.memref_slice %arg14[%c1_i32_133] : memref<3x!tpu.dma_semaphore, #tpu.memory_space<semaphore_mem>> -> memref<1x!tpu.dma_semaphore, #tpu.memory_space<semaphore_mem>>
      %487 = tpu.memref_squeeze %486 : memref<1x!tpu.dma_semaphore, #tpu.memory_space<semaphore_mem>> -> memref<!tpu.dma_semaphore, #tpu.memory_space<semaphore_mem>>
      tpu.enqueue_dma source(%arg3 : memref<256x512xf32, #tpu.memory_space<any>>) target(%arg12 : memref<256x512xf32, #tpu.memory_space<vmem>>) target_semaphore(%487 : memref<!tpu.dma_semaphore, #tpu.memory_space<semaphore_mem>>)
      %c2_i32_134 = arith.constant 2 : i32
      %488 = tpu.memref_slice %arg14[%c2_i32_134] : memref<3x!tpu.dma_semaphore, #tpu.memory_space<semaphore_mem>> -> memref<1x!tpu.dma_semaphore, #tpu.memory_space<semaphore_mem>>
      %489 = tpu.memref_squeeze %488 : memref<1x!tpu.dma_semaphore, #tpu.memory_space<semaphore_mem>> -> memref<!tpu.dma_semaphore, #tpu.memory_space<semaphore_mem>>
      tpu.enqueue_dma source(%arg4 : memref<128x4xf32, #tpu.memory_space<any>>) target(%arg13 : memref<128x4xf32, #tpu.memory_space<vmem>>) target_semaphore(%489 : memref<!tpu.dma_semaphore, #tpu.memory_space<semaphore_mem>>)
      %c0_i32_135 = arith.constant 0 : i32
      %490 = tpu.memref_slice %arg14[%c0_i32_135] : memref<3x!tpu.dma_semaphore, #tpu.memory_space<semaphore_mem>> -> memref<1x!tpu.dma_semaphore, #tpu.memory_space<semaphore_mem>>
      %491 = tpu.memref_squeeze %490 : memref<1x!tpu.dma_semaphore, #tpu.memory_space<semaphore_mem>> -> memref<!tpu.dma_semaphore, #tpu.memory_space<semaphore_mem>>
      tpu.wait_dma2 semaphore(%491 : memref<!tpu.dma_semaphore, #tpu.memory_space<semaphore_mem>>) src(%arg2 : memref<128x384xf32, #tpu.memory_space<any>>) dst(%arg11 : memref<128x384xf32, #tpu.memory_space<vmem>>)
      %c1_i32_136 = arith.constant 1 : i32
      %492 = tpu.memref_slice %arg14[%c1_i32_136] : memref<3x!tpu.dma_semaphore, #tpu.memory_space<semaphore_mem>> -> memref<1x!tpu.dma_semaphore, #tpu.memory_space<semaphore_mem>>
      %493 = tpu.memref_squeeze %492 : memref<1x!tpu.dma_semaphore, #tpu.memory_space<semaphore_mem>> -> memref<!tpu.dma_semaphore, #tpu.memory_space<semaphore_mem>>
      tpu.wait_dma2 semaphore(%493 : memref<!tpu.dma_semaphore, #tpu.memory_space<semaphore_mem>>) src(%arg3 : memref<256x512xf32, #tpu.memory_space<any>>) dst(%arg12 : memref<256x512xf32, #tpu.memory_space<vmem>>)
    } else {
    }
    %c0 = arith.constant 0 : index
    %c0_1 = arith.constant 0 : index
    %3 = vector.load %arg5[%c0, %c0_1] : memref<1x128xf32, #tpu.memory_space<vmem>>, vector<1x128xf32>
    %4 = vector.shape_cast %3 : vector<1x128xf32> to vector<1x128xf32>
    %5 = vector.broadcast %4 : vector<1x128xf32> to vector<8x128xf32>
    %c0_2 = arith.constant 0 : index
    %c0_3 = arith.constant 0 : index
    %6 = vector.load %arg6[%c0_2, %c0_3] : memref<1x512xf32, #tpu.memory_space<vmem>>, vector<1x512xf32>
    %7 = vector.shape_cast %6 : vector<1x512xf32> to vector<1x512xf32>
    %8 = vector.broadcast %7 : vector<1x512xf32> to vector<8x512xf32>
    %c0_4 = arith.constant 0 : index
    %c0_5 = arith.constant 0 : index
    %9 = vector.load %arg9[%c0_4, %c0_5] : memref<8x128xf32, #tpu.memory_space<vmem>>, vector<8x128xf32>
    %c0_6 = arith.constant 0 : index
    %c0_7 = arith.constant 0 : index
    %10 = vector.load %arg10[%c0_6, %c0_7] : memref<8x128xf32, #tpu.memory_space<vmem>>, vector<8x128xf32>
    %c0_i32_8 = arith.constant 0 : i32
    %11 = arith.index_cast %c0_i32_8 : i32 to index
    %c0_9 = arith.constant 0 : index
    %c0_10 = arith.constant 0 : index
    %12 = vector.load %arg1[%11, %c0_9, %c0_10] : memref<8x8x384xf32, #tpu.memory_space<vmem>>, vector<1x8x384xf32>
    %13 = vector.shape_cast %12 : vector<1x8x384xf32> to vector<8x384xf32>
    %c0_11 = arith.constant 0 : index
    %c0_12 = arith.constant 0 : index
    %14 = vector.load %arg11[%c0_11, %c0_12] : memref<128x384xf32, #tpu.memory_space<vmem>>, vector<128x384xf32>
    %cst = arith.constant dense<0.000000e+00> : vector<8x384xf32>
    %15 = tpu.matmul %9, %14, %cst {dimension_numbers = #tpu.dot_dimension_numbers<[1], [0], [0], [1], [0, 0, 1, 1], [], []>} : vector<8x128xf32>, vector<128x384xf32>, vector<8x384xf32> -> vector<8x384xf32>
    %16 = vector.extract_strided_slice %13 {offsets = [0, 0], sizes = [8, 128], strides = [1, 1]} : vector<8x384xf32> to vector<8x128xf32>
    %17 = vector.extract_strided_slice %15 {offsets = [0, 0], sizes = [8, 128], strides = [1, 1]} : vector<8x384xf32> to vector<8x128xf32>
    %18 = arith.addf %16, %17 : vector<8x128xf32>
    %19 = arith.negf %18 : vector<8x128xf32>
    %20 = math.exp %19 : vector<8x128xf32>
    %cst_13 = arith.constant 1.000000e+00 : f32
    %21 = vector.broadcast %cst_13 : f32 to vector<8x128xf32>
    %22 = arith.addf %21, %20 : vector<8x128xf32>
    %23 = arith.divf %21, %22 : vector<8x128xf32>
    %24 = vector.extract_strided_slice %13 {offsets = [0, 128], sizes = [8, 128], strides = [1, 1]} : vector<8x384xf32> to vector<8x128xf32>
    %25 = vector.extract_strided_slice %15 {offsets = [0, 128], sizes = [8, 128], strides = [1, 1]} : vector<8x384xf32> to vector<8x128xf32>
    %26 = arith.addf %24, %25 : vector<8x128xf32>
    %27 = arith.negf %26 : vector<8x128xf32>
    %28 = math.exp %27 : vector<8x128xf32>
    %cst_14 = arith.constant 1.000000e+00 : f32
    %29 = vector.broadcast %cst_14 : f32 to vector<8x128xf32>
    %30 = arith.addf %29, %28 : vector<8x128xf32>
    %31 = arith.divf %29, %30 : vector<8x128xf32>
    %32 = vector.extract_strided_slice %13 {offsets = [0, 256], sizes = [8, 128], strides = [1, 1]} : vector<8x384xf32> to vector<8x128xf32>
    %33 = vector.extract_strided_slice %15 {offsets = [0, 256], sizes = [8, 128], strides = [1, 1]} : vector<8x384xf32> to vector<8x128xf32>
    %34 = arith.addf %33, %5 : vector<8x128xf32>
    %35 = arith.mulf %23, %34 : vector<8x128xf32>
    %36 = arith.addf %32, %35 : vector<8x128xf32>
    %37 = math.tanh %36 : vector<8x128xf32>
    %cst_15 = arith.constant 1.000000e+00 : f32
    %38 = vector.broadcast %cst_15 : f32 to vector<8x128xf32>
    %39 = arith.subf %38, %31 : vector<8x128xf32>
    %40 = arith.mulf %39, %37 : vector<8x128xf32>
    %41 = arith.mulf %31, %9 : vector<8x128xf32>
    %42 = arith.addf %40, %41 : vector<8x128xf32>
    %43 = tpu.concatenate %42, %10 in 1 : vector<8x128xf32>, vector<8x128xf32> -> vector<8x256xf32>
    %c0_16 = arith.constant 0 : index
    %c0_17 = arith.constant 0 : index
    %44 = vector.load %arg12[%c0_16, %c0_17] : memref<256x512xf32, #tpu.memory_space<vmem>>, vector<256x512xf32>
    %cst_18 = arith.constant dense<0.000000e+00> : vector<8x512xf32>
    %45 = tpu.matmul %43, %44, %cst_18 {dimension_numbers = #tpu.dot_dimension_numbers<[1], [0], [0], [1], [0, 0, 1, 1], [], []>} : vector<8x256xf32>, vector<256x512xf32>, vector<8x512xf32> -> vector<8x512xf32>
    %46 = arith.addf %45, %8 : vector<8x512xf32>
    %47 = vector.extract_strided_slice %46 {offsets = [0, 0], sizes = [8, 128], strides = [1, 1]} : vector<8x512xf32> to vector<8x128xf32>
    %48 = arith.negf %47 : vector<8x128xf32>
    %49 = math.exp %48 : vector<8x128xf32>
    %cst_19 = arith.constant 1.000000e+00 : f32
    %50 = vector.broadcast %cst_19 : f32 to vector<8x128xf32>
    %51 = arith.addf %50, %49 : vector<8x128xf32>
    %52 = arith.divf %50, %51 : vector<8x128xf32>
    %53 = vector.extract_strided_slice %46 {offsets = [0, 128], sizes = [8, 128], strides = [1, 1]} : vector<8x512xf32> to vector<8x128xf32>
    %54 = arith.negf %53 : vector<8x128xf32>
    %55 = math.exp %54 : vector<8x128xf32>
    %cst_20 = arith.constant 1.000000e+00 : f32
    %56 = vector.broadcast %cst_20 : f32 to vector<8x128xf32>
    %57 = arith.addf %56, %55 : vector<8x128xf32>
    %58 = arith.divf %56, %57 : vector<8x128xf32>
    %59 = vector.extract_strided_slice %46 {offsets = [0, 256], sizes = [8, 128], strides = [1, 1]} : vector<8x512xf32> to vector<8x128xf32>
    %60 = vector.extract_strided_slice %46 {offsets = [0, 384], sizes = [8, 128], strides = [1, 1]} : vector<8x512xf32> to vector<8x128xf32>
    %61 = arith.mulf %52, %60 : vector<8x128xf32>
    %62 = arith.addf %59, %61 : vector<8x128xf32>
    %63 = math.tanh %62 : vector<8x128xf32>
    %cst_21 = arith.constant 1.000000e+00 : f32
    %64 = vector.broadcast %cst_21 : f32 to vector<8x128xf32>
    %65 = arith.subf %64, %58 : vector<8x128xf32>
    %66 = arith.mulf %65, %63 : vector<8x128xf32>
    %67 = arith.mulf %58, %10 : vector<8x128xf32>
    %68 = arith.addf %66, %67 : vector<8x128xf32>
    %c1_i32 = arith.constant 1 : i32
    %69 = arith.index_cast %c1_i32 : i32 to index
    %c0_22 = arith.constant 0 : index
    %c0_23 = arith.constant 0 : index
    %70 = vector.load %arg1[%69, %c0_22, %c0_23] : memref<8x8x384xf32, #tpu.memory_space<vmem>>, vector<1x8x384xf32>
    %71 = vector.shape_cast %70 : vector<1x8x384xf32> to vector<8x384xf32>
    %c0_24 = arith.constant 0 : index
    %c0_25 = arith.constant 0 : index
    %72 = vector.load %arg11[%c0_24, %c0_25] : memref<128x384xf32, #tpu.memory_space<vmem>>, vector<128x384xf32>
    %cst_26 = arith.constant dense<0.000000e+00> : vector<8x384xf32>
    %73 = tpu.matmul %42, %72, %cst_26 {dimension_numbers = #tpu.dot_dimension_numbers<[1], [0], [0], [1], [0, 0, 1, 1], [], []>} : vector<8x128xf32>, vector<128x384xf32>, vector<8x384xf32> -> vector<8x384xf32>
    %74 = vector.extract_strided_slice %71 {offsets = [0, 0], sizes = [8, 128], strides = [1, 1]} : vector<8x384xf32> to vector<8x128xf32>
    %75 = vector.extract_strided_slice %73 {offsets = [0, 0], sizes = [8, 128], strides = [1, 1]} : vector<8x384xf32> to vector<8x128xf32>
    %76 = arith.addf %74, %75 : vector<8x128xf32>
    %77 = arith.negf %76 : vector<8x128xf32>
    %78 = math.exp %77 : vector<8x128xf32>
    %cst_27 = arith.constant 1.000000e+00 : f32
    %79 = vector.broadcast %cst_27 : f32 to vector<8x128xf32>
    %80 = arith.addf %79, %78 : vector<8x128xf32>
    %81 = arith.divf %79, %80 : vector<8x128xf32>
    %82 = vector.extract_strided_slice %71 {offsets = [0, 128], sizes = [8, 128], strides = [1, 1]} : vector<8x384xf32> to vector<8x128xf32>
    %83 = vector.extract_strided_slice %73 {offsets = [0, 128], sizes = [8, 128], strides = [1, 1]} : vector<8x384xf32> to vector<8x128xf32>
    %84 = arith.addf %82, %83 : vector<8x128xf32>
    %85 = arith.negf %84 : vector<8x128xf32>
    %86 = math.exp %85 : vector<8x128xf32>
    %cst_28 = arith.constant 1.000000e+00 : f32
    %87 = vector.broadcast %cst_28 : f32 to vector<8x128xf32>
    %88 = arith.addf %87, %86 : vector<8x128xf32>
    %89 = arith.divf %87, %88 : vector<8x128xf32>
    %90 = vector.extract_strided_slice %71 {offsets = [0, 256], sizes = [8, 128], strides = [1, 1]} : vector<8x384xf32> to vector<8x128xf32>
    %91 = vector.extract_strided_slice %73 {offsets = [0, 256], sizes = [8, 128], strides = [1, 1]} : vector<8x384xf32> to vector<8x128xf32>
    %92 = arith.addf %91, %5 : vector<8x128xf32>
    %93 = arith.mulf %81, %92 : vector<8x128xf32>
    %94 = arith.addf %90, %93 : vector<8x128xf32>
    %95 = math.tanh %94 : vector<8x128xf32>
    %cst_29 = arith.constant 1.000000e+00 : f32
    %96 = vector.broadcast %cst_29 : f32 to vector<8x128xf32>
    %97 = arith.subf %96, %89 : vector<8x128xf32>
    %98 = arith.mulf %97, %95 : vector<8x128xf32>
    %99 = arith.mulf %89, %42 : vector<8x128xf32>
    %100 = arith.addf %98, %99 : vector<8x128xf32>
    %101 = tpu.concatenate %100, %68 in 1 : vector<8x128xf32>, vector<8x128xf32> -> vector<8x256xf32>
    %c0_30 = arith.constant 0 : index
    %c0_31 = arith.constant 0 : index
    %102 = vector.load %arg12[%c0_30, %c0_31] : memref<256x512xf32, #tpu.memory_space<vmem>>, vector<256x512xf32>
    %cst_32 = arith.constant dense<0.000000e+00> : vector<8x512xf32>
    %103 = tpu.matmul %101, %102, %cst_32 {dimension_numbers = #tpu.dot_dimension_numbers<[1], [0], [0], [1], [0, 0, 1, 1], [], []>} : vector<8x256xf32>, vector<256x512xf32>, vector<8x512xf32> -> vector<8x512xf32>
    %104 = arith.addf %103, %8 : vector<8x512xf32>
    %105 = vector.extract_strided_slice %104 {offsets = [0, 0], sizes = [8, 128], strides = [1, 1]} : vector<8x512xf32> to vector<8x128xf32>
    %106 = arith.negf %105 : vector<8x128xf32>
    %107 = math.exp %106 : vector<8x128xf32>
    %cst_33 = arith.constant 1.000000e+00 : f32
    %108 = vector.broadcast %cst_33 : f32 to vector<8x128xf32>
    %109 = arith.addf %108, %107 : vector<8x128xf32>
    %110 = arith.divf %108, %109 : vector<8x128xf32>
    %111 = vector.extract_strided_slice %104 {offsets = [0, 128], sizes = [8, 128], strides = [1, 1]} : vector<8x512xf32> to vector<8x128xf32>
    %112 = arith.negf %111 : vector<8x128xf32>
    %113 = math.exp %112 : vector<8x128xf32>
    %cst_34 = arith.constant 1.000000e+00 : f32
    %114 = vector.broadcast %cst_34 : f32 to vector<8x128xf32>
    %115 = arith.addf %114, %113 : vector<8x128xf32>
    %116 = arith.divf %114, %115 : vector<8x128xf32>
    %117 = vector.extract_strided_slice %104 {offsets = [0, 256], sizes = [8, 128], strides = [1, 1]} : vector<8x512xf32> to vector<8x128xf32>
    %118 = vector.extract_strided_slice %104 {offsets = [0, 384], sizes = [8, 128], strides = [1, 1]} : vector<8x512xf32> to vector<8x128xf32>
    %119 = arith.mulf %110, %118 : vector<8x128xf32>
    %120 = arith.addf %117, %119 : vector<8x128xf32>
    %121 = math.tanh %120 : vector<8x128xf32>
    %cst_35 = arith.constant 1.000000e+00 : f32
    %122 = vector.broadcast %cst_35 : f32 to vector<8x128xf32>
    %123 = arith.subf %122, %116 : vector<8x128xf32>
    %124 = arith.mulf %123, %121 : vector<8x128xf32>
    %125 = arith.mulf %116, %68 : vector<8x128xf32>
    %126 = arith.addf %124, %125 : vector<8x128xf32>
    %c2_i32 = arith.constant 2 : i32
    %127 = arith.index_cast %c2_i32 : i32 to index
    %c0_36 = arith.constant 0 : index
    %c0_37 = arith.constant 0 : index
    %128 = vector.load %arg1[%127, %c0_36, %c0_37] : memref<8x8x384xf32, #tpu.memory_space<vmem>>, vector<1x8x384xf32>
    %129 = vector.shape_cast %128 : vector<1x8x384xf32> to vector<8x384xf32>
    %c0_38 = arith.constant 0 : index
    %c0_39 = arith.constant 0 : index
    %130 = vector.load %arg11[%c0_38, %c0_39] : memref<128x384xf32, #tpu.memory_space<vmem>>, vector<128x384xf32>
    %cst_40 = arith.constant dense<0.000000e+00> : vector<8x384xf32>
    %131 = tpu.matmul %100, %130, %cst_40 {dimension_numbers = #tpu.dot_dimension_numbers<[1], [0], [0], [1], [0, 0, 1, 1], [], []>} : vector<8x128xf32>, vector<128x384xf32>, vector<8x384xf32> -> vector<8x384xf32>
    %132 = vector.extract_strided_slice %129 {offsets = [0, 0], sizes = [8, 128], strides = [1, 1]} : vector<8x384xf32> to vector<8x128xf32>
    %133 = vector.extract_strided_slice %131 {offsets = [0, 0], sizes = [8, 128], strides = [1, 1]} : vector<8x384xf32> to vector<8x128xf32>
    %134 = arith.addf %132, %133 : vector<8x128xf32>
    %135 = arith.negf %134 : vector<8x128xf32>
    %136 = math.exp %135 : vector<8x128xf32>
    %cst_41 = arith.constant 1.000000e+00 : f32
    %137 = vector.broadcast %cst_41 : f32 to vector<8x128xf32>
    %138 = arith.addf %137, %136 : vector<8x128xf32>
    %139 = arith.divf %137, %138 : vector<8x128xf32>
    %140 = vector.extract_strided_slice %129 {offsets = [0, 128], sizes = [8, 128], strides = [1, 1]} : vector<8x384xf32> to vector<8x128xf32>
    %141 = vector.extract_strided_slice %131 {offsets = [0, 128], sizes = [8, 128], strides = [1, 1]} : vector<8x384xf32> to vector<8x128xf32>
    %142 = arith.addf %140, %141 : vector<8x128xf32>
    %143 = arith.negf %142 : vector<8x128xf32>
    %144 = math.exp %143 : vector<8x128xf32>
    %cst_42 = arith.constant 1.000000e+00 : f32
    %145 = vector.broadcast %cst_42 : f32 to vector<8x128xf32>
    %146 = arith.addf %145, %144 : vector<8x128xf32>
    %147 = arith.divf %145, %146 : vector<8x128xf32>
    %148 = vector.extract_strided_slice %129 {offsets = [0, 256], sizes = [8, 128], strides = [1, 1]} : vector<8x384xf32> to vector<8x128xf32>
    %149 = vector.extract_strided_slice %131 {offsets = [0, 256], sizes = [8, 128], strides = [1, 1]} : vector<8x384xf32> to vector<8x128xf32>
    %150 = arith.addf %149, %5 : vector<8x128xf32>
    %151 = arith.mulf %139, %150 : vector<8x128xf32>
    %152 = arith.addf %148, %151 : vector<8x128xf32>
    %153 = math.tanh %152 : vector<8x128xf32>
    %cst_43 = arith.constant 1.000000e+00 : f32
    %154 = vector.broadcast %cst_43 : f32 to vector<8x128xf32>
    %155 = arith.subf %154, %147 : vector<8x128xf32>
    %156 = arith.mulf %155, %153 : vector<8x128xf32>
    %157 = arith.mulf %147, %100 : vector<8x128xf32>
    %158 = arith.addf %156, %157 : vector<8x128xf32>
    %159 = tpu.concatenate %158, %126 in 1 : vector<8x128xf32>, vector<8x128xf32> -> vector<8x256xf32>
    %c0_44 = arith.constant 0 : index
    %c0_45 = arith.constant 0 : index
    %160 = vector.load %arg12[%c0_44, %c0_45] : memref<256x512xf32, #tpu.memory_space<vmem>>, vector<256x512xf32>
    %cst_46 = arith.constant dense<0.000000e+00> : vector<8x512xf32>
    %161 = tpu.matmul %159, %160, %cst_46 {dimension_numbers = #tpu.dot_dimension_numbers<[1], [0], [0], [1], [0, 0, 1, 1], [], []>} : vector<8x256xf32>, vector<256x512xf32>, vector<8x512xf32> -> vector<8x512xf32>
    %162 = arith.addf %161, %8 : vector<8x512xf32>
    %163 = vector.extract_strided_slice %162 {offsets = [0, 0], sizes = [8, 128], strides = [1, 1]} : vector<8x512xf32> to vector<8x128xf32>
    %164 = arith.negf %163 : vector<8x128xf32>
    %165 = math.exp %164 : vector<8x128xf32>
    %cst_47 = arith.constant 1.000000e+00 : f32
    %166 = vector.broadcast %cst_47 : f32 to vector<8x128xf32>
    %167 = arith.addf %166, %165 : vector<8x128xf32>
    %168 = arith.divf %166, %167 : vector<8x128xf32>
    %169 = vector.extract_strided_slice %162 {offsets = [0, 128], sizes = [8, 128], strides = [1, 1]} : vector<8x512xf32> to vector<8x128xf32>
    %170 = arith.negf %169 : vector<8x128xf32>
    %171 = math.exp %170 : vector<8x128xf32>
    %cst_48 = arith.constant 1.000000e+00 : f32
    %172 = vector.broadcast %cst_48 : f32 to vector<8x128xf32>
    %173 = arith.addf %172, %171 : vector<8x128xf32>
    %174 = arith.divf %172, %173 : vector<8x128xf32>
    %175 = vector.extract_strided_slice %162 {offsets = [0, 256], sizes = [8, 128], strides = [1, 1]} : vector<8x512xf32> to vector<8x128xf32>
    %176 = vector.extract_strided_slice %162 {offsets = [0, 384], sizes = [8, 128], strides = [1, 1]} : vector<8x512xf32> to vector<8x128xf32>
    %177 = arith.mulf %168, %176 : vector<8x128xf32>
    %178 = arith.addf %175, %177 : vector<8x128xf32>
    %179 = math.tanh %178 : vector<8x128xf32>
    %cst_49 = arith.constant 1.000000e+00 : f32
    %180 = vector.broadcast %cst_49 : f32 to vector<8x128xf32>
    %181 = arith.subf %180, %174 : vector<8x128xf32>
    %182 = arith.mulf %181, %179 : vector<8x128xf32>
    %183 = arith.mulf %174, %126 : vector<8x128xf32>
    %184 = arith.addf %182, %183 : vector<8x128xf32>
    %c3_i32 = arith.constant 3 : i32
    %185 = arith.index_cast %c3_i32 : i32 to index
    %c0_50 = arith.constant 0 : index
    %c0_51 = arith.constant 0 : index
    %186 = vector.load %arg1[%185, %c0_50, %c0_51] : memref<8x8x384xf32, #tpu.memory_space<vmem>>, vector<1x8x384xf32>
    %187 = vector.shape_cast %186 : vector<1x8x384xf32> to vector<8x384xf32>
    %c0_52 = arith.constant 0 : index
    %c0_53 = arith.constant 0 : index
    %188 = vector.load %arg11[%c0_52, %c0_53] : memref<128x384xf32, #tpu.memory_space<vmem>>, vector<128x384xf32>
    %cst_54 = arith.constant dense<0.000000e+00> : vector<8x384xf32>
    %189 = tpu.matmul %158, %188, %cst_54 {dimension_numbers = #tpu.dot_dimension_numbers<[1], [0], [0], [1], [0, 0, 1, 1], [], []>} : vector<8x128xf32>, vector<128x384xf32>, vector<8x384xf32> -> vector<8x384xf32>
    %190 = vector.extract_strided_slice %187 {offsets = [0, 0], sizes = [8, 128], strides = [1, 1]} : vector<8x384xf32> to vector<8x128xf32>
    %191 = vector.extract_strided_slice %189 {offsets = [0, 0], sizes = [8, 128], strides = [1, 1]} : vector<8x384xf32> to vector<8x128xf32>
    %192 = arith.addf %190, %191 : vector<8x128xf32>
    %193 = arith.negf %192 : vector<8x128xf32>
    %194 = math.exp %193 : vector<8x128xf32>
    %cst_55 = arith.constant 1.000000e+00 : f32
    %195 = vector.broadcast %cst_55 : f32 to vector<8x128xf32>
    %196 = arith.addf %195, %194 : vector<8x128xf32>
    %197 = arith.divf %195, %196 : vector<8x128xf32>
    %198 = vector.extract_strided_slice %187 {offsets = [0, 128], sizes = [8, 128], strides = [1, 1]} : vector<8x384xf32> to vector<8x128xf32>
    %199 = vector.extract_strided_slice %189 {offsets = [0, 128], sizes = [8, 128], strides = [1, 1]} : vector<8x384xf32> to vector<8x128xf32>
    %200 = arith.addf %198, %199 : vector<8x128xf32>
    %201 = arith.negf %200 : vector<8x128xf32>
    %202 = math.exp %201 : vector<8x128xf32>
    %cst_56 = arith.constant 1.000000e+00 : f32
    %203 = vector.broadcast %cst_56 : f32 to vector<8x128xf32>
    %204 = arith.addf %203, %202 : vector<8x128xf32>
    %205 = arith.divf %203, %204 : vector<8x128xf32>
    %206 = vector.extract_strided_slice %187 {offsets = [0, 256], sizes = [8, 128], strides = [1, 1]} : vector<8x384xf32> to vector<8x128xf32>
    %207 = vector.extract_strided_slice %189 {offsets = [0, 256], sizes = [8, 128], strides = [1, 1]} : vector<8x384xf32> to vector<8x128xf32>
    %208 = arith.addf %207, %5 : vector<8x128xf32>
    %209 = arith.mulf %197, %208 : vector<8x128xf32>
    %210 = arith.addf %206, %209 : vector<8x128xf32>
    %211 = math.tanh %210 : vector<8x128xf32>
    %cst_57 = arith.constant 1.000000e+00 : f32
    %212 = vector.broadcast %cst_57 : f32 to vector<8x128xf32>
    %213 = arith.subf %212, %205 : vector<8x128xf32>
    %214 = arith.mulf %213, %211 : vector<8x128xf32>
    %215 = arith.mulf %205, %158 : vector<8x128xf32>
    %216 = arith.addf %214, %215 : vector<8x128xf32>
    %217 = tpu.concatenate %216, %184 in 1 : vector<8x128xf32>, vector<8x128xf32> -> vector<8x256xf32>
    %c0_58 = arith.constant 0 : index
    %c0_59 = arith.constant 0 : index
    %218 = vector.load %arg12[%c0_58, %c0_59] : memref<256x512xf32, #tpu.memory_space<vmem>>, vector<256x512xf32>
    %cst_60 = arith.constant dense<0.000000e+00> : vector<8x512xf32>
    %219 = tpu.matmul %217, %218, %cst_60 {dimension_numbers = #tpu.dot_dimension_numbers<[1], [0], [0], [1], [0, 0, 1, 1], [], []>} : vector<8x256xf32>, vector<256x512xf32>, vector<8x512xf32> -> vector<8x512xf32>
    %220 = arith.addf %219, %8 : vector<8x512xf32>
    %221 = vector.extract_strided_slice %220 {offsets = [0, 0], sizes = [8, 128], strides = [1, 1]} : vector<8x512xf32> to vector<8x128xf32>
    %222 = arith.negf %221 : vector<8x128xf32>
    %223 = math.exp %222 : vector<8x128xf32>
    %cst_61 = arith.constant 1.000000e+00 : f32
    %224 = vector.broadcast %cst_61 : f32 to vector<8x128xf32>
    %225 = arith.addf %224, %223 : vector<8x128xf32>
    %226 = arith.divf %224, %225 : vector<8x128xf32>
    %227 = vector.extract_strided_slice %220 {offsets = [0, 128], sizes = [8, 128], strides = [1, 1]} : vector<8x512xf32> to vector<8x128xf32>
    %228 = arith.negf %227 : vector<8x128xf32>
    %229 = math.exp %228 : vector<8x128xf32>
    %cst_62 = arith.constant 1.000000e+00 : f32
    %230 = vector.broadcast %cst_62 : f32 to vector<8x128xf32>
    %231 = arith.addf %230, %229 : vector<8x128xf32>
    %232 = arith.divf %230, %231 : vector<8x128xf32>
    %233 = vector.extract_strided_slice %220 {offsets = [0, 256], sizes = [8, 128], strides = [1, 1]} : vector<8x512xf32> to vector<8x128xf32>
    %234 = vector.extract_strided_slice %220 {offsets = [0, 384], sizes = [8, 128], strides = [1, 1]} : vector<8x512xf32> to vector<8x128xf32>
    %235 = arith.mulf %226, %234 : vector<8x128xf32>
    %236 = arith.addf %233, %235 : vector<8x128xf32>
    %237 = math.tanh %236 : vector<8x128xf32>
    %cst_63 = arith.constant 1.000000e+00 : f32
    %238 = vector.broadcast %cst_63 : f32 to vector<8x128xf32>
    %239 = arith.subf %238, %232 : vector<8x128xf32>
    %240 = arith.mulf %239, %237 : vector<8x128xf32>
    %241 = arith.mulf %232, %184 : vector<8x128xf32>
    %242 = arith.addf %240, %241 : vector<8x128xf32>
    %c4_i32 = arith.constant 4 : i32
    %243 = arith.index_cast %c4_i32 : i32 to index
    %c0_64 = arith.constant 0 : index
    %c0_65 = arith.constant 0 : index
    %244 = vector.load %arg1[%243, %c0_64, %c0_65] : memref<8x8x384xf32, #tpu.memory_space<vmem>>, vector<1x8x384xf32>
    %245 = vector.shape_cast %244 : vector<1x8x384xf32> to vector<8x384xf32>
    %c0_66 = arith.constant 0 : index
    %c0_67 = arith.constant 0 : index
    %246 = vector.load %arg11[%c0_66, %c0_67] : memref<128x384xf32, #tpu.memory_space<vmem>>, vector<128x384xf32>
    %cst_68 = arith.constant dense<0.000000e+00> : vector<8x384xf32>
    %247 = tpu.matmul %216, %246, %cst_68 {dimension_numbers = #tpu.dot_dimension_numbers<[1], [0], [0], [1], [0, 0, 1, 1], [], []>} : vector<8x128xf32>, vector<128x384xf32>, vector<8x384xf32> -> vector<8x384xf32>
    %248 = vector.extract_strided_slice %245 {offsets = [0, 0], sizes = [8, 128], strides = [1, 1]} : vector<8x384xf32> to vector<8x128xf32>
    %249 = vector.extract_strided_slice %247 {offsets = [0, 0], sizes = [8, 128], strides = [1, 1]} : vector<8x384xf32> to vector<8x128xf32>
    %250 = arith.addf %248, %249 : vector<8x128xf32>
    %251 = arith.negf %250 : vector<8x128xf32>
    %252 = math.exp %251 : vector<8x128xf32>
    %cst_69 = arith.constant 1.000000e+00 : f32
    %253 = vector.broadcast %cst_69 : f32 to vector<8x128xf32>
    %254 = arith.addf %253, %252 : vector<8x128xf32>
    %255 = arith.divf %253, %254 : vector<8x128xf32>
    %256 = vector.extract_strided_slice %245 {offsets = [0, 128], sizes = [8, 128], strides = [1, 1]} : vector<8x384xf32> to vector<8x128xf32>
    %257 = vector.extract_strided_slice %247 {offsets = [0, 128], sizes = [8, 128], strides = [1, 1]} : vector<8x384xf32> to vector<8x128xf32>
    %258 = arith.addf %256, %257 : vector<8x128xf32>
    %259 = arith.negf %258 : vector<8x128xf32>
    %260 = math.exp %259 : vector<8x128xf32>
    %cst_70 = arith.constant 1.000000e+00 : f32
    %261 = vector.broadcast %cst_70 : f32 to vector<8x128xf32>
    %262 = arith.addf %261, %260 : vector<8x128xf32>
    %263 = arith.divf %261, %262 : vector<8x128xf32>
    %264 = vector.extract_strided_slice %245 {offsets = [0, 256], sizes = [8, 128], strides = [1, 1]} : vector<8x384xf32> to vector<8x128xf32>
    %265 = vector.extract_strided_slice %247 {offsets = [0, 256], sizes = [8, 128], strides = [1, 1]} : vector<8x384xf32> to vector<8x128xf32>
    %266 = arith.addf %265, %5 : vector<8x128xf32>
    %267 = arith.mulf %255, %266 : vector<8x128xf32>
    %268 = arith.addf %264, %267 : vector<8x128xf32>
    %269 = math.tanh %268 : vector<8x128xf32>
    %cst_71 = arith.constant 1.000000e+00 : f32
    %270 = vector.broadcast %cst_71 : f32 to vector<8x128xf32>
    %271 = arith.subf %270, %263 : vector<8x128xf32>
    %272 = arith.mulf %271, %269 : vector<8x128xf32>
    %273 = arith.mulf %263, %216 : vector<8x128xf32>
    %274 = arith.addf %272, %273 : vector<8x128xf32>
    %275 = tpu.concatenate %274, %242 in 1 : vector<8x128xf32>, vector<8x128xf32> -> vector<8x256xf32>
    %c0_72 = arith.constant 0 : index
    %c0_73 = arith.constant 0 : index
    %276 = vector.load %arg12[%c0_72, %c0_73] : memref<256x512xf32, #tpu.memory_space<vmem>>, vector<256x512xf32>
    %cst_74 = arith.constant dense<0.000000e+00> : vector<8x512xf32>
    %277 = tpu.matmul %275, %276, %cst_74 {dimension_numbers = #tpu.dot_dimension_numbers<[1], [0], [0], [1], [0, 0, 1, 1], [], []>} : vector<8x256xf32>, vector<256x512xf32>, vector<8x512xf32> -> vector<8x512xf32>
    %278 = arith.addf %277, %8 : vector<8x512xf32>
    %279 = vector.extract_strided_slice %278 {offsets = [0, 0], sizes = [8, 128], strides = [1, 1]} : vector<8x512xf32> to vector<8x128xf32>
    %280 = arith.negf %279 : vector<8x128xf32>
    %281 = math.exp %280 : vector<8x128xf32>
    %cst_75 = arith.constant 1.000000e+00 : f32
    %282 = vector.broadcast %cst_75 : f32 to vector<8x128xf32>
    %283 = arith.addf %282, %281 : vector<8x128xf32>
    %284 = arith.divf %282, %283 : vector<8x128xf32>
    %285 = vector.extract_strided_slice %278 {offsets = [0, 128], sizes = [8, 128], strides = [1, 1]} : vector<8x512xf32> to vector<8x128xf32>
    %286 = arith.negf %285 : vector<8x128xf32>
    %287 = math.exp %286 : vector<8x128xf32>
    %cst_76 = arith.constant 1.000000e+00 : f32
    %288 = vector.broadcast %cst_76 : f32 to vector<8x128xf32>
    %289 = arith.addf %288, %287 : vector<8x128xf32>
    %290 = arith.divf %288, %289 : vector<8x128xf32>
    %291 = vector.extract_strided_slice %278 {offsets = [0, 256], sizes = [8, 128], strides = [1, 1]} : vector<8x512xf32> to vector<8x128xf32>
    %292 = vector.extract_strided_slice %278 {offsets = [0, 384], sizes = [8, 128], strides = [1, 1]} : vector<8x512xf32> to vector<8x128xf32>
    %293 = arith.mulf %284, %292 : vector<8x128xf32>
    %294 = arith.addf %291, %293 : vector<8x128xf32>
    %295 = math.tanh %294 : vector<8x128xf32>
    %cst_77 = arith.constant 1.000000e+00 : f32
    %296 = vector.broadcast %cst_77 : f32 to vector<8x128xf32>
    %297 = arith.subf %296, %290 : vector<8x128xf32>
    %298 = arith.mulf %297, %295 : vector<8x128xf32>
    %299 = arith.mulf %290, %242 : vector<8x128xf32>
    %300 = arith.addf %298, %299 : vector<8x128xf32>
    %c5_i32 = arith.constant 5 : i32
    %301 = arith.index_cast %c5_i32 : i32 to index
    %c0_78 = arith.constant 0 : index
    %c0_79 = arith.constant 0 : index
    %302 = vector.load %arg1[%301, %c0_78, %c0_79] : memref<8x8x384xf32, #tpu.memory_space<vmem>>, vector<1x8x384xf32>
    %303 = vector.shape_cast %302 : vector<1x8x384xf32> to vector<8x384xf32>
    %c0_80 = arith.constant 0 : index
    %c0_81 = arith.constant 0 : index
    %304 = vector.load %arg11[%c0_80, %c0_81] : memref<128x384xf32, #tpu.memory_space<vmem>>, vector<128x384xf32>
    %cst_82 = arith.constant dense<0.000000e+00> : vector<8x384xf32>
    %305 = tpu.matmul %274, %304, %cst_82 {dimension_numbers = #tpu.dot_dimension_numbers<[1], [0], [0], [1], [0, 0, 1, 1], [], []>} : vector<8x128xf32>, vector<128x384xf32>, vector<8x384xf32> -> vector<8x384xf32>
    %306 = vector.extract_strided_slice %303 {offsets = [0, 0], sizes = [8, 128], strides = [1, 1]} : vector<8x384xf32> to vector<8x128xf32>
    %307 = vector.extract_strided_slice %305 {offsets = [0, 0], sizes = [8, 128], strides = [1, 1]} : vector<8x384xf32> to vector<8x128xf32>
    %308 = arith.addf %306, %307 : vector<8x128xf32>
    %309 = arith.negf %308 : vector<8x128xf32>
    %310 = math.exp %309 : vector<8x128xf32>
    %cst_83 = arith.constant 1.000000e+00 : f32
    %311 = vector.broadcast %cst_83 : f32 to vector<8x128xf32>
    %312 = arith.addf %311, %310 : vector<8x128xf32>
    %313 = arith.divf %311, %312 : vector<8x128xf32>
    %314 = vector.extract_strided_slice %303 {offsets = [0, 128], sizes = [8, 128], strides = [1, 1]} : vector<8x384xf32> to vector<8x128xf32>
    %315 = vector.extract_strided_slice %305 {offsets = [0, 128], sizes = [8, 128], strides = [1, 1]} : vector<8x384xf32> to vector<8x128xf32>
    %316 = arith.addf %314, %315 : vector<8x128xf32>
    %317 = arith.negf %316 : vector<8x128xf32>
    %318 = math.exp %317 : vector<8x128xf32>
    %cst_84 = arith.constant 1.000000e+00 : f32
    %319 = vector.broadcast %cst_84 : f32 to vector<8x128xf32>
    %320 = arith.addf %319, %318 : vector<8x128xf32>
    %321 = arith.divf %319, %320 : vector<8x128xf32>
    %322 = vector.extract_strided_slice %303 {offsets = [0, 256], sizes = [8, 128], strides = [1, 1]} : vector<8x384xf32> to vector<8x128xf32>
    %323 = vector.extract_strided_slice %305 {offsets = [0, 256], sizes = [8, 128], strides = [1, 1]} : vector<8x384xf32> to vector<8x128xf32>
    %324 = arith.addf %323, %5 : vector<8x128xf32>
    %325 = arith.mulf %313, %324 : vector<8x128xf32>
    %326 = arith.addf %322, %325 : vector<8x128xf32>
    %327 = math.tanh %326 : vector<8x128xf32>
    %cst_85 = arith.constant 1.000000e+00 : f32
    %328 = vector.broadcast %cst_85 : f32 to vector<8x128xf32>
    %329 = arith.subf %328, %321 : vector<8x128xf32>
    %330 = arith.mulf %329, %327 : vector<8x128xf32>
    %331 = arith.mulf %321, %274 : vector<8x128xf32>
    %332 = arith.addf %330, %331 : vector<8x128xf32>
    %333 = tpu.concatenate %332, %300 in 1 : vector<8x128xf32>, vector<8x128xf32> -> vector<8x256xf32>
    %c0_86 = arith.constant 0 : index
    %c0_87 = arith.constant 0 : index
    %334 = vector.load %arg12[%c0_86, %c0_87] : memref<256x512xf32, #tpu.memory_space<vmem>>, vector<256x512xf32>
    %cst_88 = arith.constant dense<0.000000e+00> : vector<8x512xf32>
    %335 = tpu.matmul %333, %334, %cst_88 {dimension_numbers = #tpu.dot_dimension_numbers<[1], [0], [0], [1], [0, 0, 1, 1], [], []>} : vector<8x256xf32>, vector<256x512xf32>, vector<8x512xf32> -> vector<8x512xf32>
    %336 = arith.addf %335, %8 : vector<8x512xf32>
    %337 = vector.extract_strided_slice %336 {offsets = [0, 0], sizes = [8, 128], strides = [1, 1]} : vector<8x512xf32> to vector<8x128xf32>
    %338 = arith.negf %337 : vector<8x128xf32>
    %339 = math.exp %338 : vector<8x128xf32>
    %cst_89 = arith.constant 1.000000e+00 : f32
    %340 = vector.broadcast %cst_89 : f32 to vector<8x128xf32>
    %341 = arith.addf %340, %339 : vector<8x128xf32>
    %342 = arith.divf %340, %341 : vector<8x128xf32>
    %343 = vector.extract_strided_slice %336 {offsets = [0, 128], sizes = [8, 128], strides = [1, 1]} : vector<8x512xf32> to vector<8x128xf32>
    %344 = arith.negf %343 : vector<8x128xf32>
    %345 = math.exp %344 : vector<8x128xf32>
    %cst_90 = arith.constant 1.000000e+00 : f32
    %346 = vector.broadcast %cst_90 : f32 to vector<8x128xf32>
    %347 = arith.addf %346, %345 : vector<8x128xf32>
    %348 = arith.divf %346, %347 : vector<8x128xf32>
    %349 = vector.extract_strided_slice %336 {offsets = [0, 256], sizes = [8, 128], strides = [1, 1]} : vector<8x512xf32> to vector<8x128xf32>
    %350 = vector.extract_strided_slice %336 {offsets = [0, 384], sizes = [8, 128], strides = [1, 1]} : vector<8x512xf32> to vector<8x128xf32>
    %351 = arith.mulf %342, %350 : vector<8x128xf32>
    %352 = arith.addf %349, %351 : vector<8x128xf32>
    %353 = math.tanh %352 : vector<8x128xf32>
    %cst_91 = arith.constant 1.000000e+00 : f32
    %354 = vector.broadcast %cst_91 : f32 to vector<8x128xf32>
    %355 = arith.subf %354, %348 : vector<8x128xf32>
    %356 = arith.mulf %355, %353 : vector<8x128xf32>
    %357 = arith.mulf %348, %300 : vector<8x128xf32>
    %358 = arith.addf %356, %357 : vector<8x128xf32>
    %c6_i32 = arith.constant 6 : i32
    %359 = arith.index_cast %c6_i32 : i32 to index
    %c0_92 = arith.constant 0 : index
    %c0_93 = arith.constant 0 : index
    %360 = vector.load %arg1[%359, %c0_92, %c0_93] : memref<8x8x384xf32, #tpu.memory_space<vmem>>, vector<1x8x384xf32>
    %361 = vector.shape_cast %360 : vector<1x8x384xf32> to vector<8x384xf32>
    %c0_94 = arith.constant 0 : index
    %c0_95 = arith.constant 0 : index
    %362 = vector.load %arg11[%c0_94, %c0_95] : memref<128x384xf32, #tpu.memory_space<vmem>>, vector<128x384xf32>
    %cst_96 = arith.constant dense<0.000000e+00> : vector<8x384xf32>
    %363 = tpu.matmul %332, %362, %cst_96 {dimension_numbers = #tpu.dot_dimension_numbers<[1], [0], [0], [1], [0, 0, 1, 1], [], []>} : vector<8x128xf32>, vector<128x384xf32>, vector<8x384xf32> -> vector<8x384xf32>
    %364 = vector.extract_strided_slice %361 {offsets = [0, 0], sizes = [8, 128], strides = [1, 1]} : vector<8x384xf32> to vector<8x128xf32>
    %365 = vector.extract_strided_slice %363 {offsets = [0, 0], sizes = [8, 128], strides = [1, 1]} : vector<8x384xf32> to vector<8x128xf32>
    %366 = arith.addf %364, %365 : vector<8x128xf32>
    %367 = arith.negf %366 : vector<8x128xf32>
    %368 = math.exp %367 : vector<8x128xf32>
    %cst_97 = arith.constant 1.000000e+00 : f32
    %369 = vector.broadcast %cst_97 : f32 to vector<8x128xf32>
    %370 = arith.addf %369, %368 : vector<8x128xf32>
    %371 = arith.divf %369, %370 : vector<8x128xf32>
    %372 = vector.extract_strided_slice %361 {offsets = [0, 128], sizes = [8, 128], strides = [1, 1]} : vector<8x384xf32> to vector<8x128xf32>
    %373 = vector.extract_strided_slice %363 {offsets = [0, 128], sizes = [8, 128], strides = [1, 1]} : vector<8x384xf32> to vector<8x128xf32>
    %374 = arith.addf %372, %373 : vector<8x128xf32>
    %375 = arith.negf %374 : vector<8x128xf32>
    %376 = math.exp %375 : vector<8x128xf32>
    %cst_98 = arith.constant 1.000000e+00 : f32
    %377 = vector.broadcast %cst_98 : f32 to vector<8x128xf32>
    %378 = arith.addf %377, %376 : vector<8x128xf32>
    %379 = arith.divf %377, %378 : vector<8x128xf32>
    %380 = vector.extract_strided_slice %361 {offsets = [0, 256], sizes = [8, 128], strides = [1, 1]} : vector<8x384xf32> to vector<8x128xf32>
    %381 = vector.extract_strided_slice %363 {offsets = [0, 256], sizes = [8, 128], strides = [1, 1]} : vector<8x384xf32> to vector<8x128xf32>
    %382 = arith.addf %381, %5 : vector<8x128xf32>
    %383 = arith.mulf %371, %382 : vector<8x128xf32>
    %384 = arith.addf %380, %383 : vector<8x128xf32>
    %385 = math.tanh %384 : vector<8x128xf32>
    %cst_99 = arith.constant 1.000000e+00 : f32
    %386 = vector.broadcast %cst_99 : f32 to vector<8x128xf32>
    %387 = arith.subf %386, %379 : vector<8x128xf32>
    %388 = arith.mulf %387, %385 : vector<8x128xf32>
    %389 = arith.mulf %379, %332 : vector<8x128xf32>
    %390 = arith.addf %388, %389 : vector<8x128xf32>
    %391 = tpu.concatenate %390, %358 in 1 : vector<8x128xf32>, vector<8x128xf32> -> vector<8x256xf32>
    %c0_100 = arith.constant 0 : index
    %c0_101 = arith.constant 0 : index
    %392 = vector.load %arg12[%c0_100, %c0_101] : memref<256x512xf32, #tpu.memory_space<vmem>>, vector<256x512xf32>
    %cst_102 = arith.constant dense<0.000000e+00> : vector<8x512xf32>
    %393 = tpu.matmul %391, %392, %cst_102 {dimension_numbers = #tpu.dot_dimension_numbers<[1], [0], [0], [1], [0, 0, 1, 1], [], []>} : vector<8x256xf32>, vector<256x512xf32>, vector<8x512xf32> -> vector<8x512xf32>
    %394 = arith.addf %393, %8 : vector<8x512xf32>
    %395 = vector.extract_strided_slice %394 {offsets = [0, 0], sizes = [8, 128], strides = [1, 1]} : vector<8x512xf32> to vector<8x128xf32>
    %396 = arith.negf %395 : vector<8x128xf32>
    %397 = math.exp %396 : vector<8x128xf32>
    %cst_103 = arith.constant 1.000000e+00 : f32
    %398 = vector.broadcast %cst_103 : f32 to vector<8x128xf32>
    %399 = arith.addf %398, %397 : vector<8x128xf32>
    %400 = arith.divf %398, %399 : vector<8x128xf32>
    %401 = vector.extract_strided_slice %394 {offsets = [0, 128], sizes = [8, 128], strides = [1, 1]} : vector<8x512xf32> to vector<8x128xf32>
    %402 = arith.negf %401 : vector<8x128xf32>
    %403 = math.exp %402 : vector<8x128xf32>
    %cst_104 = arith.constant 1.000000e+00 : f32
    %404 = vector.broadcast %cst_104 : f32 to vector<8x128xf32>
    %405 = arith.addf %404, %403 : vector<8x128xf32>
    %406 = arith.divf %404, %405 : vector<8x128xf32>
    %407 = vector.extract_strided_slice %394 {offsets = [0, 256], sizes = [8, 128], strides = [1, 1]} : vector<8x512xf32> to vector<8x128xf32>
    %408 = vector.extract_strided_slice %394 {offsets = [0, 384], sizes = [8, 128], strides = [1, 1]} : vector<8x512xf32> to vector<8x128xf32>
    %409 = arith.mulf %400, %408 : vector<8x128xf32>
    %410 = arith.addf %407, %409 : vector<8x128xf32>
    %411 = math.tanh %410 : vector<8x128xf32>
    %cst_105 = arith.constant 1.000000e+00 : f32
    %412 = vector.broadcast %cst_105 : f32 to vector<8x128xf32>
    %413 = arith.subf %412, %406 : vector<8x128xf32>
    %414 = arith.mulf %413, %411 : vector<8x128xf32>
    %415 = arith.mulf %406, %358 : vector<8x128xf32>
    %416 = arith.addf %414, %415 : vector<8x128xf32>
    %c7_i32 = arith.constant 7 : i32
    %417 = arith.index_cast %c7_i32 : i32 to index
    %c0_106 = arith.constant 0 : index
    %c0_107 = arith.constant 0 : index
    %418 = vector.load %arg1[%417, %c0_106, %c0_107] : memref<8x8x384xf32, #tpu.memory_space<vmem>>, vector<1x8x384xf32>
    %419 = vector.shape_cast %418 : vector<1x8x384xf32> to vector<8x384xf32>
    %c0_108 = arith.constant 0 : index
    %c0_109 = arith.constant 0 : index
    %420 = vector.load %arg11[%c0_108, %c0_109] : memref<128x384xf32, #tpu.memory_space<vmem>>, vector<128x384xf32>
    %cst_110 = arith.constant dense<0.000000e+00> : vector<8x384xf32>
    %421 = tpu.matmul %390, %420, %cst_110 {dimension_numbers = #tpu.dot_dimension_numbers<[1], [0], [0], [1], [0, 0, 1, 1], [], []>} : vector<8x128xf32>, vector<128x384xf32>, vector<8x384xf32> -> vector<8x384xf32>
    %422 = vector.extract_strided_slice %419 {offsets = [0, 0], sizes = [8, 128], strides = [1, 1]} : vector<8x384xf32> to vector<8x128xf32>
    %423 = vector.extract_strided_slice %421 {offsets = [0, 0], sizes = [8, 128], strides = [1, 1]} : vector<8x384xf32> to vector<8x128xf32>
    %424 = arith.addf %422, %423 : vector<8x128xf32>
    %425 = arith.negf %424 : vector<8x128xf32>
    %426 = math.exp %425 : vector<8x128xf32>
    %cst_111 = arith.constant 1.000000e+00 : f32
    %427 = vector.broadcast %cst_111 : f32 to vector<8x128xf32>
    %428 = arith.addf %427, %426 : vector<8x128xf32>
    %429 = arith.divf %427, %428 : vector<8x128xf32>
    %430 = vector.extract_strided_slice %419 {offsets = [0, 128], sizes = [8, 128], strides = [1, 1]} : vector<8x384xf32> to vector<8x128xf32>
    %431 = vector.extract_strided_slice %421 {offsets = [0, 128], sizes = [8, 128], strides = [1, 1]} : vector<8x384xf32> to vector<8x128xf32>
    %432 = arith.addf %430, %431 : vector<8x128xf32>
    %433 = arith.negf %432 : vector<8x128xf32>
    %434 = math.exp %433 : vector<8x128xf32>
    %cst_112 = arith.constant 1.000000e+00 : f32
    %435 = vector.broadcast %cst_112 : f32 to vector<8x128xf32>
    %436 = arith.addf %435, %434 : vector<8x128xf32>
    %437 = arith.divf %435, %436 : vector<8x128xf32>
    %438 = vector.extract_strided_slice %419 {offsets = [0, 256], sizes = [8, 128], strides = [1, 1]} : vector<8x384xf32> to vector<8x128xf32>
    %439 = vector.extract_strided_slice %421 {offsets = [0, 256], sizes = [8, 128], strides = [1, 1]} : vector<8x384xf32> to vector<8x128xf32>
    %440 = arith.addf %439, %5 : vector<8x128xf32>
    %441 = arith.mulf %429, %440 : vector<8x128xf32>
    %442 = arith.addf %438, %441 : vector<8x128xf32>
    %443 = math.tanh %442 : vector<8x128xf32>
    %cst_113 = arith.constant 1.000000e+00 : f32
    %444 = vector.broadcast %cst_113 : f32 to vector<8x128xf32>
    %445 = arith.subf %444, %437 : vector<8x128xf32>
    %446 = arith.mulf %445, %443 : vector<8x128xf32>
    %447 = arith.mulf %437, %390 : vector<8x128xf32>
    %448 = arith.addf %446, %447 : vector<8x128xf32>
    %449 = tpu.concatenate %448, %416 in 1 : vector<8x128xf32>, vector<8x128xf32> -> vector<8x256xf32>
    %c0_114 = arith.constant 0 : index
    %c0_115 = arith.constant 0 : index
    %450 = vector.load %arg12[%c0_114, %c0_115] : memref<256x512xf32, #tpu.memory_space<vmem>>, vector<256x512xf32>
    %cst_116 = arith.constant dense<0.000000e+00> : vector<8x512xf32>
    %451 = tpu.matmul %449, %450, %cst_116 {dimension_numbers = #tpu.dot_dimension_numbers<[1], [0], [0], [1], [0, 0, 1, 1], [], []>} : vector<8x256xf32>, vector<256x512xf32>, vector<8x512xf32> -> vector<8x512xf32>
    %452 = arith.addf %451, %8 : vector<8x512xf32>
    %453 = vector.extract_strided_slice %452 {offsets = [0, 0], sizes = [8, 128], strides = [1, 1]} : vector<8x512xf32> to vector<8x128xf32>
    %454 = arith.negf %453 : vector<8x128xf32>
    %455 = math.exp %454 : vector<8x128xf32>
    %cst_117 = arith.constant 1.000000e+00 : f32
    %456 = vector.broadcast %cst_117 : f32 to vector<8x128xf32>
    %457 = arith.addf %456, %455 : vector<8x128xf32>
    %458 = arith.divf %456, %457 : vector<8x128xf32>
    %459 = vector.extract_strided_slice %452 {offsets = [0, 128], sizes = [8, 128], strides = [1, 1]} : vector<8x512xf32> to vector<8x128xf32>
    %460 = arith.negf %459 : vector<8x128xf32>
    %461 = math.exp %460 : vector<8x128xf32>
    %cst_118 = arith.constant 1.000000e+00 : f32
    %462 = vector.broadcast %cst_118 : f32 to vector<8x128xf32>
    %463 = arith.addf %462, %461 : vector<8x128xf32>
    %464 = arith.divf %462, %463 : vector<8x128xf32>
    %465 = vector.extract_strided_slice %452 {offsets = [0, 256], sizes = [8, 128], strides = [1, 1]} : vector<8x512xf32> to vector<8x128xf32>
    %466 = vector.extract_strided_slice %452 {offsets = [0, 384], sizes = [8, 128], strides = [1, 1]} : vector<8x512xf32> to vector<8x128xf32>
    %467 = arith.mulf %458, %466 : vector<8x128xf32>
    %468 = arith.addf %465, %467 : vector<8x128xf32>
    %469 = math.tanh %468 : vector<8x128xf32>
    %cst_119 = arith.constant 1.000000e+00 : f32
    %470 = vector.broadcast %cst_119 : f32 to vector<8x128xf32>
    %471 = arith.subf %470, %464 : vector<8x128xf32>
    %472 = arith.mulf %471, %469 : vector<8x128xf32>
    %473 = arith.mulf %464, %416 : vector<8x128xf32>
    %474 = arith.addf %472, %473 : vector<8x128xf32>
    %c8_i32 = arith.constant 8 : i32
    %c0_120 = arith.constant 0 : index
    %c0_121 = arith.constant 0 : index
    %475 = vector.load %arg9[%c0_120, %c0_121] : memref<8x128xf32, #tpu.memory_space<vmem>>, vector<8x128xf32>
    tpu.vector_store %arg9[%c0_120, %c0_121], %448 {strides = array<i32>} : memref<8x128xf32, #tpu.memory_space<vmem>>, vector<8x128xf32>,
    %c0_122 = arith.constant 0 : index
    %c0_123 = arith.constant 0 : index
    %476 = vector.load %arg10[%c0_122, %c0_123] : memref<8x128xf32, #tpu.memory_space<vmem>>, vector<8x128xf32>
    tpu.vector_store %arg10[%c0_122, %c0_123], %474 {strides = array<i32>} : memref<8x128xf32, #tpu.memory_space<vmem>>, vector<8x128xf32>,
    %c0_i32_124 = arith.constant 0 : i32
    %477 = arith.cmpi eq, %arg0, %c0_i32_124 : i32
    %478 = arith.extui %477 : i1 to i32
    %c0_i32_125 = arith.constant 0 : i32
    %479 = arith.cmpi ne, %478, %c0_i32_125 : i32
    scf.if %479 {
      %c2_i32_126 = arith.constant 2 : i32
      %480 = tpu.memref_slice %arg14[%c2_i32_126] : memref<3x!tpu.dma_semaphore, #tpu.memory_space<semaphore_mem>> -> memref<1x!tpu.dma_semaphore, #tpu.memory_space<semaphore_mem>>
      %481 = tpu.memref_squeeze %480 : memref<1x!tpu.dma_semaphore, #tpu.memory_space<semaphore_mem>> -> memref<!tpu.dma_semaphore, #tpu.memory_space<semaphore_mem>>
      tpu.wait_dma2 semaphore(%481 : memref<!tpu.dma_semaphore, #tpu.memory_space<semaphore_mem>>) src(%arg4 : memref<128x4xf32, #tpu.memory_space<any>>) dst(%arg13 : memref<128x4xf32, #tpu.memory_space<vmem>>)
      %c0_127 = arith.constant 0 : index
      %c0_128 = arith.constant 0 : index
      %482 = vector.load %arg13[%c0_127, %c0_128] : memref<128x4xf32, #tpu.memory_space<vmem>>, vector<128x4xf32>
      %cst_129 = arith.constant dense<0.000000e+00> : vector<8x4xf32>
      %483 = tpu.matmul %474, %482, %cst_129 {dimension_numbers = #tpu.dot_dimension_numbers<[1], [0], [0], [1], [0, 0, 1, 1], [], []>} : vector<8x128xf32>, vector<128x4xf32>, vector<8x4xf32> -> vector<8x4xf32>
      %c0_130 = arith.constant 0 : index
      %c0_131 = arith.constant 0 : index
      %484 = vector.load %arg7[%c0_130, %c0_131] : memref<1x4xf32, #tpu.memory_space<vmem>>, vector<1x4xf32>
      %485 = vector.broadcast %484 : vector<1x4xf32> to vector<8x4xf32>
      %486 = arith.addf %483, %485 : vector<8x4xf32>
      %c0_132 = arith.constant 0 : index
      %c0_133 = arith.constant 0 : index
      %487 = vector.load %arg8[%c0_132, %c0_133] : memref<8x4xf32, #tpu.memory_space<vmem>>, vector<8x4xf32>
      tpu.vector_store %arg8[%c0_132, %c0_133], %486 {strides = array<i32>} : memref<8x4xf32, #tpu.memory_space<vmem>>, vector<8x4xf32>,
    } else {
    }
    return
  }
  func.func @transform_0(%arg0: i32) -> (i32, i32, i32) {
    %c0_i32 = arith.constant 0 : i32
    %c0_i32_0 = arith.constant 0 : i32
    %c0_i32_1 = arith.constant 0 : i32
    return %arg0, %c0_i32, %c0_i32_0 : i32, i32, i32
  }
  func.func @transform_4(%arg0: i32) -> (i32, i32) {
    %c0_i32 = arith.constant 0 : i32
    %c0_i32_0 = arith.constant 0 : i32
    %c0_i32_1 = arith.constant 0 : i32
    return %c0_i32, %c0_i32_0 : i32, i32
  }
  func.func @transform_5(%arg0: i32) -> (i32, i32) {
    %c0_i32 = arith.constant 0 : i32
    %c0_i32_0 = arith.constant 0 : i32
    %c0_i32_1 = arith.constant 0 : i32
    return %c0_i32, %c0_i32_0 : i32, i32
  }
  func.func @transform_6(%arg0: i32) -> (i32, i32) {
    %c0_i32 = arith.constant 0 : i32
    %c0_i32_0 = arith.constant 0 : i32
    %c0_i32_1 = arith.constant 0 : i32
    return %c0_i32, %c0_i32_0 : i32, i32
  }
  func.func @transform_7(%arg0: i32) -> (i32, i32) {
    %c0_i32 = arith.constant 0 : i32
    %c0_i32_0 = arith.constant 0 : i32
    %c0_i32_1 = arith.constant 0 : i32
    return %c0_i32, %c0_i32_0 : i32, i32
  }
}

</mosaic_0001>

<llo_original>
// kernel: gru_encoder_forward.1
$region0: #{gru_encoder_forward.1}
  #allocation0 [shape = 'u32[]', space=smem, size = 0x4, offset = 0x4, fixed_abs, tag = 'smem constant byte address 0x4 - core index']
  #allocation1 [shape = 'u32[144,128]{1,0:T(1,128)}', space=vmem, size = 0x12000, scoped, tag = 'internal scratch']
  #allocation2 [shape = 'f32[8,128]{1,0:T(8,128)}', space=vmem, size = 0x1000, scoped, tag = 'scratch operand']
  #allocation3 [shape = 'f32[8,128]{1,0:T(8,128)}', space=vmem, size = 0x1000, scoped, tag = 'scratch operand']
  #allocation4 [shape = 'f32[128,384]{1,0:T(8,128)}', space=vmem, size = 0x30000, scoped, tag = 'scratch operand']
  #allocation5 [shape = 'f32[256,512]{1,0:T(8,128)}', space=vmem, size = 0x80000, scoped, tag = 'scratch operand']
  #allocation6 [shape = 'f32[128,4]{1,0:T(8,128)}', space=vmem, size = 0x10000, scoped, tag = 'scratch operand']
  #allocation7 [shape = 's32[3]{0}', space=sflag, size = 0xc, scoped, tag = 'scratch operand']
  #allocation8 [shape = 's32[]', space=sflag, size = 0x4, offset = 0, fixed_abs, tag = 'sflag constant byte address 0x0 - dummy sync flag']
  #allocation9 [shape = 's32[]', space=sflag, size = 0x4, offset = 0, fixed_abs, tag = 'sflag constant byte address 0x0 - dummy sync flag']
  #allocation10 [shape = 's32[]', space=sflag, size = 0x4, offset = 0, fixed_abs, tag = 'sflag constant byte address 0x0 - dummy sync flag']
  %s0 = inlined_call_operand.vmem [shape: f32[8,8,384], index: 0, kind: input, shape index: {}]
  %s1 = inlined_call_operand.vmem [shape: f32[128,384], index: 1, kind: input, shape index: {}]
  %s2 = inlined_call_operand.vmem [shape: f32[256,512], index: 2, kind: input, shape index: {}]
  %s3 = inlined_call_operand.vmem [shape: f32[128,4], index: 3, kind: input, shape index: {}]
  %s4 = inlined_call_operand.vmem [shape: f32[1,128], index: 4, kind: input, shape index: {}]
  %s5 = inlined_call_operand.vmem [shape: f32[1,512], index: 5, kind: input, shape index: {}]
  %s6 = inlined_call_operand.vmem [shape: f32[1,4], index: 6, kind: input, shape index: {}]
  %s7 = inlined_call_operand.vmem [shape: f32[8,4], index: 7, kind: output, shape index: {}]
  %s8 = sld [smem:[#allocation0]]
  $region136: #{gru_encoder_forward.1} parent=0
    _
  %s10 = ssub.s32 1, %s8
  %s11 = scalar_select 0, %s10, %s8
  // Predicated region
  $region2: #{gru_encoder_forward.1} parent=0 // pred_check
    _
  $region3: #{gru_encoder_forward.1} parent=0 // pred_check_branch
    %13 = sbr.rel (0) target = $region5
  $region4: #{gru_encoder_forward.1} parent=0 // pred_region
    _
  $region5: #{gru_encoder_forward.1} parent=0 // pred_fallthru
    _
  // Predicated region
  $region6: #{gru_encoder_forward.1} parent=0 // pred_check
    _
  $region7: #{gru_encoder_forward.1} parent=0 // pred_check_branch
    %15 = sbr.rel (0) target = $region9
  $region8: #{gru_encoder_forward.1} parent=0 // pred_region
    _
  $region9: #{gru_encoder_forward.1} parent=0 // pred_fallthru
    _
  // Predicated region
  $region10: #{gru_encoder_forward.1} parent=0 // pred_check
    _
  $region11: #{gru_encoder_forward.1} parent=0 // pred_check_branch
    %17 = sbr.rel (0) target = $region13
  $region12: #{gru_encoder_forward.1} parent=0 // pred_region
    _
  $region13: #{gru_encoder_forward.1} parent=0 // pred_fallthru
    _
  // Predicated region
  $region14: #{gru_encoder_forward.1} parent=0 // pred_check
    _
  $region15: #{gru_encoder_forward.1} parent=0 // pred_check_branch
    %19 = sbr.rel (0) target = $region17
  $region16: #{gru_encoder_forward.1} parent=0 // pred_region
    _
  $region17: #{gru_encoder_forward.1} parent=0 // pred_fallthru
    _
  %p20 = scmp.eq.s32.totalorder 0, 0
  // Predicated region
  $region18: #{gru_encoder_forward.1} parent=0 // pred_check
    %p21 = pneg %p20
  $region19: #{gru_encoder_forward.1} parent=0 // pred_check_branch
    %23 = sbr.rel (%p21) target = $region21
  $region20: #{gru_encoder_forward.1} parent=0 // pred_region
    %24 = vst [vmem:[#allocation2] sm:$0xff] 0.0
    %25 = vst [vmem:[#allocation3] sm:$0xff] 0.0
    %p27 = scmp.lt.u32.totalorder 384, 8
    %p28 = pneg %p27
    // Predicated region
    $region22: #{gru_encoder_forward.1} parent=20 // pred_check
      _
    $region23: #{gru_encoder_forward.1} parent=20 // pred_check_branch
      %30 = sbr.rel (%p27) target = $region25
    $region24: #{gru_encoder_forward.1} parent=20 // pred_region
      %s45 = sand.u32 384, 7
      %p46 = scmp.eq.s32.totalorder %s45, 0
      // Predicated region
      $region37: #{gru_encoder_forward.1} parent=24 // pred_check
        %p47 = pneg %p46
      $region38: #{gru_encoder_forward.1} parent=24 // pred_check_branch
        %49 = sbr.rel (%p47) target = $region40
      $region39: #{gru_encoder_forward.1} parent=24 // pred_region
        loop: start=0, step=1, limit=1
        $region41: #{gru_encoder_forward.1} parent=39 // loop_pre_header
          _
        $region42: #{gru_encoder_forward.1} parent=39 // loop_header
          %s51 = sphi 0, %s55
          %p52 = scmp.ge.s32.totalorder %s51, 1
          %s56 = sphi %s1, %s1
          %s57 = sphi [#allocation4], [#allocation4]
        $region43: #{gru_encoder_forward.1} parent=39 // loop_header_branch
          %54 = sbr.rel (%p52) target = $region47
        $region44: #{gru_encoder_forward.1} parent=39 // loop_body
          %v58 = vld [vmem:[%s56] sm:$0xff]
          %59 = vst [vmem:[%s57] sm:$0xff] %v58
          %v60 = vld [vmem:[%s56 + $0x8] sm:$0xff]
          %61 = vst [vmem:[%s57 + $0x8] sm:$0xff] %v60
          %v62 = vld [vmem:[%s56 + $0x10] sm:$0xff]
          %63 = vst [vmem:[%s57 + $0x10] sm:$0xff] %v62
          %v64 = vld [vmem:[%s56 + $0x18] sm:$0xff]
          %65 = vst [vmem:[%s57 + $0x18] sm:$0xff] %v64
          %v66 = vld [vmem:[%s56 + $0x20] sm:$0xff]
          %67 = vst [vmem:[%s57 + $0x20] sm:$0xff] %v66
          %v68 = vld [vmem:[%s56 + $0x28] sm:$0xff]
          %69 = vst [vmem:[%s57 + $0x28] sm:$0xff] %v68
          %v70 = vld [vmem:[%s56 + $0x30] sm:$0xff]
          %71 = vst [vmem:[%s57 + $0x30] sm:$0xff] %v70
          %v72 = vld [vmem:[%s56 + $0x38] sm:$0xff]
          %73 = vst [vmem:[%s57 + $0x38] sm:$0xff] %v72
          %v74 = vld [vmem:[%s56 + $0x40] sm:$0xff]
          %75 = vst [vmem:[%s57 + $0x40] sm:$0xff] %v74
          %v76 = vld [vmem:[%s56 + $0x48] sm:$0xff]
          %77 = vst [vmem:[%s57 + $0x48] sm:$0xff] %v76
          %v78 = vld [vmem:[%s56 + $0x50] sm:$0xff]
          %79 = vst [vmem:[%s57 + $0x50] sm:$0xff] %v78
          %v80 = vld [vmem:[%s56 + $0x58] sm:$0xff]
          %81 = vst [vmem:[%s57 + $0x58] sm:$0xff] %v80
          %v82 = vld [vmem:[%s56 + $0x60] sm:$0xff]
          %83 = vst [vmem:[%s57 + $0x60] sm:$0xff] %v82
          %v84 = vld [vmem:[%s56 + $0x68] sm:$0xff]
          %85 = vst [vmem:[%s57 + $0x68] sm:$0xff] %v84
          %v86 = vld [vmem:[%s56 + $0x70] sm:$0xff]
          %87 = vst [vmem:[%s57 + $0x70] sm:$0xff] %v86
          %v88 = vld [vmem:[%s56 + $0x78] sm:$0xff]
          %89 = vst [vmem:[%s57 + $0x78] sm:$0xff] %v88
          %v90 = vld [vmem:[%s56 + $0x80] sm:$0xff]
          %91 = vst [vmem:[%s57 + $0x80] sm:$0xff] %v90
          %v92 = vld [vmem:[%s56 + $0x88] sm:$0xff]
          %93 = vst [vmem:[%s57 + $0x88] sm:$0xff] %v92
          %v94 = vld [vmem:[%s56 + $0x90] sm:$0xff]
          %95 = vst [vmem:[%s57 + $0x90] sm:$0xff] %v94
          %v96 = vld [vmem:[%s56 + $0x98] sm:$0xff]
          %97 = vst [vmem:[%s57 + $0x98] sm:$0xff] %v96
          %v98 = vld [vmem:[%s56 + $0xa0] sm:$0xff]
          %99 = vst [vmem:[%s57 + $0xa0] sm:$0xff] %v98
          %v100 = vld [vmem:[%s56 + $0xa8] sm:$0xff]
          %101 = vst [vmem:[%s57 + $0xa8] sm:$0xff] %v100
          %v102 = vld [vmem:[%s56 + $0xb0] sm:$0xff]
          %103 = vst [vmem:[%s57 + $0xb0] sm:$0xff] %v102
          %v104 = vld [vmem:[%s56 + $0xb8] sm:$0xff]
          %105 = vst [vmem:[%s57 + $0xb8] sm:$0xff] %v104
          %v106 = vld [vmem:[%s56 + $0xc0] sm:$0xff]
          %107 = vst [vmem:[%s57 + $0xc0] sm:$0xff] %v106
          %v108 = vld [vmem:[%s56 + $0xc8] sm:$0xff]
          %109 = vst [vmem:[%s57 + $0xc8] sm:$0xff] %v108
          %v110 = vld [vmem:[%s56 + $0xd0] sm:$0xff]
          %111 = vst [vmem:[%s57 + $0xd0] sm:$0xff] %v110
          %v112 = vld [vmem:[%s56 + $0xd8] sm:$0xff]
          %113 = vst [vmem:[%s57 + $0xd8] sm:$0xff] %v112
          %v114 = vld [vmem:[%s56 + $0xe0] sm:$0xff]
          %115 = vst [vmem:[%s57 + $0xe0] sm:$0xff] %v114
          %v116 = vld [vmem:[%s56 + $0xe8] sm:$0xff]
          %117 = vst [vmem:[%s57 + $0xe8] sm:$0xff] %v116
          %v118 = vld [vmem:[%s56 + $0xf0] sm:$0xff]
          %119 = vst [vmem:[%s57 + $0xf0] sm:$0xff] %v118
          %v120 = vld [vmem:[%s56 + $0xf8] sm:$0xff]
          %121 = vst [vmem:[%s57 + $0xf8] sm:$0xff] %v120
          %v122 = vld [vmem:[%s56 + $0x100] sm:$0xff]
          %123 = vst [vmem:[%s57 + $0x100] sm:$0xff] %v122
          %v124 = vld [vmem:[%s56 + $0x108] sm:$0xff]
          %125 = vst [vmem:[%s57 + $0x108] sm:$0xff] %v124
          %v126 = vld [vmem:[%s56 + $0x110] sm:$0xff]
          %127 = vst [vmem:[%s57 + $0x110] sm:$0xff] %v126
          %v128 = vld [vmem:[%s56 + $0x118] sm:$0xff]
          %129 = vst [vmem:[%s57 + $0x118] sm:$0xff] %v128
          %v130 = vld [vmem:[%s56 + $0x120] sm:$0xff]
          %131 = vst [vmem:[%s57 + $0x120] sm:$0xff] %v130
          %v132 = vld [vmem:[%s56 + $0x128] sm:$0xff]
          %133 = vst [vmem:[%s57 + $0x128] sm:$0xff] %v132
          %v134 = vld [vmem:[%s56 + $0x130] sm:$0xff]
          %135 = vst [vmem:[%s57 + $0x130] sm:$0xff] %v134
          %v136 = vld [vmem:[%s56 + $0x138] sm:$0xff]
          %137 = vst [vmem:[%s57 + $0x138] sm:$0xff] %v136
          %v138 = vld [vmem:[%s56 + $0x140] sm:$0xff]
          %139 = vst [vmem:[%s57 + $0x140] sm:$0xff] %v138
          %v140 = vld [vmem:[%s56 + $0x148] sm:$0xff]
          %141 = vst [vmem:[%s57 + $0x148] sm:$0xff] %v140
          %v142 = vld [vmem:[%s56 + $0x150] sm:$0xff]
          %143 = vst [vmem:[%s57 + $0x150] sm:$0xff] %v142
          %v144 = vld [vmem:[%s56 + $0x158] sm:$0xff]
          %145 = vst [vmem:[%s57 + $0x158] sm:$0xff] %v144
          %v146 = vld [vmem:[%s56 + $0x160] sm:$0xff]
          %147 = vst [vmem:[%s57 + $0x160] sm:$0xff] %v146
          %v148 = vld [vmem:[%s56 + $0x168] sm:$0xff]
          %149 = vst [vmem:[%s57 + $0x168] sm:$0xff] %v148
          %v150 = vld [vmem:[%s56 + $0x170] sm:$0xff]
          %151 = vst [vmem:[%s57 + $0x170] sm:$0xff] %v150
          %v152 = vld [vmem:[%s56 + $0x178] sm:$0xff]
          %153 = vst [vmem:[%s57 + $0x178] sm:$0xff] %v152
        $region45: #{gru_encoder_forward.1} parent=39 // loop_footer
          %s55 = sadd.s32 1, %s51
        $region46: #{gru_encoder_forward.1} parent=39 // loop_footer_branch
          %50 = sbr.rel target = $region42
        $region47: #{gru_encoder_forward.1} parent=39 // loop_exit
          _
      $region40: #{gru_encoder_forward.1} parent=24 // pred_fallthru
        _
      %p154 = pneg %p46
      // Predicated region
      $region48: #{gru_encoder_forward.1} parent=24 // pred_check
        _
      $region49: #{gru_encoder_forward.1} parent=24 // pred_check_branch
        %156 = sbr.rel (%p46) target = $region51
      $region50: #{gru_encoder_forward.1} parent=24 // pred_region
        %s157 = sand.u32 384, 7
      $region51: #{gru_encoder_forward.1} parent=24 // pred_fallthru
        _
    $region25: #{gru_encoder_forward.1} parent=20 // pred_fallthru
      _
    // Predicated region
    $region26: #{gru_encoder_forward.1} parent=20 // pred_check
      %p31 = pneg %p27
    $region27: #{gru_encoder_forward.1} parent=20 // pred_check_branch
      %33 = sbr.rel (%p31) target = $region29
    $region28: #{gru_encoder_forward.1} parent=20 // pred_region
      %s34 = sshllo.u32 0, 384
      loop: start=0, step=1, limit=1
      $region30: #{gru_encoder_forward.1} parent=28 // loop_pre_header
        _
      $region31: #{gru_encoder_forward.1} parent=28 // loop_header
        %s36 = sphi 0, %s40
        %p37 = scmp.ge.s32.totalorder %s36, 1
        %s41 = sphi %s1, %s1
        %s42 = sphi [#allocation4], [#allocation4]
      $region32: #{gru_encoder_forward.1} parent=28 // loop_header_branch
        %39 = sbr.rel (%p37) target = $region36
      $region33: #{gru_encoder_forward.1} parent=28 // loop_body
        %v43 = vld [vmem:[%s41] sm:%s34]
        %44 = vst [vmem:[%s42] sm:%s34] %v43
      $region34: #{gru_encoder_forward.1} parent=28 // loop_footer
        %s40 = sadd.s32 1, %s36
      $region35: #{gru_encoder_forward.1} parent=28 // loop_footer_branch
        %35 = sbr.rel target = $region31
      $region36: #{gru_encoder_forward.1} parent=28 // loop_exit
        _
    $region29: #{gru_encoder_forward.1} parent=20 // pred_fallthru
      _
    // Predicated region
    $region52: #{gru_encoder_forward.1} parent=20 // pred_check
      _
    $region53: #{gru_encoder_forward.1} parent=20 // pred_check_branch
      %160 = sbr.rel (0) target = $region55
    $region54: #{gru_encoder_forward.1} parent=20 // pred_region
      %161 = vsyncadd [#allocation7], 6144
    $region55: #{gru_encoder_forward.1} parent=20 // pred_fallthru
      _
    %s162 = scalar_lea.sflag [#allocation7], 1
    %p164 = scmp.lt.u32.totalorder 1024, 8
    %p165 = pneg %p164
    // Predicated region
    $region56: #{gru_encoder_forward.1} parent=20 // pred_check
      _
    $region57: #{gru_encoder_forward.1} parent=20 // pred_check_branch
      %167 = sbr.rel (%p164) target = $region59
    $region58: #{gru_encoder_forward.1} parent=20 // pred_region
      %s182 = sand.u32 1024, 7
      %p183 = scmp.eq.s32.totalorder %s182, 0
      // Predicated region
      $region71: #{gru_encoder_forward.1} parent=58 // pred_check
        %p184 = pneg %p183
      $region72: #{gru_encoder_forward.1} parent=58 // pred_check_branch
        %186 = sbr.rel (%p184) target = $region74
      $region73: #{gru_encoder_forward.1} parent=58 // pred_region
        loop: start=0, step=1, limit=1
        $region75: #{gru_encoder_forward.1} parent=73 // loop_pre_header
          _
        $region76: #{gru_encoder_forward.1} parent=73 // loop_header
          %s188 = sphi 0, %s192
          %p189 = scmp.ge.s32.totalorder %s188, 1
          %s193 = sphi %s2, %s2
          %s194 = sphi [#allocation5], [#allocation5]
        $region77: #{gru_encoder_forward.1} parent=73 // loop_header_branch
          %191 = sbr.rel (%p189) target = $region81
        $region78: #{gru_encoder_forward.1} parent=73 // loop_body
          %v195 = vld [vmem:[%s193] sm:$0xff]
          %196 = vst [vmem:[%s194] sm:$0xff] %v195
          %v197 = vld [vmem:[%s193 + $0x8] sm:$0xff]
          %198 = vst [vmem:[%s194 + $0x8] sm:$0xff] %v197
          %v199 = vld [vmem:[%s193 + $0x10] sm:$0xff]
          %200 = vst [vmem:[%s194 + $0x10] sm:$0xff] %v199
          %v201 = vld [vmem:[%s193 + $0x18] sm:$0xff]
          %202 = vst [vmem:[%s194 + $0x18] sm:$0xff] %v201
          %v203 = vld [vmem:[%s193 + $0x20] sm:$0xff]
          %204 = vst [vmem:[%s194 + $0x20] sm:$0xff] %v203
          %v205 = vld [vmem:[%s193 + $0x28] sm:$0xff]
          %206 = vst [vmem:[%s194 + $0x28] sm:$0xff] %v205
          %v207 = vld [vmem:[%s193 + $0x30] sm:$0xff]
          %208 = vst [vmem:[%s194 + $0x30] sm:$0xff] %v207
          %v209 = vld [vmem:[%s193 + $0x38] sm:$0xff]
          %210 = vst [vmem:[%s194 + $0x38] sm:$0xff] %v209
          %v211 = vld [vmem:[%s193 + $0x40] sm:$0xff]
          %212 = vst [vmem:[%s194 + $0x40] sm:$0xff] %v211
          %v213 = vld [vmem:[%s193 + $0x48] sm:$0xff]
          %214 = vst [vmem:[%s194 + $0x48] sm:$0xff] %v213
          %v215 = vld [vmem:[%s193 + $0x50] sm:$0xff]
          %216 = vst [vmem:[%s194 + $0x50] sm:$0xff] %v215
          %v217 = vld [vmem:[%s193 + $0x58] sm:$0xff]
          %218 = vst [vmem:[%s194 + $0x58] sm:$0xff] %v217
          %v219 = vld [vmem:[%s193 + $0x60] sm:$0xff]
          %220 = vst [vmem:[%s194 + $0x60] sm:$0xff] %v219
          %v221 = vld [vmem:[%s193 + $0x68] sm:$0xff]
          %222 = vst [vmem:[%s194 + $0x68] sm:$0xff] %v221
          %v223 = vld [vmem:[%s193 + $0x70] sm:$0xff]
          %224 = vst [vmem:[%s194 + $0x70] sm:$0xff] %v223
          %v225 = vld [vmem:[%s193 + $0x78] sm:$0xff]
          %226 = vst [vmem:[%s194 + $0x78] sm:$0xff] %v225
          %v227 = vld [vmem:[%s193 + $0x80] sm:$0xff]
          %228 = vst [vmem:[%s194 + $0x80] sm:$0xff] %v227
          %v229 = vld [vmem:[%s193 + $0x88] sm:$0xff]
          %230 = vst [vmem:[%s194 + $0x88] sm:$0xff] %v229
          %v231 = vld [vmem:[%s193 + $0x90] sm:$0xff]
          %232 = vst [vmem:[%s194 + $0x90] sm:$0xff] %v231
          %v233 = vld [vmem:[%s193 + $0x98] sm:$0xff]
          %234 = vst [vmem:[%s194 + $0x98] sm:$0xff] %v233
          %v235 = vld [vmem:[%s193 + $0xa0] sm:$0xff]
          %236 = vst [vmem:[%s194 + $0xa0] sm:$0xff] %v235
          %v237 = vld [vmem:[%s193 + $0xa8] sm:$0xff]
          %238 = vst [vmem:[%s194 + $0xa8] sm:$0xff] %v237
          %v239 = vld [vmem:[%s193 + $0xb0] sm:$0xff]
          %240 = vst [vmem:[%s194 + $0xb0] sm:$0xff] %v239
          %v241 = vld [vmem:[%s193 + $0xb8] sm:$0xff]
          %242 = vst [vmem:[%s194 + $0xb8] sm:$0xff] %v241
          %v243 = vld [vmem:[%s193 + $0xc0] sm:$0xff]
          %244 = vst [vmem:[%s194 + $0xc0] sm:$0xff] %v243
          %v245 = vld [vmem:[%s193 + $0xc8] sm:$0xff]
          %246 = vst [vmem:[%s194 + $0xc8] sm:$0xff] %v245
          %v247 = vld [vmem:[%s193 + $0xd0] sm:$0xff]
          %248 = vst [vmem:[%s194 + $0xd0] sm:$0xff] %v247
          %v249 = vld [vmem:[%s193 + $0xd8] sm:$0xff]
          %250 = vst [vmem:[%s194 + $0xd8] sm:$0xff] %v249
          %v251 = vld [vmem:[%s193 + $0xe0] sm:$0xff]
          %252 = vst [vmem:[%s194 + $0xe0] sm:$0xff] %v251
          %v253 = vld [vmem:[%s193 + $0xe8] sm:$0xff]
          %254 = vst [vmem:[%s194 + $0xe8] sm:$0xff] %v253
          %v255 = vld [vmem:[%s193 + $0xf0] sm:$0xff]
          %256 = vst [vmem:[%s194 + $0xf0] sm:$0xff] %v255
          %v257 = vld [vmem:[%s193 + $0xf8] sm:$0xff]
          %258 = vst [vmem:[%s194 + $0xf8] sm:$0xff] %v257
          %v259 = vld [vmem:[%s193 + $0x100] sm:$0xff]
          %260 = vst [vmem:[%s194 + $0x100] sm:$0xff] %v259
          %v261 = vld [vmem:[%s193 + $0x108] sm:$0xff]
          %262 = vst [vmem:[%s194 + $0x108] sm:$0xff] %v261
          %v263 = vld [vmem:[%s193 + $0x110] sm:$0xff]
          %264 = vst [vmem:[%s194 + $0x110] sm:$0xff] %v263
          %v265 = vld [vmem:[%s193 + $0x118] sm:$0xff]
          %266 = vst [vmem:[%s194 + $0x118] sm:$0xff] %v265
          %v267 = vld [vmem:[%s193 + $0x120] sm:$0xff]
          %268 = vst [vmem:[%s194 + $0x120] sm:$0xff] %v267
          %v269 = vld [vmem:[%s193 + $0x128] sm:$0xff]
          %270 = vst [vmem:[%s194 + $0x128] sm:$0xff] %v269
          %v271 = vld [vmem:[%s193 + $0x130] sm:$0xff]
          %272 = vst [vmem:[%s194 + $0x130] sm:$0xff] %v271
          %v273 = vld [vmem:[%s193 + $0x138] sm:$0xff]
          %274 = vst [vmem:[%s194 + $0x138] sm:$0xff] %v273
          %v275 = vld [vmem:[%s193 + $0x140] sm:$0xff]
          %276 = vst [vmem:[%s194 + $0x140] sm:$0xff] %v275
          %v277 = vld [vmem:[%s193 + $0x148] sm:$0xff]
          %278 = vst [vmem:[%s194 + $0x148] sm:$0xff] %v277
          %v279 = vld [vmem:[%s193 + $0x150] sm:$0xff]
          %280 = vst [vmem:[%s194 + $0x150] sm:$0xff] %v279
          %v281 = vld [vmem:[%s193 + $0x158] sm:$0xff]
          %282 = vst [vmem:[%s194 + $0x158] sm:$0xff] %v281
          %v283 = vld [vmem:[%s193 + $0x160] sm:$0xff]
          %284 = vst [vmem:[%s194 + $0x160] sm:$0xff] %v283
          %v285 = vld [vmem:[%s193 + $0x168] sm:$0xff]
          %286 = vst [vmem:[%s194 + $0x168] sm:$0xff] %v285
          %v287 = vld [vmem:[%s193 + $0x170] sm:$0xff]
          %288 = vst [vmem:[%s194 + $0x170] sm:$0xff] %v287
          %v289 = vld [vmem:[%s193 + $0x178] sm:$0xff]
          %290 = vst [vmem:[%s194 + $0x178] sm:$0xff] %v289
          %v291 = vld [vmem:[%s193 + $0x180] sm:$0xff]
          %292 = vst [vmem:[%s194 + $0x180] sm:$0xff] %v291
          %v293 = vld [vmem:[%s193 + $0x188] sm:$0xff]
          %294 = vst [vmem:[%s194 + $0x188] sm:$0xff] %v293
          %v295 = vld [vmem:[%s193 + $0x190] sm:$0xff]
          %296 = vst [vmem:[%s194 + $0x190] sm:$0xff] %v295
          %v297 = vld [vmem:[%s193 + $0x198] sm:$0xff]
          %298 = vst [vmem:[%s194 + $0x198] sm:$0xff] %v297
          %v299 = vld [vmem:[%s193 + $0x1a0] sm:$0xff]
          %300 = vst [vmem:[%s194 + $0x1a0] sm:$0xff] %v299
          %v301 = vld [vmem:[%s193 + $0x1a8] sm:$0xff]
          %302 = vst [vmem:[%s194 + $0x1a8] sm:$0xff] %v301
          %v303 = vld [vmem:[%s193 + $0x1b0] sm:$0xff]
          %304 = vst [vmem:[%s194 + $0x1b0] sm:$0xff] %v303
          %v305 = vld [vmem:[%s193 + $0x1b8] sm:$0xff]
          %306 = vst [vmem:[%s194 + $0x1b8] sm:$0xff] %v305
          %v307 = vld [vmem:[%s193 + $0x1c0] sm:$0xff]
          %308 = vst [vmem:[%s194 + $0x1c0] sm:$0xff] %v307
          %v309 = vld [vmem:[%s193 + $0x1c8] sm:$0xff]
          %310 = vst [vmem:[%s194 + $0x1c8] sm:$0xff] %v309
          %v311 = vld [vmem:[%s193 + $0x1d0] sm:$0xff]
          %312 = vst [vmem:[%s194 + $0x1d0] sm:$0xff] %v311
          %v313 = vld [vmem:[%s193 + $0x1d8] sm:$0xff]
          %314 = vst [vmem:[%s194 + $0x1d8] sm:$0xff] %v313
          %v315 = vld [vmem:[%s193 + $0x1e0] sm:$0xff]
          %316 = vst [vmem:[%s194 + $0x1e0] sm:$0xff] %v315
          %v317 = vld [vmem:[%s193 + $0x1e8] sm:$0xff]
          %318 = vst [vmem:[%s194 + $0x1e8] sm:$0xff] %v317
          %v319 = vld [vmem:[%s193 + $0x1f0] sm:$0xff]
          %320 = vst [vmem:[%s194 + $0x1f0] sm:$0xff] %v319
          %v321 = vld [vmem:[%s193 + $0x1f8] sm:$0xff]
          %322 = vst [vmem:[%s194 + $0x1f8] sm:$0xff] %v321
          %v323 = vld [vmem:[%s193 + $0x200] sm:$0xff]
          %324 = vst [vmem:[%s194 + $0x200] sm:$0xff] %v323
          %v325 = vld [vmem:[%s193 + $0x208] sm:$0xff]
          %326 = vst [vmem:[%s194 + $0x208] sm:$0xff] %v325
          %v327 = vld [vmem:[%s193 + $0x210] sm:$0xff]
          %328 = vst [vmem:[%s194 + $0x210] sm:$0xff] %v327
          %v329 = vld [vmem:[%s193 + $0x218] sm:$0xff]
          %330 = vst [vmem:[%s194 + $0x218] sm:$0xff] %v329
          %v331 = vld [vmem:[%s193 + $0x220] sm:$0xff]
          %332 = vst [vmem:[%s194 + $0x220] sm:$0xff] %v331
          %v333 = vld [vmem:[%s193 + $0x228] sm:$0xff]
          %334 = vst [vmem:[%s194 + $0x228] sm:$0xff] %v333
          %v335 = vld [vmem:[%s193 + $0x230] sm:$0xff]
          %336 = vst [vmem:[%s194 + $0x230] sm:$0xff] %v335
          %v337 = vld [vmem:[%s193 + $0x238] sm:$0xff]
          %338 = vst [vmem:[%s194 + $0x238] sm:$0xff] %v337
          %v339 = vld [vmem:[%s193 + $0x240] sm:$0xff]
          %340 = vst [vmem:[%s194 + $0x240] sm:$0xff] %v339
          %v341 = vld [vmem:[%s193 + $0x248] sm:$0xff]
          %342 = vst [vmem:[%s194 + $0x248] sm:$0xff] %v341
          %v343 = vld [vmem:[%s193 + $0x250] sm:$0xff]
          %344 = vst [vmem:[%s194 + $0x250] sm:$0xff] %v343
          %v345 = vld [vmem:[%s193 + $0x258] sm:$0xff]
          %346 = vst [vmem:[%s194 + $0x258] sm:$0xff] %v345
          %v347 = vld [vmem:[%s193 + $0x260] sm:$0xff]
          %348 = vst [vmem:[%s194 + $0x260] sm:$0xff] %v347
          %v349 = vld [vmem:[%s193 + $0x268] sm:$0xff]
          %350 = vst [vmem:[%s194 + $0x268] sm:$0xff] %v349
          %v351 = vld [vmem:[%s193 + $0x270] sm:$0xff]
          %352 = vst [vmem:[%s194 + $0x270] sm:$0xff] %v351
          %v353 = vld [vmem:[%s193 + $0x278] sm:$0xff]
          %354 = vst [vmem:[%s194 + $0x278] sm:$0xff] %v353
          %v355 = vld [vmem:[%s193 + $0x280] sm:$0xff]
          %356 = vst [vmem:[%s194 + $0x280] sm:$0xff] %v355
          %v357 = vld [vmem:[%s193 + $0x288] sm:$0xff]
          %358 = vst [vmem:[%s194 + $0x288] sm:$0xff] %v357
          %v359 = vld [vmem:[%s193 + $0x290] sm:$0xff]
          %360 = vst [vmem:[%s194 + $0x290] sm:$0xff] %v359
          %v361 = vld [vmem:[%s193 + $0x298] sm:$0xff]
          %362 = vst [vmem:[%s194 + $0x298] sm:$0xff] %v361
          %v363 = vld [vmem:[%s193 + $0x2a0] sm:$0xff]
          %364 = vst [vmem:[%s194 + $0x2a0] sm:$0xff] %v363
          %v365 = vld [vmem:[%s193 + $0x2a8] sm:$0xff]
          %366 = vst [vmem:[%s194 + $0x2a8] sm:$0xff] %v365
          %v367 = vld [vmem:[%s193 + $0x2b0] sm:$0xff]
          %368 = vst [vmem:[%s194 + $0x2b0] sm:$0xff] %v367
          %v369 = vld [vmem:[%s193 + $0x2b8] sm:$0xff]
          %370 = vst [vmem:[%s194 + $0x2b8] sm:$0xff] %v369
          %v371 = vld [vmem:[%s193 + $0x2c0] sm:$0xff]
          %372 = vst [vmem:[%s194 + $0x2c0] sm:$0xff] %v371
          %v373 = vld [vmem:[%s193 + $0x2c8] sm:$0xff]
          %374 = vst [vmem:[%s194 + $0x2c8] sm:$0xff] %v373
          %v375 = vld [vmem:[%s193 + $0x2d0] sm:$0xff]
          %376 = vst [vmem:[%s194 + $0x2d0] sm:$0xff] %v375
          %v377 = vld [vmem:[%s193 + $0x2d8] sm:$0xff]
          %378 = vst [vmem:[%s194 + $0x2d8] sm:$0xff] %v377
          %v379 = vld [vmem:[%s193 + $0x2e0] sm:$0xff]
          %380 = vst [vmem:[%s194 + $0x2e0] sm:$0xff] %v379
          %v381 = vld [vmem:[%s193 + $0x2e8] sm:$0xff]
          %382 = vst [vmem:[%s194 + $0x2e8] sm:$0xff] %v381
          %v383 = vld [vmem:[%s193 + $0x2f0] sm:$0xff]
          %384 = vst [vmem:[%s194 + $0x2f0] sm:$0xff] %v383
          %v385 = vld [vmem:[%s193 + $0x2f8] sm:$0xff]
          %386 = vst [vmem:[%s194 + $0x2f8] sm:$0xff] %v385
          %v387 = vld [vmem:[%s193 + $0x300] sm:$0xff]
          %388 = vst [vmem:[%s194 + $0x300] sm:$0xff] %v387
          %v389 = vld [vmem:[%s193 + $0x308] sm:$0xff]
          %390 = vst [vmem:[%s194 + $0x308] sm:$0xff] %v389
          %v391 = vld [vmem:[%s193 + $0x310] sm:$0xff]
          %392 = vst [vmem:[%s194 + $0x310] sm:$0xff] %v391
          %v393 = vld [vmem:[%s193 + $0x318] sm:$0xff]
          %394 = vst [vmem:[%s194 + $0x318] sm:$0xff] %v393
          %v395 = vld [vmem:[%s193 + $0x320] sm:$0xff]
          %396 = vst [vmem:[%s194 + $0x320] sm:$0xff] %v395
          %v397 = vld [vmem:[%s193 + $0x328] sm:$0xff]
          %398 = vst [vmem:[%s194 + $0x328] sm:$0xff] %v397
          %v399 = vld [vmem:[%s193 + $0x330] sm:$0xff]
          %400 = vst [vmem:[%s194 + $0x330] sm:$0xff] %v399
          %v401 = vld [vmem:[%s193 + $0x338] sm:$0xff]
          %402 = vst [vmem:[%s194 + $0x338] sm:$0xff] %v401
          %v403 = vld [vmem:[%s193 + $0x340] sm:$0xff]
          %404 = vst [vmem:[%s194 + $0x340] sm:$0xff] %v403
          %v405 = vld [vmem:[%s193 + $0x348] sm:$0xff]
          %406 = vst [vmem:[%s194 + $0x348] sm:$0xff] %v405
          %v407 = vld [vmem:[%s193 + $0x350] sm:$0xff]
          %408 = vst [vmem:[%s194 + $0x350] sm:$0xff] %v407
          %v409 = vld [vmem:[%s193 + $0x358] sm:$0xff]
          %410 = vst [vmem:[%s194 + $0x358] sm:$0xff] %v409
          %v411 = vld [vmem:[%s193 + $0x360] sm:$0xff]
          %412 = vst [vmem:[%s194 + $0x360] sm:$0xff] %v411
          %v413 = vld [vmem:[%s193 + $0x368] sm:$0xff]
          %414 = vst [vmem:[%s194 + $0x368] sm:$0xff] %v413
          %v415 = vld [vmem:[%s193 + $0x370] sm:$0xff]
          %416 = vst [vmem:[%s194 + $0x370] sm:$0xff] %v415
          %v417 = vld [vmem:[%s193 + $0x378] sm:$0xff]
          %418 = vst [vmem:[%s194 + $0x378] sm:$0xff] %v417
          %v419 = vld [vmem:[%s193 + $0x380] sm:$0xff]
          %420 = vst [vmem:[%s194 + $0x380] sm:$0xff] %v419
          %v421 = vld [vmem:[%s193 + $0x388] sm:$0xff]
          %422 = vst [vmem:[%s194 + $0x388] sm:$0xff] %v421
          %v423 = vld [vmem:[%s193 + $0x390] sm:$0xff]
          %424 = vst [vmem:[%s194 + $0x390] sm:$0xff] %v423
          %v425 = vld [vmem:[%s193 + $0x398] sm:$0xff]
          %426 = vst [vmem:[%s194 + $0x398] sm:$0xff] %v425
          %v427 = vld [vmem:[%s193 + $0x3a0] sm:$0xff]
          %428 = vst [vmem:[%s194 + $0x3a0] sm:$0xff] %v427
          %v429 = vld [vmem:[%s193 + $0x3a8] sm:$0xff]
          %430 = vst [vmem:[%s194 + $0x3a8] sm:$0xff] %v429
          %v431 = vld [vmem:[%s193 + $0x3b0] sm:$0xff]
          %432 = vst [vmem:[%s194 + $0x3b0] sm:$0xff] %v431
          %v433 = vld [vmem:[%s193 + $0x3b8] sm:$0xff]
          %434 = vst [vmem:[%s194 + $0x3b8] sm:$0xff] %v433
          %v435 = vld [vmem:[%s193 + $0x3c0] sm:$0xff]
          %436 = vst [vmem:[%s194 + $0x3c0] sm:$0xff] %v435
          %v437 = vld [vmem:[%s193 + $0x3c8] sm:$0xff]
          %438 = vst [vmem:[%s194 + $0x3c8] sm:$0xff] %v437
          %v439 = vld [vmem:[%s193 + $0x3d0] sm:$0xff]
          %440 = vst [vmem:[%s194 + $0x3d0] sm:$0xff] %v439
          %v441 = vld [vmem:[%s193 + $0x3d8] sm:$0xff]
          %442 = vst [vmem:[%s194 + $0x3d8] sm:$0xff] %v441
          %v443 = vld [vmem:[%s193 + $0x3e0] sm:$0xff]
          %444 = vst [vmem:[%s194 + $0x3e0] sm:$0xff] %v443
          %v445 = vld [vmem:[%s193 + $0x3e8] sm:$0xff]
          %446 = vst [vmem:[%s194 + $0x3e8] sm:$0xff] %v445
          %v447 = vld [vmem:[%s193 + $0x3f0] sm:$0xff]
          %448 = vst [vmem:[%s194 + $0x3f0] sm:$0xff] %v447
          %v449 = vld [vmem:[%s193 + $0x3f8] sm:$0xff]
          %450 = vst [vmem:[%s194 + $0x3f8] sm:$0xff] %v449
        $region79: #{gru_encoder_forward.1} parent=73 // loop_footer
          %s192 = sadd.s32 1, %s188
        $region80: #{gru_encoder_forward.1} parent=73 // loop_footer_branch
          %187 = sbr.rel target = $region76
        $region81: #{gru_encoder_forward.1} parent=73 // loop_exit
          _
      $region74: #{gru_encoder_forward.1} parent=58 // pred_fallthru
        _
      %p451 = pneg %p183
      // Predicated region
      $region82: #{gru_encoder_forward.1} parent=58 // pred_check
        _
      $region83: #{gru_encoder_forward.1} parent=58 // pred_check_branch
        %453 = sbr.rel (%p183) target = $region85
      $region84: #{gru_encoder_forward.1} parent=58 // pred_region
        %s454 = sand.u32 1024, 7
      $region85: #{gru_encoder_forward.1} parent=58 // pred_fallthru
        _
    $region59: #{gru_encoder_forward.1} parent=20 // pred_fallthru
      _
    // Predicated region
    $region60: #{gru_encoder_forward.1} parent=20 // pred_check
      %p168 = pneg %p164
    $region61: #{gru_encoder_forward.1} parent=20 // pred_check_branch
      %170 = sbr.rel (%p168) target = $region63
    $region62: #{gru_encoder_forward.1} parent=20 // pred_region
      %s171 = sshllo.u32 0, 1024
      loop: start=0, step=1, limit=1
      $region64: #{gru_encoder_forward.1} parent=62 // loop_pre_header
        _
      $region65: #{gru_encoder_forward.1} parent=62 // loop_header
        %s173 = sphi 0, %s177
        %p174 = scmp.ge.s32.totalorder %s173, 1
        %s178 = sphi %s2, %s2
        %s179 = sphi [#allocation5], [#allocation5]
      $region66: #{gru_encoder_forward.1} parent=62 // loop_header_branch
        %176 = sbr.rel (%p174) target = $region70
      $region67: #{gru_encoder_forward.1} parent=62 // loop_body
        %v180 = vld [vmem:[%s178] sm:%s171]
        %181 = vst [vmem:[%s179] sm:%s171] %v180
      $region68: #{gru_encoder_forward.1} parent=62 // loop_footer
        %s177 = sadd.s32 1, %s173
      $region69: #{gru_encoder_forward.1} parent=62 // loop_footer_branch
        %172 = sbr.rel target = $region65
      $region70: #{gru_encoder_forward.1} parent=62 // loop_exit
        _
    $region63: #{gru_encoder_forward.1} parent=20 // pred_fallthru
      _
    // Predicated region
    $region86: #{gru_encoder_forward.1} parent=20 // pred_check
      _
    $region87: #{gru_encoder_forward.1} parent=20 // pred_check_branch
      %457 = sbr.rel (0) target = $region89
    $region88: #{gru_encoder_forward.1} parent=20 // pred_region
      %458 = vsyncadd %s162, 16384
    $region89: #{gru_encoder_forward.1} parent=20 // pred_fallthru
      _
    %s459 = scalar_lea.sflag [#allocation7], 2
    %p461 = scmp.lt.u32.totalorder 128, 8
    %p462 = pneg %p461
    // Predicated region
    $region90: #{gru_encoder_forward.1} parent=20 // pred_check
      _
    $region91: #{gru_encoder_forward.1} parent=20 // pred_check_branch
      %464 = sbr.rel (%p461) target = $region93
    $region92: #{gru_encoder_forward.1} parent=20 // pred_region
      %s479 = sand.u32 128, 7
      %p480 = scmp.eq.s32.totalorder %s479, 0
      // Predicated region
      $region105: #{gru_encoder_forward.1} parent=92 // pred_check
        %p481 = pneg %p480
      $region106: #{gru_encoder_forward.1} parent=92 // pred_check_branch
        %483 = sbr.rel (%p481) target = $region108
      $region107: #{gru_encoder_forward.1} parent=92 // pred_region
        loop: start=0, step=1, limit=1
        $region109: #{gru_encoder_forward.1} parent=107 // loop_pre_header
          _
        $region110: #{gru_encoder_forward.1} parent=107 // loop_header
          %s485 = sphi 0, %s489
          %p486 = scmp.ge.s32.totalorder %s485, 1
          %s490 = sphi %s3, %s3
          %s491 = sphi [#allocation6], [#allocation6]
        $region111: #{gru_encoder_forward.1} parent=107 // loop_header_branch
          %488 = sbr.rel (%p486) target = $region115
        $region112: #{gru_encoder_forward.1} parent=107 // loop_body
          %v492 = vld [vmem:[%s490] sm:$0xff]
          %493 = vst [vmem:[%s491] sm:$0xff] %v492
          %v494 = vld [vmem:[%s490 + $0x8] sm:$0xff]
          %495 = vst [vmem:[%s491 + $0x8] sm:$0xff] %v494
          %v496 = vld [vmem:[%s490 + $0x10] sm:$0xff]
          %497 = vst [vmem:[%s491 + $0x10] sm:$0xff] %v496
          %v498 = vld [vmem:[%s490 + $0x18] sm:$0xff]
          %499 = vst [vmem:[%s491 + $0x18] sm:$0xff] %v498
          %v500 = vld [vmem:[%s490 + $0x20] sm:$0xff]
          %501 = vst [vmem:[%s491 + $0x20] sm:$0xff] %v500
          %v502 = vld [vmem:[%s490 + $0x28] sm:$0xff]
          %503 = vst [vmem:[%s491 + $0x28] sm:$0xff] %v502
          %v504 = vld [vmem:[%s490 + $0x30] sm:$0xff]
          %505 = vst [vmem:[%s491 + $0x30] sm:$0xff] %v504
          %v506 = vld [vmem:[%s490 + $0x38] sm:$0xff]
          %507 = vst [vmem:[%s491 + $0x38] sm:$0xff] %v506
          %v508 = vld [vmem:[%s490 + $0x40] sm:$0xff]
          %509 = vst [vmem:[%s491 + $0x40] sm:$0xff] %v508
          %v510 = vld [vmem:[%s490 + $0x48] sm:$0xff]
          %511 = vst [vmem:[%s491 + $0x48] sm:$0xff] %v510
          %v512 = vld [vmem:[%s490 + $0x50] sm:$0xff]
          %513 = vst [vmem:[%s491 + $0x50] sm:$0xff] %v512
          %v514 = vld [vmem:[%s490 + $0x58] sm:$0xff]
          %515 = vst [vmem:[%s491 + $0x58] sm:$0xff] %v514
          %v516 = vld [vmem:[%s490 + $0x60] sm:$0xff]
          %517 = vst [vmem:[%s491 + $0x60] sm:$0xff] %v516
          %v518 = vld [vmem:[%s490 + $0x68] sm:$0xff]
          %519 = vst [vmem:[%s491 + $0x68] sm:$0xff] %v518
          %v520 = vld [vmem:[%s490 + $0x70] sm:$0xff]
          %521 = vst [vmem:[%s491 + $0x70] sm:$0xff] %v520
          %v522 = vld [vmem:[%s490 + $0x78] sm:$0xff]
          %523 = vst [vmem:[%s491 + $0x78] sm:$0xff] %v522
        $region113: #{gru_encoder_forward.1} parent=107 // loop_footer
          %s489 = sadd.s32 1, %s485
        $region114: #{gru_encoder_forward.1} parent=107 // loop_footer_branch
          %484 = sbr.rel target = $region110
        $region115: #{gru_encoder_forward.1} parent=107 // loop_exit
          _
      $region108: #{gru_encoder_forward.1} parent=92 // pred_fallthru
        _
      %p524 = pneg %p480
      // Predicated region
      $region116: #{gru_encoder_forward.1} parent=92 // pred_check
        _
      $region117: #{gru_encoder_forward.1} parent=92 // pred_check_branch
        %526 = sbr.rel (%p480) target = $region119
      $region118: #{gru_encoder_forward.1} parent=92 // pred_region
        %s527 = sand.u32 128, 7
      $region119: #{gru_encoder_forward.1} parent=92 // pred_fallthru
        _
    $region93: #{gru_encoder_forward.1} parent=20 // pred_fallthru
      _
    // Predicated region
    $region94: #{gru_encoder_forward.1} parent=20 // pred_check
      %p465 = pneg %p461
    $region95: #{gru_encoder_forward.1} parent=20 // pred_check_branch
      %467 = sbr.rel (%p465) target = $region97
    $region96: #{gru_encoder_forward.1} parent=20 // pred_region
      %s468 = sshllo.u32 0, 128
      loop: start=0, step=1, limit=1
      $region98: #{gru_encoder_forward.1} parent=96 // loop_pre_header
        _
      $region99: #{gru_encoder_forward.1} parent=96 // loop_header
        %s470 = sphi 0, %s474
        %p471 = scmp.ge.s32.totalorder %s470, 1
        %s475 = sphi %s3, %s3
        %s476 = sphi [#allocation6], [#allocation6]
      $region100: #{gru_encoder_forward.1} parent=96 // loop_header_branch
        %473 = sbr.rel (%p471) target = $region104
      $region101: #{gru_encoder_forward.1} parent=96 // loop_body
        %v477 = vld [vmem:[%s475] sm:%s468]
        %478 = vst [vmem:[%s476] sm:%s468] %v477
      $region102: #{gru_encoder_forward.1} parent=96 // loop_footer
        %s474 = sadd.s32 1, %s470
      $region103: #{gru_encoder_forward.1} parent=96 // loop_footer_branch
        %469 = sbr.rel target = $region99
      $region104: #{gru_encoder_forward.1} parent=96 // loop_exit
        _
    $region97: #{gru_encoder_forward.1} parent=20 // pred_fallthru
      _
    // Predicated region
    $region120: #{gru_encoder_forward.1} parent=20 // pred_check
      _
    $region121: #{gru_encoder_forward.1} parent=20 // pred_check_branch
      %530 = sbr.rel (0) target = $region123
    $region122: #{gru_encoder_forward.1} parent=20 // pred_region
      %531 = vsyncadd %s459, 2048
    $region123: #{gru_encoder_forward.1} parent=20 // pred_fallthru
      _
    %s532 = smul.u32 8, 16
    %s533 = smul.u32 %s532, 3
    %s534 = sshll.u32 %s533, 4
    %535 = dma.done [#allocation7], %s534
    %s536 = smul.u32 8, 32
    %s537 = smul.u32 %s536, 4
    %s538 = sshll.u32 %s537, 4
    %539 = dma.done %s162, %s538
  $region21: #{gru_encoder_forward.1} parent=0 // pred_fallthru
    _
  %v540 = vld [vmem:[%s4] sm:$0x1]
  %v542 = vlaneseq
  %v543 = vshrl.u32 %v542, 7
  %v544 = vsub.s32 0, %v543
  %v545 = vrot.slane %v540, %v544
  %v547 = vld [vmem:[%s5] sm:$0xf]
  %v549 = vlaneseq
  %v550 = vshrl.u32 %v549, 7
  %v551 = vsub.s32 0, %v550
  %v552 = vrot.slane %v547, %v551
  %v553 = vlaneseq
  %v554 = vshrl.u32 %v553, 7
  %v555 = vsub.s32 1, %v554
  %v556 = vrot.slane %v547, %v555
  %v557 = vlaneseq
  %v558 = vshrl.u32 %v557, 7
  %v559 = vsub.s32 2, %v558
  %v560 = vrot.slane %v547, %v559
  %v561 = vlaneseq
  %v562 = vshrl.u32 %v561, 7
  %v563 = vsub.s32 3, %v562
  %v564 = vrot.slane %v547, %v563
  %v569 = vld [vmem:[#allocation2] sm:$0xff]
  %v570 = vld [vmem:[#allocation3] sm:$0xff]
  %v571 = vld [vmem:[%s0] sm:$0xff]
  %v572 = vld [vmem:[%s0 + $0x8] sm:$0xff]
  %v573 = vld [vmem:[%s0 + $0x10] sm:$0xff]
  %v574 = vld [vmem:[#allocation4] sm:$0xff]
  %v575 = vld [vmem:[#allocation4 + $0x8] sm:$0xff]
  %v576 = vld [vmem:[#allocation4 + $0x10] sm:$0xff]
  %v577 = vld [vmem:[#allocation4 + $0x18] sm:$0xff]
  %v578 = vld [vmem:[#allocation4 + $0x20] sm:$0xff]
  %v579 = vld [vmem:[#allocation4 + $0x28] sm:$0xff]
  %v580 = vld [vmem:[#allocation4 + $0x30] sm:$0xff]
  %v581 = vld [vmem:[#allocation4 + $0x38] sm:$0xff]
  %v582 = vld [vmem:[#allocation4 + $0x40] sm:$0xff]
  %v583 = vld [vmem:[#allocation4 + $0x48] sm:$0xff]
  %v584 = vld [vmem:[#allocation4 + $0x50] sm:$0xff]
  %v585 = vld [vmem:[#allocation4 + $0x58] sm:$0xff]
  %v586 = vld [vmem:[#allocation4 + $0x60] sm:$0xff]
  %v587 = vld [vmem:[#allocation4 + $0x68] sm:$0xff]
  %v588 = vld [vmem:[#allocation4 + $0x70] sm:$0xff]
  %v589 = vld [vmem:[#allocation4 + $0x78] sm:$0xff]
  %v590 = vld [vmem:[#allocation4 + $0x80] sm:$0xff]
  %v591 = vld [vmem:[#allocation4 + $0x88] sm:$0xff]
  %v592 = vld [vmem:[#allocation4 + $0x90] sm:$0xff]
  %v593 = vld [vmem:[#allocation4 + $0x98] sm:$0xff]
  %v594 = vld [vmem:[#allocation4 + $0xa0] sm:$0xff]
  %v595 = vld [vmem:[#allocation4 + $0xa8] sm:$0xff]
  %v596 = vld [vmem:[#allocation4 + $0xb0] sm:$0xff]
  %v597 = vld [vmem:[#allocation4 + $0xb8] sm:$0xff]
  %v598 = vld [vmem:[#allocation4 + $0xc0] sm:$0xff]
  %v599 = vld [vmem:[#allocation4 + $0xc8] sm:$0xff]
  %v600 = vld [vmem:[#allocation4 + $0xd0] sm:$0xff]
  %v601 = vld [vmem:[#allocation4 + $0xd8] sm:$0xff]
  %v602 = vld [vmem:[#allocation4 + $0xe0] sm:$0xff]
  %v603 = vld [vmem:[#allocation4 + $0xe8] sm:$0xff]
  %v604 = vld [vmem:[#allocation4 + $0xf0] sm:$0xff]
  %v605 = vld [vmem:[#allocation4 + $0xf8] sm:$0xff]
  %v606 = vld [vmem:[#allocation4 + $0x100] sm:$0xff]
  %v607 = vld [vmem:[#allocation4 + $0x108] sm:$0xff]
  %v608 = vld [vmem:[#allocation4 + $0x110] sm:$0xff]
  %v609 = vld [vmem:[#allocation4 + $0x118] sm:$0xff]
  %v610 = vld [vmem:[#allocation4 + $0x120] sm:$0xff]
  %v611 = vld [vmem:[#allocation4 + $0x128] sm:$0xff]
  %v612 = vld [vmem:[#allocation4 + $0x130] sm:$0xff]
  %v613 = vld [vmem:[#allocation4 + $0x138] sm:$0xff]
  %v614 = vld [vmem:[#allocation4 + $0x140] sm:$0xff]
  %v615 = vld [vmem:[#allocation4 + $0x148] sm:$0xff]
  %v616 = vld [vmem:[#allocation4 + $0x150] sm:$0xff]
  %v617 = vld [vmem:[#allocation4 + $0x158] sm:$0xff]
  %v618 = vld [vmem:[#allocation4 + $0x160] sm:$0xff]
  %v619 = vld [vmem:[#allocation4 + $0x168] sm:$0xff]
  %v620 = vld [vmem:[#allocation4 + $0x170] sm:$0xff]
  %v621 = vld [vmem:[#allocation4 + $0x178] sm:$0xff]
  %622 = vmatprep.subr.mxu0 %v575
  %623 = vmatpush1.msra.mxu0 %v574
  %624 = vmatprep.subr.mxu0 %v578
  %625 = vmatpush1.msra.mxu0 %v577
  %626 = vmatprep.subr.mxu0 %v581
  %627 = vmatpush1.msra.mxu0 %v580
  %628 = vmatprep.subr.mxu0 %v584
  %629 = vmatpush1.msra.mxu0 %v583
  %630 = vmatprep.subr.mxu0 %v587
  %631 = vmatpush1.msra.mxu0 %v586
  %632 = vmatprep.subr.mxu0 %v590
  %633 = vmatpush1.msra.mxu0 %v589
  %634 = vmatprep.subr.mxu0 %v593
  %635 = vmatpush1.msra.mxu0 %v592
  %636 = vmatprep.subr.mxu0 %v596
  %637 = vmatpush1.msra.mxu0 %v595
  %638 = vmatprep.subr.mxu0 %v599
  %639 = vmatpush1.msra.mxu0 %v598
  %640 = vmatprep.subr.mxu0 %v602
  %641 = vmatpush1.msra.mxu0 %v601
  %642 = vmatprep.subr.mxu0 %v605
  %643 = vmatpush1.msra.mxu0 %v604
  %644 = vmatprep.subr.mxu0 %v608
  %645 = vmatpush1.msra.mxu0 %v607
  %646 = vmatprep.subr.mxu0 %v611
  %647 = vmatpush1.msra.mxu0 %v610
  %648 = vmatprep.subr.mxu0 %v614
  %649 = vmatpush1.msra.mxu0 %v613
  %650 = vmatprep.subr.mxu0 %v617
  %651 = vmatpush1.msra.mxu0 %v616
  %652 = vmatprep.subr.mxu0 %v620
  %653 = vmatpush1.msra.mxu0 %v619
  %654 = vmatprep.subr.mxu0 0.0
  %655 = vmatpush1.msra.mxu0 0.0
  %656 = vmatprep.subr.mxu0 0.0
  %657 = vmatpush1.msra.mxu0 0.0
  %658 = vmatprep.subr.mxu0 0.0
  %659 = vmatpush1.msra.mxu0 0.0
  %660 = vmatprep.subr.mxu0 0.0
  %661 = vmatpush1.msra.mxu0 0.0
  %662 = vmatprep.subr.mxu0 0.0
  %663 = vmatpush1.msra.mxu0 0.0
  %664 = vmatprep.subr.mxu0 0.0
  %665 = vmatpush1.msra.mxu0 0.0
  %666 = vmatprep.subr.mxu0 0.0
  %667 = vmatpush1.msra.mxu0 0.0
  %668 = vmatprep.subr.mxu0 0.0
  %669 = vmatpush1.msra.mxu0 0.0
  %670 = vmatprep.subr.mxu0 0.0
  %671 = vmatpush1.msra.mxu0 0.0
  %672 = vmatprep.subr.mxu0 0.0
  %673 = vmatpush1.msra.mxu0 0.0
  %674 = vmatprep.subr.mxu0 0.0
  %675 = vmatpush1.msra.mxu0 0.0
  %676 = vmatprep.subr.mxu0 0.0
  %677 = vmatpush1.msra.mxu0 0.0
  %678 = vmatprep.subr.mxu0 0.0
  %679 = vmatpush1.msra.mxu0 0.0
  %680 = vmatprep.subr.mxu0 0.0
  %681 = vmatpush1.msra.mxu0 0.0
  %682 = vmatprep.subr.mxu0 0.0
  %683 = vmatpush1.msra.mxu0 0.0
  %684 = vmatprep.subr.mxu0 0.0
  %685 = vmatpush1.msra.mxu0 0.0
  %686 = vmatprep.mubr.f32.mxu0 0.0
  %687 = vmatmul.mubr.f32.gmra.mrb[0].mxu0 %v569
  %v688 = vpop.f32.mrb[0].mxu0
  %v689 = vadd.f32 0.0, %v688
  %v690 = vpop.f32.mrb[0].mxu0
  %v691 = vadd.f32 0.0, %v690
  %692 = vdwg.mxu0
  %693 = vmatprep.subr.mxu0 0.0
  %694 = vmatpush1.msra.mxu0 %v576
  %695 = vmatprep.subr.mxu0 0.0
  %696 = vmatpush1.msra.mxu0 %v579
  %697 = vmatprep.subr.mxu0 0.0
  %698 = vmatpush1.msra.mxu0 %v582
  %699 = vmatprep.subr.mxu0 0.0
  %700 = vmatpush1.msra.mxu0 %v585
  %701 = vmatprep.subr.mxu0 0.0
  %702 = vmatpush1.msra.mxu0 %v588
  %703 = vmatprep.subr.mxu0 0.0
  %704 = vmatpush1.msra.mxu0 %v591
  %705 = vmatprep.subr.mxu0 0.0
  %706 = vmatpush1.msra.mxu0 %v594
  %707 = vmatprep.subr.mxu0 0.0
  %708 = vmatpush1.msra.mxu0 %v597
  %709 = vmatprep.subr.mxu0 0.0
  %710 = vmatpush1.msra.mxu0 %v600
  %711 = vmatprep.subr.mxu0 0.0
  %712 = vmatpush1.msra.mxu0 %v603
  %713 = vmatprep.subr.mxu0 0.0
  %714 = vmatpush1.msra.mxu0 %v606
  %715 = vmatprep.subr.mxu0 0.0
  %716 = vmatpush1.msra.mxu0 %v609
  %717 = vmatprep.subr.mxu0 0.0
  %718 = vmatpush1.msra.mxu0 %v612
  %719 = vmatprep.subr.mxu0 0.0
  %720 = vmatpush1.msra.mxu0 %v615
  %721 = vmatprep.subr.mxu0 0.0
  %722 = vmatpush1.msra.mxu0 %v618
  %723 = vmatprep.subr.mxu0 0.0
  %724 = vmatpush1.msra.mxu0 %v621
  %725 = vmatprep.subr.mxu0 0.0
  %726 = vmatpush1.msra.mxu0 0.0
  %727 = vmatprep.subr.mxu0 0.0
  %728 = vmatpush1.msra.mxu0 0.0
  %729 = vmatprep.subr.mxu0 0.0
  %730 = vmatpush1.msra.mxu0 0.0
  %731 = vmatprep.subr.mxu0 0.0
  %732 = vmatpush1.msra.mxu0 0.0
  %733 = vmatprep.subr.mxu0 0.0
  %734 = vmatpush1.msra.mxu0 0.0
  %735 = vmatprep.subr.mxu0 0.0
  %736 = vmatpush1.msra.mxu0 0.0
  %737 = vmatprep.subr.mxu0 0.0
  %738 = vmatpush1.msra.mxu0 0.0
  %739 = vmatprep.subr.mxu0 0.0
  %740 = vmatpush1.msra.mxu0 0.0
  %741 = vmatprep.subr.mxu0 0.0
  %742 = vmatpush1.msra.mxu0 0.0
  %743 = vmatprep.subr.mxu0 0.0
  %744 = vmatpush1.msra.mxu0 0.0
  %745 = vmatprep.subr.mxu0 0.0
  %746 = vmatpush1.msra.mxu0 0.0
  %747 = vmatprep.subr.mxu0 0.0
  %748 = vmatpush1.msra.mxu0 0.0
  %749 = vmatprep.subr.mxu0 0.0
  %750 = vmatpush1.msra.mxu0 0.0
  %751 = vmatprep.subr.mxu0 0.0
  %752 = vmatpush1.msra.mxu0 0.0
  %753 = vmatprep.subr.mxu0 0.0
  %754 = vmatpush1.msra.mxu0 0.0
  %755 = vmatprep.subr.mxu0 0.0
  %756 = vmatpush1.msra.mxu0 0.0
  %757 = vmatprep.mubr.f32.mxu0 0.0
  %758 = vmatmul.mubr.f32.gmra.mrb[0].mxu0 %v569
  %v759 = vpop.f32.mrb[0].mxu0
  %v760 = vadd.f32 0.0, %v759
  %v761 = vpop.f32.mrb[0].mxu0
  %762 = vdwg.mxu0
  %v763 = vadd.f32 %v571, %v689
  %v764 = vxor.u32 %v763, 2147483648
  %v765 = vmul.f32 %v764, 1.442695
  %v766 = vpow.pop %v765
  %v767 = vadd.f32 %v766, 1.0
  %v768 = vrcp.pop %v767
  %v769 = vmul.f32 1.0, %v768
  %v770 = vadd.f32 %v572, %v691
  %v771 = vxor.u32 %v770, 2147483648
  %v772 = vmul.f32 %v771, 1.442695
  %v773 = vpow.pop %v772
  %v774 = vadd.f32 %v773, 1.0
  %v775 = vrcp.pop %v774
  %v776 = vmul.f32 1.0, %v775
  %v777 = vadd.f32 %v760, %v545
  %v778 = vmul.f32 %v769, %v777
  %v779 = vadd.f32 %v573, %v778
  %v780 = vtanh.pop %v779
  %v781 = vsub.f32 1.0, %v776
  %v782 = vmul.f32 %v781, %v780
  %v783 = vmul.f32 %v776, %v569
  %v784 = vadd.f32 %v782, %v783
  %v785 = vld [vmem:[#allocation5] sm:$0xff]
  %v786 = vld [vmem:[#allocation5 + $0x8] sm:$0xff]
  %v787 = vld [vmem:[#allocation5 + $0x10] sm:$0xff]
  %v788 = vld [vmem:[#allocation5 + $0x18] sm:$0xff]
  %v789 = vld [vmem:[#allocation5 + $0x20] sm:$0xff]
  %v790 = vld [vmem:[#allocation5 + $0x28] sm:$0xff]
  %v791 = vld [vmem:[#allocation5 + $0x30] sm:$0xff]
  %v792 = vld [vmem:[#allocation5 + $0x38] sm:$0xff]
  %v793 = vld [vmem:[#allocation5 + $0x40] sm:$0xff]
  %v794 = vld [vmem:[#allocation5 + $0x48] sm:$0xff]
  %v795 = vld [vmem:[#allocation5 + $0x50] sm:$0xff]
  %v796 = vld [vmem:[#allocation5 + $0x58] sm:$0xff]
  %v797 = vld [vmem:[#allocation5 + $0x60] sm:$0xff]
  %v798 = vld [vmem:[#allocation5 + $0x68] sm:$0xff]
  %v799 = vld [vmem:[#allocation5 + $0x70] sm:$0xff]
  %v800 = vld [vmem:[#allocation5 + $0x78] sm:$0xff]
  %v801 = vld [vmem:[#allocation5 + $0x80] sm:$0xff]
  %v802 = vld [vmem:[#allocation5 + $0x88] sm:$0xff]
  %v803 = vld [vmem:[#allocation5 + $0x90] sm:$0xff]
  %v804 = vld [vmem:[#allocation5 + $0x98] sm:$0xff]
  %v805 = vld [vmem:[#allocation5 + $0xa0] sm:$0xff]
  %v806 = vld [vmem:[#allocation5 + $0xa8] sm:$0xff]
  %v807 = vld [vmem:[#allocation5 + $0xb0] sm:$0xff]
  %v808 = vld [vmem:[#allocation5 + $0xb8] sm:$0xff]
  %v809 = vld [vmem:[#allocation5 + $0xc0] sm:$0xff]
  %v810 = vld [vmem:[#allocation5 + $0xc8] sm:$0xff]
  %v811 = vld [vmem:[#allocation5 + $0xd0] sm:$0xff]
  %v812 = vld [vmem:[#allocation5 + $0xd8] sm:$0xff]
  %v813 = vld [vmem:[#allocation5 + $0xe0] sm:$0xff]
  %v814 = vld [vmem:[#allocation5 + $0xe8] sm:$0xff]
  %v815 = vld [vmem:[#allocation5 + $0xf0] sm:$0xff]
  %v816 = vld [vmem:[#allocation5 + $0xf8] sm:$0xff]
  %v817 = vld [vmem:[#allocation5 + $0x100] sm:$0xff]
  %v818 = vld [vmem:[#allocation5 + $0x108] sm:$0xff]
  %v819 = vld [vmem:[#allocation5 + $0x110] sm:$0xff]
  %v820 = vld [vmem:[#allocation5 + $0x118] sm:$0xff]
  %v821 = vld [vmem:[#allocation5 + $0x120] sm:$0xff]
  %v822 = vld [vmem:[#allocation5 + $0x128] sm:$0xff]
  %v823 = vld [vmem:[#allocation5 + $0x130] sm:$0xff]
  %v824 = vld [vmem:[#allocation5 + $0x138] sm:$0xff]
  %v825 = vld [vmem:[#allocation5 + $0x140] sm:$0xff]
  %v826 = vld [vmem:[#allocation5 + $0x148] sm:$0xff]
  %v827 = vld [vmem:[#allocation5 + $0x150] sm:$0xff]
  %v828 = vld [vmem:[#allocation5 + $0x158] sm:$0xff]
  %v829 = vld [vmem:[#allocation5 + $0x160] sm:$0xff]
  %v830 = vld [vmem:[#allocation5 + $0x168] sm:$0xff]
  %v831 = vld [vmem:[#allocation5 + $0x170] sm:$0xff]
  %v832 = vld [vmem:[#allocation5 + $0x178] sm:$0xff]
  %v833 = vld [vmem:[#allocation5 + $0x180] sm:$0xff]
  %v834 = vld [vmem:[#allocation5 + $0x188] sm:$0xff]
  %v835 = vld [vmem:[#allocation5 + $0x190] sm:$0xff]
  %v836 = vld [vmem:[#allocation5 + $0x198] sm:$0xff]
  %v837 = vld [vmem:[#allocation5 + $0x1a0] sm:$0xff]
  %v838 = vld [vmem:[#allocation5 + $0x1a8] sm:$0xff]
  %v839 = vld [vmem:[#allocation5 + $0x1b0] sm:$0xff]
  %v840 = vld [vmem:[#allocation5 + $0x1b8] sm:$0xff]
  %v841 = vld [vmem:[#allocation5 + $0x1c0] sm:$0xff]
  %v842 = vld [vmem:[#allocation5 + $0x1c8] sm:$0xff]
  %v843 = vld [vmem:[#allocation5 + $0x1d0] sm:$0xff]
  %v844 = vld [vmem:[#allocation5 + $0x1d8] sm:$0xff]
  %v845 = vld [vmem:[#allocation5 + $0x1e0] sm:$0xff]
  %v846 = vld [vmem:[#allocation5 + $0x1e8] sm:$0xff]
  %v847 = vld [vmem:[#allocation5 + $0x1f0] sm:$0xff]
  %v848 = vld [vmem:[#allocation5 + $0x1f8] sm:$0xff]
  %v849 = vld [vmem:[#allocation5 + $0x200] sm:$0xff]
  %v850 = vld [vmem:[#allocation5 + $0x208] sm:$0xff]
  %v851 = vld [vmem:[#allocation5 + $0x210] sm:$0xff]
  %v852 = vld [vmem:[#allocation5 + $0x218] sm:$0xff]
  %v853 = vld [vmem:[#allocation5 + $0x220] sm:$0xff]
  %v854 = vld [vmem:[#allocation5 + $0x228] sm:$0xff]
  %v855 = vld [vmem:[#allocation5 + $0x230] sm:$0xff]
  %v856 = vld [vmem:[#allocation5 + $0x238] sm:$0xff]
  %v857 = vld [vmem:[#allocation5 + $0x240] sm:$0xff]
  %v858 = vld [vmem:[#allocation5 + $0x248] sm:$0xff]
  %v859 = vld [vmem:[#allocation5 + $0x250] sm:$0xff]
  %v860 = vld [vmem:[#allocation5 + $0x258] sm:$0xff]
  %v861 = vld [vmem:[#allocation5 + $0x260] sm:$0xff]
  %v862 = vld [vmem:[#allocation5 + $0x268] sm:$0xff]
  %v863 = vld [vmem:[#allocation5 + $0x270] sm:$0xff]
  %v864 = vld [vmem:[#allocation5 + $0x278] sm:$0xff]
  %v865 = vld [vmem:[#allocation5 + $0x280] sm:$0xff]
  %v866 = vld [vmem:[#allocation5 + $0x288] sm:$0xff]
  %v867 = vld [vmem:[#allocation5 + $0x290] sm:$0xff]
  %v868 = vld [vmem:[#allocation5 + $0x298] sm:$0xff]
  %v869 = vld [vmem:[#allocation5 + $0x2a0] sm:$0xff]
  %v870 = vld [vmem:[#allocation5 + $0x2a8] sm:$0xff]
  %v871 = vld [vmem:[#allocation5 + $0x2b0] sm:$0xff]
  %v872 = vld [vmem:[#allocation5 + $0x2b8] sm:$0xff]
  %v873 = vld [vmem:[#allocation5 + $0x2c0] sm:$0xff]
  %v874 = vld [vmem:[#allocation5 + $0x2c8] sm:$0xff]
  %v875 = vld [vmem:[#allocation5 + $0x2d0] sm:$0xff]
  %v876 = vld [vmem:[#allocation5 + $0x2d8] sm:$0xff]
  %v877 = vld [vmem:[#allocation5 + $0x2e0] sm:$0xff]
  %v878 = vld [vmem:[#allocation5 + $0x2e8] sm:$0xff]
  %v879 = vld [vmem:[#allocation5 + $0x2f0] sm:$0xff]
  %v880 = vld [vmem:[#allocation5 + $0x2f8] sm:$0xff]
  %v881 = vld [vmem:[#allocation5 + $0x300] sm:$0xff]
  %v882 = vld [vmem:[#allocation5 + $0x308] sm:$0xff]
  %v883 = vld [vmem:[#allocation5 + $0x310] sm:$0xff]
  %v884 = vld [vmem:[#allocation5 + $0x318] sm:$0xff]
  %v885 = vld [vmem:[#allocation5 + $0x320] sm:$0xff]
  %v886 = vld [vmem:[#allocation5 + $0x328] sm:$0xff]
  %v887 = vld [vmem:[#allocation5 + $0x330] sm:$0xff]
  %v888 = vld [vmem:[#allocation5 + $0x338] sm:$0xff]
  %v889 = vld [vmem:[#allocation5 + $0x340] sm:$0xff]
  %v890 = vld [vmem:[#allocation5 + $0x348] sm:$0xff]
  %v891 = vld [vmem:[#allocation5 + $0x350] sm:$0xff]
  %v892 = vld [vmem:[#allocation5 + $0x358] sm:$0xff]
  %v893 = vld [vmem:[#allocation5 + $0x360] sm:$0xff]
  %v894 = vld [vmem:[#allocation5 + $0x368] sm:$0xff]
  %v895 = vld [vmem:[#allocation5 + $0x370] sm:$0xff]
  %v896 = vld [vmem:[#allocation5 + $0x378] sm:$0xff]
  %v897 = vld [vmem:[#allocation5 + $0x380] sm:$0xff]
  %v898 = vld [vmem:[#allocation5 + $0x388] sm:$0xff]
  %v899 = vld [vmem:[#allocation5 + $0x390] sm:$0xff]
  %v900 = vld [vmem:[#allocation5 + $0x398] sm:$0xff]
  %v901 = vld [vmem:[#allocation5 + $0x3a0] sm:$0xff]
  %v902 = vld [vmem:[#allocation5 + $0x3a8] sm:$0xff]
  %v903 = vld [vmem:[#allocation5 + $0x3b0] sm:$0xff]
  %v904 = vld [vmem:[#allocation5 + $0x3b8] sm:$0xff]
  %v905 = vld [vmem:[#allocation5 + $0x3c0] sm:$0xff]
  %v906 = vld [vmem:[#allocation5 + $0x3c8] sm:$0xff]
  %v907 = vld [vmem:[#allocation5 + $0x3d0] sm:$0xff]
  %v908 = vld [vmem:[#allocation5 + $0x3d8] sm:$0xff]
  %v909 = vld [vmem:[#allocation5 + $0x3e0] sm:$0xff]
  %v910 = vld [vmem:[#allocation5 + $0x3e8] sm:$0xff]
  %v911 = vld [vmem:[#allocation5 + $0x3f0] sm:$0xff]
  %v912 = vld [vmem:[#allocation5 + $0x3f8] sm:$0xff]
  %913 = vmatprep.subr.mxu0 %v786
  %914 = vmatpush1.msra.mxu0 %v785
  %915 = vmatprep.subr.mxu0 %v790
  %916 = vmatpush1.msra.mxu0 %v789
  %917 = vmatprep.subr.mxu0 %v794
  %918 = vmatpush1.msra.mxu0 %v793
  %919 = vmatprep.subr.mxu0 %v798
  %920 = vmatpush1.msra.mxu0 %v797
  %921 = vmatprep.subr.mxu0 %v802
  %922 = vmatpush1.msra.mxu0 %v801
  %923 = vmatprep.subr.mxu0 %v806
  %924 = vmatpush1.msra.mxu0 %v805
  %925 = vmatprep.subr.mxu0 %v810
  %926 = vmatpush1.msra.mxu0 %v809
  %927 = vmatprep.subr.mxu0 %v814
  %928 = vmatpush1.msra.mxu0 %v813
  %929 = vmatprep.subr.mxu0 %v818
  %930 = vmatpush1.msra.mxu0 %v817
  %931 = vmatprep.subr.mxu0 %v822
  %932 = vmatpush1.msra.mxu0 %v821
  %933 = vmatprep.subr.mxu0 %v826
  %934 = vmatpush1.msra.mxu0 %v825
  %935 = vmatprep.subr.mxu0 %v830
  %936 = vmatpush1.msra.mxu0 %v829
  %937 = vmatprep.subr.mxu0 %v834
  %938 = vmatpush1.msra.mxu0 %v833
  %939 = vmatprep.subr.mxu0 %v838
  %940 = vmatpush1.msra.mxu0 %v837
  %941 = vmatprep.subr.mxu0 %v842
  %942 = vmatpush1.msra.mxu0 %v841
  %943 = vmatprep.subr.mxu0 %v846
  %944 = vmatpush1.msra.mxu0 %v845
  %945 = vmatprep.subr.mxu0 %v850
  %946 = vmatpush1.msra.mxu0 %v849
  %947 = vmatprep.subr.mxu0 %v854
  %948 = vmatpush1.msra.mxu0 %v853
  %949 = vmatprep.subr.mxu0 %v858
  %950 = vmatpush1.msra.mxu0 %v857
  %951 = vmatprep.subr.mxu0 %v862
  %952 = vmatpush1.msra.mxu0 %v861
  %953 = vmatprep.subr.mxu0 %v866
  %954 = vmatpush1.msra.mxu0 %v865
  %955 = vmatprep.subr.mxu0 %v870
  %956 = vmatpush1.msra.mxu0 %v869
  %957 = vmatprep.subr.mxu0 %v874
  %958 = vmatpush1.msra.mxu0 %v873
  %959 = vmatprep.subr.mxu0 %v878
  %960 = vmatpush1.msra.mxu0 %v877
  %961 = vmatprep.subr.mxu0 %v882
  %962 = vmatpush1.msra.mxu0 %v881
  %963 = vmatprep.subr.mxu0 %v886
  %964 = vmatpush1.msra.mxu0 %v885
  %965 = vmatprep.subr.mxu0 %v890
  %966 = vmatpush1.msra.mxu0 %v889
  %967 = vmatprep.subr.mxu0 %v894
  %968 = vmatpush1.msra.mxu0 %v893
  %969 = vmatprep.subr.mxu0 %v898
  %970 = vmatpush1.msra.mxu0 %v897
  %971 = vmatprep.subr.mxu0 %v902
  %972 = vmatpush1.msra.mxu0 %v901
  %973 = vmatprep.subr.mxu0 %v906
  %974 = vmatpush1.msra.mxu0 %v905
  %975 = vmatprep.subr.mxu0 %v910
  %976 = vmatpush1.msra.mxu0 %v909
  %977 = vmatprep.mubr.f32.mxu0 %v570
  %978 = vmatmul.mubr.f32.gmra.mrb[0].mxu0 %v784
  %v979 = vpop.f32.mrb[0].mxu0
  %v980 = vadd.f32 %v552, %v979
  %v981 = vpop.f32.mrb[0].mxu0
  %v982 = vadd.f32 %v556, %v981
  %983 = vdwg.mxu0
  %984 = vmatprep.subr.mxu0 %v788
  %985 = vmatpush1.msra.mxu0 %v787
  %986 = vmatprep.subr.mxu0 %v792
  %987 = vmatpush1.msra.mxu0 %v791
  %988 = vmatprep.subr.mxu0 %v796
  %989 = vmatpush1.msra.mxu0 %v795
  %990 = vmatprep.subr.mxu0 %v800
  %991 = vmatpush1.msra.mxu0 %v799
  %992 = vmatprep.subr.mxu0 %v804
  %993 = vmatpush1.msra.mxu0 %v803
  %994 = vmatprep.subr.mxu0 %v808
  %995 = vmatpush1.msra.mxu0 %v807
  %996 = vmatprep.subr.mxu0 %v812
  %997 = vmatpush1.msra.mxu0 %v811
  %998 = vmatprep.subr.mxu0 %v816
  %999 = vmatpush1.msra.mxu0 %v815
  %1000 = vmatprep.subr.mxu0 %v820
  %1001 = vmatpush1.msra.mxu0 %v819
  %1002 = vmatprep.subr.mxu0 %v824
  %1003 = vmatpush1.msra.mxu0 %v823
  %1004 = vmatprep.subr.mxu0 %v828
  %1005 = vmatpush1.msra.mxu0 %v827
  %1006 = vmatprep.subr.mxu0 %v832
  %1007 = vmatpush1.msra.mxu0 %v831
  %1008 = vmatprep.subr.mxu0 %v836
  %1009 = vmatpush1.msra.mxu0 %v835
  %1010 = vmatprep.subr.mxu0 %v840
  %1011 = vmatpush1.msra.mxu0 %v839
  %1012 = vmatprep.subr.mxu0 %v844
  %1013 = vmatpush1.msra.mxu0 %v843
  %1014 = vmatprep.subr.mxu0 %v848
  %1015 = vmatpush1.msra.mxu0 %v847
  %1016 = vmatprep.subr.mxu0 %v852
  %1017 = vmatpush1.msra.mxu0 %v851
  %1018 = vmatprep.subr.mxu0 %v856
  %1019 = vmatpush1.msra.mxu0 %v855
  %1020 = vmatprep.subr.mxu0 %v860
  %1021 = vmatpush1.msra.mxu0 %v859
  %1022 = vmatprep.subr.mxu0 %v864
  %1023 = vmatpush1.msra.mxu0 %v863
  %1024 = vmatprep.subr.mxu0 %v868
  %1025 = vmatpush1.msra.mxu0 %v867
  %1026 = vmatprep.subr.mxu0 %v872
  %1027 = vmatpush1.msra.mxu0 %v871
  %1028 = vmatprep.subr.mxu0 %v876
  %1029 = vmatpush1.msra.mxu0 %v875
  %1030 = vmatprep.subr.mxu0 %v880
  %1031 = vmatpush1.msra.mxu0 %v879
  %1032 = vmatprep.subr.mxu0 %v884
  %1033 = vmatpush1.msra.mxu0 %v883
  %1034 = vmatprep.subr.mxu0 %v888
  %1035 = vmatpush1.msra.mxu0 %v887
  %1036 = vmatprep.subr.mxu0 %v892
  %1037 = vmatpush1.msra.mxu0 %v891
  %1038 = vmatprep.subr.mxu0 %v896
  %1039 = vmatpush1.msra.mxu0 %v895
  %1040 = vmatprep.subr.mxu0 %v900
  %1041 = vmatpush1.msra.mxu0 %v899
  %1042 = vmatprep.subr.mxu0 %v904
  %1043 = vmatpush1.msra.mxu0 %v903
  %1044 = vmatprep.subr.mxu0 %v908
  %1045 = vmatpush1.msra.mxu0 %v907
  %1046 = vmatprep.subr.mxu0 %v912
  %1047 = vmatpush1.msra.mxu0 %v911
  %1048 = vmatprep.mubr.f32.mxu0 %v570
  %1049 = vmatmul.mubr.f32.gmra.mrb[0].mxu0 %v784
  %v1050 = vpop.f32.mrb[0].mxu0
  %v1051 = vadd.f32 %v560, %v1050
  %v1052 = vpop.f32.mrb[0].mxu0
  %v1053 = vadd.f32 %v564, %v1052
  %1054 = vdwg.mxu0
  %v1055 = vxor.u32 %v980, 2147483648
  %v1056 = vmul.f32 %v1055, 1.442695
  %v1057 = vpow.pop %v1056
  %v1058 = vadd.f32 %v1057, 1.0
  %v1059 = vrcp.pop %v1058
  %v1060 = vmul.f32 1.0, %v1059
  %v1061 = vxor.u32 %v982, 2147483648
  %v1062 = vmul.f32 %v1061, 1.442695
  %v1063 = vpow.pop %v1062
  %v1064 = vadd.f32 %v1063, 1.0
  %v1065 = vrcp.pop %v1064
  %v1066 = vmul.f32 1.0, %v1065
  %v1067 = vmul.f32 %v1060, %v1053
  %v1068 = vadd.f32 %v1051, %v1067
  %v1069 = vtanh.pop %v1068
  %v1070 = vsub.f32 1.0, %v1066
  %v1071 = vmul.f32 %v1070, %v1069
  %v1072 = vmul.f32 %v1066, %v570
  %v1073 = vadd.f32 %v1071, %v1072
  %s1074 = scalar_lea.vmem %s0, 24
  %v1075 = vld [vmem:[%s1074] sm:$0xff]
  %v1076 = vld [vmem:[%s1074 + $0x8] sm:$0xff]
  %v1077 = vld [vmem:[%s1074 + $0x10] sm:$0xff]
  %1078 = vmatprep.subr.mxu0 %v575
  %1079 = vmatpush1.msra.mxu0 %v574
  %1080 = vmatprep.subr.mxu0 %v578
  %1081 = vmatpush1.msra.mxu0 %v577
  %1082 = vmatprep.subr.mxu0 %v581
  %1083 = vmatpush1.msra.mxu0 %v580
  %1084 = vmatprep.subr.mxu0 %v584
  %1085 = vmatpush1.msra.mxu0 %v583
  %1086 = vmatprep.subr.mxu0 %v587
  %1087 = vmatpush1.msra.mxu0 %v586
  %1088 = vmatprep.subr.mxu0 %v590
  %1089 = vmatpush1.msra.mxu0 %v589
  %1090 = vmatprep.subr.mxu0 %v593
  %1091 = vmatpush1.msra.mxu0 %v592
  %1092 = vmatprep.subr.mxu0 %v596
  %1093 = vmatpush1.msra.mxu0 %v595
  %1094 = vmatprep.subr.mxu0 %v599
  %1095 = vmatpush1.msra.mxu0 %v598
  %1096 = vmatprep.subr.mxu0 %v602
  %1097 = vmatpush1.msra.mxu0 %v601
  %1098 = vmatprep.subr.mxu0 %v605
  %1099 = vmatpush1.msra.mxu0 %v604
  %1100 = vmatprep.subr.mxu0 %v608
  %1101 = vmatpush1.msra.mxu0 %v607
  %1102 = vmatprep.subr.mxu0 %v611
  %1103 = vmatpush1.msra.mxu0 %v610
  %1104 = vmatprep.subr.mxu0 %v614
  %1105 = vmatpush1.msra.mxu0 %v613
  %1106 = vmatprep.subr.mxu0 %v617
  %1107 = vmatpush1.msra.mxu0 %v616
  %1108 = vmatprep.subr.mxu0 %v620
  %1109 = vmatpush1.msra.mxu0 %v619
  %1110 = vmatprep.subr.mxu0 0.0
  %1111 = vmatpush1.msra.mxu0 0.0
  %1112 = vmatprep.subr.mxu0 0.0
  %1113 = vmatpush1.msra.mxu0 0.0
  %1114 = vmatprep.subr.mxu0 0.0
  %1115 = vmatpush1.msra.mxu0 0.0
  %1116 = vmatprep.subr.mxu0 0.0
  %1117 = vmatpush1.msra.mxu0 0.0
  %1118 = vmatprep.subr.mxu0 0.0
  %1119 = vmatpush1.msra.mxu0 0.0
  %1120 = vmatprep.subr.mxu0 0.0
  %1121 = vmatpush1.msra.mxu0 0.0
  %1122 = vmatprep.subr.mxu0 0.0
  %1123 = vmatpush1.msra.mxu0 0.0
  %1124 = vmatprep.subr.mxu0 0.0
  %1125 = vmatpush1.msra.mxu0 0.0
  %1126 = vmatprep.subr.mxu0 0.0
  %1127 = vmatpush1.msra.mxu0 0.0
  %1128 = vmatprep.subr.mxu0 0.0
  %1129 = vmatpush1.msra.mxu0 0.0
  %1130 = vmatprep.subr.mxu0 0.0
  %1131 = vmatpush1.msra.mxu0 0.0
  %1132 = vmatprep.subr.mxu0 0.0
  %1133 = vmatpush1.msra.mxu0 0.0
  %1134 = vmatprep.subr.mxu0 0.0
  %1135 = vmatpush1.msra.mxu0 0.0
  %1136 = vmatprep.subr.mxu0 0.0
  %1137 = vmatpush1.msra.mxu0 0.0
  %1138 = vmatprep.subr.mxu0 0.0
  %1139 = vmatpush1.msra.mxu0 0.0
  %1140 = vmatprep.subr.mxu0 0.0
  %1141 = vmatpush1.msra.mxu0 0.0
  %1142 = vmatprep.mubr.f32.mxu0 0.0
  %1143 = vmatmul.mubr.f32.gmra.mrb[0].mxu0 %v784
  %v1144 = vpop.f32.mrb[0].mxu0
  %v1145 = vadd.f32 0.0, %v1144
  %v1146 = vpop.f32.mrb[0].mxu0
  %v1147 = vadd.f32 0.0, %v1146
  %1148 = vdwg.mxu0
  %1149 = vmatprep.subr.mxu0 0.0
  %1150 = vmatpush1.msra.mxu0 %v576
  %1151 = vmatprep.subr.mxu0 0.0
  %1152 = vmatpush1.msra.mxu0 %v579
  %1153 = vmatprep.subr.mxu0 0.0
  %1154 = vmatpush1.msra.mxu0 %v582
  %1155 = vmatprep.subr.mxu0 0.0
  %1156 = vmatpush1.msra.mxu0 %v585
  %1157 = vmatprep.subr.mxu0 0.0
  %1158 = vmatpush1.msra.mxu0 %v588
  %1159 = vmatprep.subr.mxu0 0.0
  %1160 = vmatpush1.msra.mxu0 %v591
  %1161 = vmatprep.subr.mxu0 0.0
  %1162 = vmatpush1.msra.mxu0 %v594
  %1163 = vmatprep.subr.mxu0 0.0
  %1164 = vmatpush1.msra.mxu0 %v597
  %1165 = vmatprep.subr.mxu0 0.0
  %1166 = vmatpush1.msra.mxu0 %v600
  %1167 = vmatprep.subr.mxu0 0.0
  %1168 = vmatpush1.msra.mxu0 %v603
  %1169 = vmatprep.subr.mxu0 0.0
  %1170 = vmatpush1.msra.mxu0 %v606
  %1171 = vmatprep.subr.mxu0 0.0
  %1172 = vmatpush1.msra.mxu0 %v609
  %1173 = vmatprep.subr.mxu0 0.0
  %1174 = vmatpush1.msra.mxu0 %v612
  %1175 = vmatprep.subr.mxu0 0.0
  %1176 = vmatpush1.msra.mxu0 %v615
  %1177 = vmatprep.subr.mxu0 0.0
  %1178 = vmatpush1.msra.mxu0 %v618
  %1179 = vmatprep.subr.mxu0 0.0
  %1180 = vmatpush1.msra.mxu0 %v621
  %1181 = vmatprep.subr.mxu0 0.0
  %1182 = vmatpush1.msra.mxu0 0.0
  %1183 = vmatprep.subr.mxu0 0.0
  %1184 = vmatpush1.msra.mxu0 0.0
  %1185 = vmatprep.subr.mxu0 0.0
  %1186 = vmatpush1.msra.mxu0 0.0
  %1187 = vmatprep.subr.mxu0 0.0
  %1188 = vmatpush1.msra.mxu0 0.0
  %1189 = vmatprep.subr.mxu0 0.0
  %1190 = vmatpush1.msra.mxu0 0.0
  %1191 = vmatprep.subr.mxu0 0.0
  %1192 = vmatpush1.msra.mxu0 0.0
  %1193 = vmatprep.subr.mxu0 0.0
  %1194 = vmatpush1.msra.mxu0 0.0
  %1195 = vmatprep.subr.mxu0 0.0
  %1196 = vmatpush1.msra.mxu0 0.0
  %1197 = vmatprep.subr.mxu0 0.0
  %1198 = vmatpush1.msra.mxu0 0.0
  %1199 = vmatprep.subr.mxu0 0.0
  %1200 = vmatpush1.msra.mxu0 0.0
  %1201 = vmatprep.subr.mxu0 0.0
  %1202 = vmatpush1.msra.mxu0 0.0
  %1203 = vmatprep.subr.mxu0 0.0
  %1204 = vmatpush1.msra.mxu0 0.0
  %1205 = vmatprep.subr.mxu0 0.0
  %1206 = vmatpush1.msra.mxu0 0.0
  %1207 = vmatprep.subr.mxu0 0.0
  %1208 = vmatpush1.msra.mxu0 0.0
  %1209 = vmatprep.subr.mxu0 0.0
  %1210 = vmatpush1.msra.mxu0 0.0
  %1211 = vmatprep.subr.mxu0 0.0
  %1212 = vmatpush1.msra.mxu0 0.0
  %1213 = vmatprep.mubr.f32.mxu0 0.0
  %1214 = vmatmul.mubr.f32.gmra.mrb[0].mxu0 %v784
  %v1215 = vpop.f32.mrb[0].mxu0
  %v1216 = vadd.f32 0.0, %v1215
  %v1217 = vpop.f32.mrb[0].mxu0
  %1218 = vdwg.mxu0
  %v1219 = vadd.f32 %v1075, %v1145
  %v1220 = vxor.u32 %v1219, 2147483648
  %v1221 = vmul.f32 %v1220, 1.442695
  %v1222 = vpow.pop %v1221
  %v1223 = vadd.f32 %v1222, 1.0
  %v1224 = vrcp.pop %v1223
  %v1225 = vmul.f32 1.0, %v1224
  %v1226 = vadd.f32 %v1076, %v1147
  %v1227 = vxor.u32 %v1226, 2147483648
  %v1228 = vmul.f32 %v1227, 1.442695
  %v1229 = vpow.pop %v1228
  %v1230 = vadd.f32 %v1229, 1.0
  %v1231 = vrcp.pop %v1230
  %v1232 = vmul.f32 1.0, %v1231
  %v1233 = vadd.f32 %v1216, %v545
  %v1234 = vmul.f32 %v1225, %v1233
  %v1235 = vadd.f32 %v1077, %v1234
  %v1236 = vtanh.pop %v1235
  %v1237 = vsub.f32 1.0, %v1232
  %v1238 = vmul.f32 %v1237, %v1236
  %v1239 = vmul.f32 %v1232, %v784
  %v1240 = vadd.f32 %v1238, %v1239
  %1241 = vmatprep.subr.mxu0 %v786
  %1242 = vmatpush1.msra.mxu0 %v785
  %1243 = vmatprep.subr.mxu0 %v790
  %1244 = vmatpush1.msra.mxu0 %v789
  %1245 = vmatprep.subr.mxu0 %v794
  %1246 = vmatpush1.msra.mxu0 %v793
  %1247 = vmatprep.subr.mxu0 %v798
  %1248 = vmatpush1.msra.mxu0 %v797
  %1249 = vmatprep.subr.mxu0 %v802
  %1250 = vmatpush1.msra.mxu0 %v801
  %1251 = vmatprep.subr.mxu0 %v806
  %1252 = vmatpush1.msra.mxu0 %v805
  %1253 = vmatprep.subr.mxu0 %v810
  %1254 = vmatpush1.msra.mxu0 %v809
  %1255 = vmatprep.subr.mxu0 %v814
  %1256 = vmatpush1.msra.mxu0 %v813
  %1257 = vmatprep.subr.mxu0 %v818
  %1258 = vmatpush1.msra.mxu0 %v817
  %1259 = vmatprep.subr.mxu0 %v822
  %1260 = vmatpush1.msra.mxu0 %v821
  %1261 = vmatprep.subr.mxu0 %v826
  %1262 = vmatpush1.msra.mxu0 %v825
  %1263 = vmatprep.subr.mxu0 %v830
  %1264 = vmatpush1.msra.mxu0 %v829
  %1265 = vmatprep.subr.mxu0 %v834
  %1266 = vmatpush1.msra.mxu0 %v833
  %1267 = vmatprep.subr.mxu0 %v838
  %1268 = vmatpush1.msra.mxu0 %v837
  %1269 = vmatprep.subr.mxu0 %v842
  %1270 = vmatpush1.msra.mxu0 %v841
  %1271 = vmatprep.subr.mxu0 %v846
  %1272 = vmatpush1.msra.mxu0 %v845
  %1273 = vmatprep.subr.mxu0 %v850
  %1274 = vmatpush1.msra.mxu0 %v849
  %1275 = vmatprep.subr.mxu0 %v854
  %1276 = vmatpush1.msra.mxu0 %v853
  %1277 = vmatprep.subr.mxu0 %v858
  %1278 = vmatpush1.msra.mxu0 %v857
  %1279 = vmatprep.subr.mxu0 %v862
  %1280 = vmatpush1.msra.mxu0 %v861
  %1281 = vmatprep.subr.mxu0 %v866
  %1282 = vmatpush1.msra.mxu0 %v865
  %1283 = vmatprep.subr.mxu0 %v870
  %1284 = vmatpush1.msra.mxu0 %v869
  %1285 = vmatprep.subr.mxu0 %v874
  %1286 = vmatpush1.msra.mxu0 %v873
  %1287 = vmatprep.subr.mxu0 %v878
  %1288 = vmatpush1.msra.mxu0 %v877
  %1289 = vmatprep.subr.mxu0 %v882
  %1290 = vmatpush1.msra.mxu0 %v881
  %1291 = vmatprep.subr.mxu0 %v886
  %1292 = vmatpush1.msra.mxu0 %v885
  %1293 = vmatprep.subr.mxu0 %v890
  %1294 = vmatpush1.msra.mxu0 %v889
  %1295 = vmatprep.subr.mxu0 %v894
  %1296 = vmatpush1.msra.mxu0 %v893
  %1297 = vmatprep.subr.mxu0 %v898
  %1298 = vmatpush1.msra.mxu0 %v897
  %1299 = vmatprep.subr.mxu0 %v902
  %1300 = vmatpush1.msra.mxu0 %v901
  %1301 = vmatprep.subr.mxu0 %v906
  %1302 = vmatpush1.msra.mxu0 %v905
  %1303 = vmatprep.subr.mxu0 %v910
  %1304 = vmatpush1.msra.mxu0 %v909
  %1305 = vmatprep.mubr.f32.mxu0 %v1073
  %1306 = vmatmul.mubr.f32.gmra.mrb[0].mxu0 %v1240
  %v1307 = vpop.f32.mrb[0].mxu0
  %v1308 = vadd.f32 %v552, %v1307
  %v1309 = vpop.f32.mrb[0].mxu0
  %v1310 = vadd.f32 %v556, %v1309
  %1311 = vdwg.mxu0
  %1312 = vmatprep.subr.mxu0 %v788
  %1313 = vmatpush1.msra.mxu0 %v787
  %1314 = vmatprep.subr.mxu0 %v792
  %1315 = vmatpush1.msra.mxu0 %v791
  %1316 = vmatprep.subr.mxu0 %v796
  %1317 = vmatpush1.msra.mxu0 %v795
  %1318 = vmatprep.subr.mxu0 %v800
  %1319 = vmatpush1.msra.mxu0 %v799
  %1320 = vmatprep.subr.mxu0 %v804
  %1321 = vmatpush1.msra.mxu0 %v803
  %1322 = vmatprep.subr.mxu0 %v808
  %1323 = vmatpush1.msra.mxu0 %v807
  %1324 = vmatprep.subr.mxu0 %v812
  %1325 = vmatpush1.msra.mxu0 %v811
  %1326 = vmatprep.subr.mxu0 %v816
  %1327 = vmatpush1.msra.mxu0 %v815
  %1328 = vmatprep.subr.mxu0 %v820
  %1329 = vmatpush1.msra.mxu0 %v819
  %1330 = vmatprep.subr.mxu0 %v824
  %1331 = vmatpush1.msra.mxu0 %v823
  %1332 = vmatprep.subr.mxu0 %v828
  %1333 = vmatpush1.msra.mxu0 %v827
  %1334 = vmatprep.subr.mxu0 %v832
  %1335 = vmatpush1.msra.mxu0 %v831
  %1336 = vmatprep.subr.mxu0 %v836
  %1337 = vmatpush1.msra.mxu0 %v835
  %1338 = vmatprep.subr.mxu0 %v840
  %1339 = vmatpush1.msra.mxu0 %v839
  %1340 = vmatprep.subr.mxu0 %v844
  %1341 = vmatpush1.msra.mxu0 %v843
  %1342 = vmatprep.subr.mxu0 %v848
  %1343 = vmatpush1.msra.mxu0 %v847
  %1344 = vmatprep.subr.mxu0 %v852
  %1345 = vmatpush1.msra.mxu0 %v851
  %1346 = vmatprep.subr.mxu0 %v856
  %1347 = vmatpush1.msra.mxu0 %v855
  %1348 = vmatprep.subr.mxu0 %v860
  %1349 = vmatpush1.msra.mxu0 %v859
  %1350 = vmatprep.subr.mxu0 %v864
  %1351 = vmatpush1.msra.mxu0 %v863
  %1352 = vmatprep.subr.mxu0 %v868
  %1353 = vmatpush1.msra.mxu0 %v867
  %1354 = vmatprep.subr.mxu0 %v872
  %1355 = vmatpush1.msra.mxu0 %v871
  %1356 = vmatprep.subr.mxu0 %v876
  %1357 = vmatpush1.msra.mxu0 %v875
  %1358 = vmatprep.subr.mxu0 %v880
  %1359 = vmatpush1.msra.mxu0 %v879
  %1360 = vmatprep.subr.mxu0 %v884
  %1361 = vmatpush1.msra.mxu0 %v883
  %1362 = vmatprep.subr.mxu0 %v888
  %1363 = vmatpush1.msra.mxu0 %v887
  %1364 = vmatprep.subr.mxu0 %v892
  %1365 = vmatpush1.msra.mxu0 %v891
  %1366 = vmatprep.subr.mxu0 %v896
  %1367 = vmatpush1.msra.mxu0 %v895
  %1368 = vmatprep.subr.mxu0 %v900
  %1369 = vmatpush1.msra.mxu0 %v899
  %1370 = vmatprep.subr.mxu0 %v904
  %1371 = vmatpush1.msra.mxu0 %v903
  %1372 = vmatprep.subr.mxu0 %v908
  %1373 = vmatpush1.msra.mxu0 %v907
  %1374 = vmatprep.subr.mxu0 %v912
  %1375 = vmatpush1.msra.mxu0 %v911
  %1376 = vmatprep.mubr.f32.mxu0 %v1073
  %1377 = vmatmul.mubr.f32.gmra.mrb[0].mxu0 %v1240
  %v1378 = vpop.f32.mrb[0].mxu0
  %v1379 = vadd.f32 %v560, %v1378
  %v1380 = vpop.f32.mrb[0].mxu0
  %v1381 = vadd.f32 %v564, %v1380
  %1382 = vdwg.mxu0
  %v1383 = vxor.u32 %v1308, 2147483648
  %v1384 = vmul.f32 %v1383, 1.442695
  %v1385 = vpow.pop %v1384
  %v1386 = vadd.f32 %v1385, 1.0
  %v1387 = vrcp.pop %v1386
  %v1388 = vmul.f32 1.0, %v1387
  %v1389 = vxor.u32 %v1310, 2147483648
  %v1390 = vmul.f32 %v1389, 1.442695
  %v1391 = vpow.pop %v1390
  %v1392 = vadd.f32 %v1391, 1.0
  %v1393 = vrcp.pop %v1392
  %v1394 = vmul.f32 1.0, %v1393
  %v1395 = vmul.f32 %v1388, %v1381
  %v1396 = vadd.f32 %v1379, %v1395
  %v1397 = vtanh.pop %v1396
  %v1398 = vsub.f32 1.0, %v1394
  %v1399 = vmul.f32 %v1398, %v1397
  %v1400 = vmul.f32 %v1394, %v1073
  %v1401 = vadd.f32 %v1399, %v1400
  %s1402 = scalar_lea.vmem %s0, 48
  %v1403 = vld [vmem:[%s1402] sm:$0xff]
  %v1404 = vld [vmem:[%s1402 + $0x8] sm:$0xff]
  %v1405 = vld [vmem:[%s1402 + $0x10] sm:$0xff]
  %1406 = vmatprep.subr.mxu0 %v575
  %1407 = vmatpush1.msra.mxu0 %v574
  %1408 = vmatprep.subr.mxu0 %v578
  %1409 = vmatpush1.msra.mxu0 %v577
  %1410 = vmatprep.subr.mxu0 %v581
  %1411 = vmatpush1.msra.mxu0 %v580
  %1412 = vmatprep.subr.mxu0 %v584
  %1413 = vmatpush1.msra.mxu0 %v583
  %1414 = vmatprep.subr.mxu0 %v587
  %1415 = vmatpush1.msra.mxu0 %v586
  %1416 = vmatprep.subr.mxu0 %v590
  %1417 = vmatpush1.msra.mxu0 %v589
  %1418 = vmatprep.subr.mxu0 %v593
  %1419 = vmatpush1.msra.mxu0 %v592
  %1420 = vmatprep.subr.mxu0 %v596
  %1421 = vmatpush1.msra.mxu0 %v595
  %1422 = vmatprep.subr.mxu0 %v599
  %1423 = vmatpush1.msra.mxu0 %v598
  %1424 = vmatprep.subr.mxu0 %v602
  %1425 = vmatpush1.msra.mxu0 %v601
  %1426 = vmatprep.subr.mxu0 %v605
  %1427 = vmatpush1.msra.mxu0 %v604
  %1428 = vmatprep.subr.mxu0 %v608
  %1429 = vmatpush1.msra.mxu0 %v607
  %1430 = vmatprep.subr.mxu0 %v611
  %1431 = vmatpush1.msra.mxu0 %v610
  %1432 = vmatprep.subr.mxu0 %v614
  %1433 = vmatpush1.msra.mxu0 %v613
  %1434 = vmatprep.subr.mxu0 %v617
  %1435 = vmatpush1.msra.mxu0 %v616
  %1436 = vmatprep.subr.mxu0 %v620
  %1437 = vmatpush1.msra.mxu0 %v619
  %1438 = vmatprep.subr.mxu0 0.0
  %1439 = vmatpush1.msra.mxu0 0.0
  %1440 = vmatprep.subr.mxu0 0.0
  %1441 = vmatpush1.msra.mxu0 0.0
  %1442 = vmatprep.subr.mxu0 0.0
  %1443 = vmatpush1.msra.mxu0 0.0
  %1444 = vmatprep.subr.mxu0 0.0
  %1445 = vmatpush1.msra.mxu0 0.0
  %1446 = vmatprep.subr.mxu0 0.0
  %1447 = vmatpush1.msra.mxu0 0.0
  %1448 = vmatprep.subr.mxu0 0.0
  %1449 = vmatpush1.msra.mxu0 0.0
  %1450 = vmatprep.subr.mxu0 0.0
  %1451 = vmatpush1.msra.mxu0 0.0
  %1452 = vmatprep.subr.mxu0 0.0
  %1453 = vmatpush1.msra.mxu0 0.0
  %1454 = vmatprep.subr.mxu0 0.0
  %1455 = vmatpush1.msra.mxu0 0.0
  %1456 = vmatprep.subr.mxu0 0.0
  %1457 = vmatpush1.msra.mxu0 0.0
  %1458 = vmatprep.subr.mxu0 0.0
  %1459 = vmatpush1.msra.mxu0 0.0
  %1460 = vmatprep.subr.mxu0 0.0
  %1461 = vmatpush1.msra.mxu0 0.0
  %1462 = vmatprep.subr.mxu0 0.0
  %1463 = vmatpush1.msra.mxu0 0.0
  %1464 = vmatprep.subr.mxu0 0.0
  %1465 = vmatpush1.msra.mxu0 0.0
  %1466 = vmatprep.subr.mxu0 0.0
  %1467 = vmatpush1.msra.mxu0 0.0
  %1468 = vmatprep.subr.mxu0 0.0
  %1469 = vmatpush1.msra.mxu0 0.0
  %1470 = vmatprep.mubr.f32.mxu0 0.0
  %1471 = vmatmul.mubr.f32.gmra.mrb[0].mxu0 %v1240
  %v1472 = vpop.f32.mrb[0].mxu0
  %v1473 = vadd.f32 0.0, %v1472
  %v1474 = vpop.f32.mrb[0].mxu0
  %v1475 = vadd.f32 0.0, %v1474
  %1476 = vdwg.mxu0
  %1477 = vmatprep.subr.mxu0 0.0
  %1478 = vmatpush1.msra.mxu0 %v576
  %1479 = vmatprep.subr.mxu0 0.0
  %1480 = vmatpush1.msra.mxu0 %v579
  %1481 = vmatprep.subr.mxu0 0.0
  %1482 = vmatpush1.msra.mxu0 %v582
  %1483 = vmatprep.subr.mxu0 0.0
  %1484 = vmatpush1.msra.mxu0 %v585
  %1485 = vmatprep.subr.mxu0 0.0
  %1486 = vmatpush1.msra.mxu0 %v588
  %1487 = vmatprep.subr.mxu0 0.0
  %1488 = vmatpush1.msra.mxu0 %v591
  %1489 = vmatprep.subr.mxu0 0.0
  %1490 = vmatpush1.msra.mxu0 %v594
  %1491 = vmatprep.subr.mxu0 0.0
  %1492 = vmatpush1.msra.mxu0 %v597
  %1493 = vmatprep.subr.mxu0 0.0
  %1494 = vmatpush1.msra.mxu0 %v600
  %1495 = vmatprep.subr.mxu0 0.0
  %1496 = vmatpush1.msra.mxu0 %v603
  %1497 = vmatprep.subr.mxu0 0.0
  %1498 = vmatpush1.msra.mxu0 %v606
  %1499 = vmatprep.subr.mxu0 0.0
  %1500 = vmatpush1.msra.mxu0 %v609
  %1501 = vmatprep.subr.mxu0 0.0
  %1502 = vmatpush1.msra.mxu0 %v612
  %1503 = vmatprep.subr.mxu0 0.0
  %1504 = vmatpush1.msra.mxu0 %v615
  %1505 = vmatprep.subr.mxu0 0.0
  %1506 = vmatpush1.msra.mxu0 %v618
  %1507 = vmatprep.subr.mxu0 0.0
  %1508 = vmatpush1.msra.mxu0 %v621
  %1509 = vmatprep.subr.mxu0 0.0
  %1510 = vmatpush1.msra.mxu0 0.0
  %1511 = vmatprep.subr.mxu0 0.0
  %1512 = vmatpush1.msra.mxu0 0.0
  %1513 = vmatprep.subr.mxu0 0.0
  %1514 = vmatpush1.msra.mxu0 0.0
  %1515 = vmatprep.subr.mxu0 0.0
  %1516 = vmatpush1.msra.mxu0 0.0
  %1517 = vmatprep.subr.mxu0 0.0
  %1518 = vmatpush1.msra.mxu0 0.0
  %1519 = vmatprep.subr.mxu0 0.0
  %1520 = vmatpush1.msra.mxu0 0.0
  %1521 = vmatprep.subr.mxu0 0.0
  %1522 = vmatpush1.msra.mxu0 0.0
  %1523 = vmatprep.subr.mxu0 0.0
  %1524 = vmatpush1.msra.mxu0 0.0
  %1525 = vmatprep.subr.mxu0 0.0
  %1526 = vmatpush1.msra.mxu0 0.0
  %1527 = vmatprep.subr.mxu0 0.0
  %1528 = vmatpush1.msra.mxu0 0.0
  %1529 = vmatprep.subr.mxu0 0.0
  %1530 = vmatpush1.msra.mxu0 0.0
  %1531 = vmatprep.subr.mxu0 0.0
  %1532 = vmatpush1.msra.mxu0 0.0
  %1533 = vmatprep.subr.mxu0 0.0
  %1534 = vmatpush1.msra.mxu0 0.0
  %1535 = vmatprep.subr.mxu0 0.0
  %1536 = vmatpush1.msra.mxu0 0.0
  %1537 = vmatprep.subr.mxu0 0.0
  %1538 = vmatpush1.msra.mxu0 0.0
  %1539 = vmatprep.subr.mxu0 0.0
  %1540 = vmatpush1.msra.mxu0 0.0
  %1541 = vmatprep.mubr.f32.mxu0 0.0
  %1542 = vmatmul.mubr.f32.gmra.mrb[0].mxu0 %v1240
  %v1543 = vpop.f32.mrb[0].mxu0
  %v1544 = vadd.f32 0.0, %v1543
  %v1545 = vpop.f32.mrb[0].mxu0
  %1546 = vdwg.mxu0
  %v1547 = vadd.f32 %v1403, %v1473
  %v1548 = vxor.u32 %v1547, 2147483648
  %v1549 = vmul.f32 %v1548, 1.442695
  %v1550 = vpow.pop %v1549
  %v1551 = vadd.f32 %v1550, 1.0
  %v1552 = vrcp.pop %v1551
  %v1553 = vmul.f32 1.0, %v1552
  %v1554 = vadd.f32 %v1404, %v1475
  %v1555 = vxor.u32 %v1554, 2147483648
  %v1556 = vmul.f32 %v1555, 1.442695
  %v1557 = vpow.pop %v1556
  %v1558 = vadd.f32 %v1557, 1.0
  %v1559 = vrcp.pop %v1558
  %v1560 = vmul.f32 1.0, %v1559
  %v1561 = vadd.f32 %v1544, %v545
  %v1562 = vmul.f32 %v1553, %v1561
  %v1563 = vadd.f32 %v1405, %v1562
  %v1564 = vtanh.pop %v1563
  %v1565 = vsub.f32 1.0, %v1560
  %v1566 = vmul.f32 %v1565, %v1564
  %v1567 = vmul.f32 %v1560, %v1240
  %v1568 = vadd.f32 %v1566, %v1567
  %1569 = vmatprep.subr.mxu0 %v786
  %1570 = vmatpush1.msra.mxu0 %v785
  %1571 = vmatprep.subr.mxu0 %v790
  %1572 = vmatpush1.msra.mxu0 %v789
  %1573 = vmatprep.subr.mxu0 %v794
  %1574 = vmatpush1.msra.mxu0 %v793
  %1575 = vmatprep.subr.mxu0 %v798
  %1576 = vmatpush1.msra.mxu0 %v797
  %1577 = vmatprep.subr.mxu0 %v802
  %1578 = vmatpush1.msra.mxu0 %v801
  %1579 = vmatprep.subr.mxu0 %v806
  %1580 = vmatpush1.msra.mxu0 %v805
  %1581 = vmatprep.subr.mxu0 %v810
  %1582 = vmatpush1.msra.mxu0 %v809
  %1583 = vmatprep.subr.mxu0 %v814
  %1584 = vmatpush1.msra.mxu0 %v813
  %1585 = vmatprep.subr.mxu0 %v818
  %1586 = vmatpush1.msra.mxu0 %v817
  %1587 = vmatprep.subr.mxu0 %v822
  %1588 = vmatpush1.msra.mxu0 %v821
  %1589 = vmatprep.subr.mxu0 %v826
  %1590 = vmatpush1.msra.mxu0 %v825
  %1591 = vmatprep.subr.mxu0 %v830
  %1592 = vmatpush1.msra.mxu0 %v829
  %1593 = vmatprep.subr.mxu0 %v834
  %1594 = vmatpush1.msra.mxu0 %v833
  %1595 = vmatprep.subr.mxu0 %v838
  %1596 = vmatpush1.msra.mxu0 %v837
  %1597 = vmatprep.subr.mxu0 %v842
  %1598 = vmatpush1.msra.mxu0 %v841
  %1599 = vmatprep.subr.mxu0 %v846
  %1600 = vmatpush1.msra.mxu0 %v845
  %1601 = vmatprep.subr.mxu0 %v850
  %1602 = vmatpush1.msra.mxu0 %v849
  %1603 = vmatprep.subr.mxu0 %v854
  %1604 = vmatpush1.msra.mxu0 %v853
  %1605 = vmatprep.subr.mxu0 %v858
  %1606 = vmatpush1.msra.mxu0 %v857
  %1607 = vmatprep.subr.mxu0 %v862
  %1608 = vmatpush1.msra.mxu0 %v861
  %1609 = vmatprep.subr.mxu0 %v866
  %1610 = vmatpush1.msra.mxu0 %v865
  %1611 = vmatprep.subr.mxu0 %v870
  %1612 = vmatpush1.msra.mxu0 %v869
  %1613 = vmatprep.subr.mxu0 %v874
  %1614 = vmatpush1.msra.mxu0 %v873
  %1615 = vmatprep.subr.mxu0 %v878
  %1616 = vmatpush1.msra.mxu0 %v877
  %1617 = vmatprep.subr.mxu0 %v882
  %1618 = vmatpush1.msra.mxu0 %v881
  %1619 = vmatprep.subr.mxu0 %v886
  %1620 = vmatpush1.msra.mxu0 %v885
  %1621 = vmatprep.subr.mxu0 %v890
  %1622 = vmatpush1.msra.mxu0 %v889
  %1623 = vmatprep.subr.mxu0 %v894
  %1624 = vmatpush1.msra.mxu0 %v893
  %1625 = vmatprep.subr.mxu0 %v898
  %1626 = vmatpush1.msra.mxu0 %v897
  %1627 = vmatprep.subr.mxu0 %v902
  %1628 = vmatpush1.msra.mxu0 %v901
  %1629 = vmatprep.subr.mxu0 %v906
  %1630 = vmatpush1.msra.mxu0 %v905
  %1631 = vmatprep.subr.mxu0 %v910
  %1632 = vmatpush1.msra.mxu0 %v909
  %1633 = vmatprep.mubr.f32.mxu0 %v1401
  %1634 = vmatmul.mubr.f32.gmra.mrb[0].mxu0 %v1568
  %v1635 = vpop.f32.mrb[0].mxu0
  %v1636 = vadd.f32 %v552, %v1635
  %v1637 = vpop.f32.mrb[0].mxu0
  %v1638 = vadd.f32 %v556, %v1637
  %1639 = vdwg.mxu0
  %1640 = vmatprep.subr.mxu0 %v788
  %1641 = vmatpush1.msra.mxu0 %v787
  %1642 = vmatprep.subr.mxu0 %v792
  %1643 = vmatpush1.msra.mxu0 %v791
  %1644 = vmatprep.subr.mxu0 %v796
  %1645 = vmatpush1.msra.mxu0 %v795
  %1646 = vmatprep.subr.mxu0 %v800
  %1647 = vmatpush1.msra.mxu0 %v799
  %1648 = vmatprep.subr.mxu0 %v804
  %1649 = vmatpush1.msra.mxu0 %v803
  %1650 = vmatprep.subr.mxu0 %v808
  %1651 = vmatpush1.msra.mxu0 %v807
  %1652 = vmatprep.subr.mxu0 %v812
  %1653 = vmatpush1.msra.mxu0 %v811
  %1654 = vmatprep.subr.mxu0 %v816
  %1655 = vmatpush1.msra.mxu0 %v815
  %1656 = vmatprep.subr.mxu0 %v820
  %1657 = vmatpush1.msra.mxu0 %v819
  %1658 = vmatprep.subr.mxu0 %v824
  %1659 = vmatpush1.msra.mxu0 %v823
  %1660 = vmatprep.subr.mxu0 %v828
  %1661 = vmatpush1.msra.mxu0 %v827
  %1662 = vmatprep.subr.mxu0 %v832
  %1663 = vmatpush1.msra.mxu0 %v831
  %1664 = vmatprep.subr.mxu0 %v836
  %1665 = vmatpush1.msra.mxu0 %v835
  %1666 = vmatprep.subr.mxu0 %v840
  %1667 = vmatpush1.msra.mxu0 %v839
  %1668 = vmatprep.subr.mxu0 %v844
  %1669 = vmatpush1.msra.mxu0 %v843
  %1670 = vmatprep.subr.mxu0 %v848
  %1671 = vmatpush1.msra.mxu0 %v847
  %1672 = vmatprep.subr.mxu0 %v852
  %1673 = vmatpush1.msra.mxu0 %v851
  %1674 = vmatprep.subr.mxu0 %v856
  %1675 = vmatpush1.msra.mxu0 %v855
  %1676 = vmatprep.subr.mxu0 %v860
  %1677 = vmatpush1.msra.mxu0 %v859
  %1678 = vmatprep.subr.mxu0 %v864
  %1679 = vmatpush1.msra.mxu0 %v863
  %1680 = vmatprep.subr.mxu0 %v868
  %1681 = vmatpush1.msra.mxu0 %v867
  %1682 = vmatprep.subr.mxu0 %v872
  %1683 = vmatpush1.msra.mxu0 %v871
  %1684 = vmatprep.subr.mxu0 %v876
  %1685 = vmatpush1.msra.mxu0 %v875
  %1686 = vmatprep.subr.mxu0 %v880
  %1687 = vmatpush1.msra.mxu0 %v879
  %1688 = vmatprep.subr.mxu0 %v884
  %1689 = vmatpush1.msra.mxu0 %v883
  %1690 = vmatprep.subr.mxu0 %v888
  %1691 = vmatpush1.msra.mxu0 %v887
  %1692 = vmatprep.subr.mxu0 %v892
  %1693 = vmatpush1.msra.mxu0 %v891
  %1694 = vmatprep.subr.mxu0 %v896
  %1695 = vmatpush1.msra.mxu0 %v895
  %1696 = vmatprep.subr.mxu0 %v900
  %1697 = vmatpush1.msra.mxu0 %v899
  %1698 = vmatprep.subr.mxu0 %v904
  %1699 = vmatpush1.msra.mxu0 %v903
  %1700 = vmatprep.subr.mxu0 %v908
  %1701 = vmatpush1.msra.mxu0 %v907
  %1702 = vmatprep.subr.mxu0 %v912
  %1703 = vmatpush1.msra.mxu0 %v911
  %1704 = vmatprep.mubr.f32.mxu0 %v1401
  %1705 = vmatmul.mubr.f32.gmra.mrb[0].mxu0 %v1568
  %v1706 = vpop.f32.mrb[0].mxu0
  %v1707 = vadd.f32 %v560, %v1706
  %v1708 = vpop.f32.mrb[0].mxu0
  %v1709 = vadd.f32 %v564, %v1708
  %1710 = vdwg.mxu0
  %v1711 = vxor.u32 %v1636, 2147483648
  %v1712 = vmul.f32 %v1711, 1.442695
  %v1713 = vpow.pop %v1712
  %v1714 = vadd.f32 %v1713, 1.0
  %v1715 = vrcp.pop %v1714
  %v1716 = vmul.f32 1.0, %v1715
  %v1717 = vxor.u32 %v1638, 2147483648
  %v1718 = vmul.f32 %v1717, 1.442695
  %v1719 = vpow.pop %v1718
  %v1720 = vadd.f32 %v1719, 1.0
  %v1721 = vrcp.pop %v1720
  %v1722 = vmul.f32 1.0, %v1721
  %v1723 = vmul.f32 %v1716, %v1709
  %v1724 = vadd.f32 %v1707, %v1723
  %v1725 = vtanh.pop %v1724
  %v1726 = vsub.f32 1.0, %v1722
  %v1727 = vmul.f32 %v1726, %v1725
  %v1728 = vmul.f32 %v1722, %v1401
  %v1729 = vadd.f32 %v1727, %v1728
  %s1730 = scalar_lea.vmem %s0, 72
  %v1731 = vld [vmem:[%s1730] sm:$0xff]
  %v1732 = vld [vmem:[%s1730 + $0x8] sm:$0xff]
  %v1733 = vld [vmem:[%s1730 + $0x10] sm:$0xff]
  %1734 = vmatprep.subr.mxu0 %v575
  %1735 = vmatpush1.msra.mxu0 %v574
  %1736 = vmatprep.subr.mxu0 %v578
  %1737 = vmatpush1.msra.mxu0 %v577
  %1738 = vmatprep.subr.mxu0 %v581
  %1739 = vmatpush1.msra.mxu0 %v580
  %1740 = vmatprep.subr.mxu0 %v584
  %1741 = vmatpush1.msra.mxu0 %v583
  %1742 = vmatprep.subr.mxu0 %v587
  %1743 = vmatpush1.msra.mxu0 %v586
  %1744 = vmatprep.subr.mxu0 %v590
  %1745 = vmatpush1.msra.mxu0 %v589
  %1746 = vmatprep.subr.mxu0 %v593
  %1747 = vmatpush1.msra.mxu0 %v592
  %1748 = vmatprep.subr.mxu0 %v596
  %1749 = vmatpush1.msra.mxu0 %v595
  %1750 = vmatprep.subr.mxu0 %v599
  %1751 = vmatpush1.msra.mxu0 %v598
  %1752 = vmatprep.subr.mxu0 %v602
  %1753 = vmatpush1.msra.mxu0 %v601
  %1754 = vmatprep.subr.mxu0 %v605
  %1755 = vmatpush1.msra.mxu0 %v604
  %1756 = vmatprep.subr.mxu0 %v608
  %1757 = vmatpush1.msra.mxu0 %v607
  %1758 = vmatprep.subr.mxu0 %v611
  %1759 = vmatpush1.msra.mxu0 %v610
  %1760 = vmatprep.subr.mxu0 %v614
  %1761 = vmatpush1.msra.mxu0 %v613
  %1762 = vmatprep.subr.mxu0 %v617
  %1763 = vmatpush1.msra.mxu0 %v616
  %1764 = vmatprep.subr.mxu0 %v620
  %1765 = vmatpush1.msra.mxu0 %v619
  %1766 = vmatprep.subr.mxu0 0.0
  %1767 = vmatpush1.msra.mxu0 0.0
  %1768 = vmatprep.subr.mxu0 0.0
  %1769 = vmatpush1.msra.mxu0 0.0
  %1770 = vmatprep.subr.mxu0 0.0
  %1771 = vmatpush1.msra.mxu0 0.0
  %1772 = vmatprep.subr.mxu0 0.0
  %1773 = vmatpush1.msra.mxu0 0.0
  %1774 = vmatprep.subr.mxu0 0.0
  %1775 = vmatpush1.msra.mxu0 0.0
  %1776 = vmatprep.subr.mxu0 0.0
  %1777 = vmatpush1.msra.mxu0 0.0
  %1778 = vmatprep.subr.mxu0 0.0
  %1779 = vmatpush1.msra.mxu0 0.0
  %1780 = vmatprep.subr.mxu0 0.0
  %1781 = vmatpush1.msra.mxu0 0.0
  %1782 = vmatprep.subr.mxu0 0.0
  %1783 = vmatpush1.msra.mxu0 0.0
  %1784 = vmatprep.subr.mxu0 0.0
  %1785 = vmatpush1.msra.mxu0 0.0
  %1786 = vmatprep.subr.mxu0 0.0
  %1787 = vmatpush1.msra.mxu0 0.0
  %1788 = vmatprep.subr.mxu0 0.0
  %1789 = vmatpush1.msra.mxu0 0.0
  %1790 = vmatprep.subr.mxu0 0.0
  %1791 = vmatpush1.msra.mxu0 0.0
  %1792 = vmatprep.subr.mxu0 0.0
  %1793 = vmatpush1.msra.mxu0 0.0
  %1794 = vmatprep.subr.mxu0 0.0
  %1795 = vmatpush1.msra.mxu0 0.0
  %1796 = vmatprep.subr.mxu0 0.0
  %1797 = vmatpush1.msra.mxu0 0.0
  %1798 = vmatprep.mubr.f32.mxu0 0.0
  %1799 = vmatmul.mubr.f32.gmra.mrb[0].mxu0 %v1568
  %v1800 = vpop.f32.mrb[0].mxu0
  %v1801 = vadd.f32 0.0, %v1800
  %v1802 = vpop.f32.mrb[0].mxu0
  %v1803 = vadd.f32 0.0, %v1802
  %1804 = vdwg.mxu0
  %1805 = vmatprep.subr.mxu0 0.0
  %1806 = vmatpush1.msra.mxu0 %v576
  %1807 = vmatprep.subr.mxu0 0.0
  %1808 = vmatpush1.msra.mxu0 %v579
  %1809 = vmatprep.subr.mxu0 0.0
  %1810 = vmatpush1.msra.mxu0 %v582
  %1811 = vmatprep.subr.mxu0 0.0
  %1812 = vmatpush1.msra.mxu0 %v585
  %1813 = vmatprep.subr.mxu0 0.0
  %1814 = vmatpush1.msra.mxu0 %v588
  %1815 = vmatprep.subr.mxu0 0.0
  %1816 = vmatpush1.msra.mxu0 %v591
  %1817 = vmatprep.subr.mxu0 0.0
  %1818 = vmatpush1.msra.mxu0 %v594
  %1819 = vmatprep.subr.mxu0 0.0
  %1820 = vmatpush1.msra.mxu0 %v597
  %1821 = vmatprep.subr.mxu0 0.0
  %1822 = vmatpush1.msra.mxu0 %v600
  %1823 = vmatprep.subr.mxu0 0.0
  %1824 = vmatpush1.msra.mxu0 %v603
  %1825 = vmatprep.subr.mxu0 0.0
  %1826 = vmatpush1.msra.mxu0 %v606
  %1827 = vmatprep.subr.mxu0 0.0
  %1828 = vmatpush1.msra.mxu0 %v609
  %1829 = vmatprep.subr.mxu0 0.0
  %1830 = vmatpush1.msra.mxu0 %v612
  %1831 = vmatprep.subr.mxu0 0.0
  %1832 = vmatpush1.msra.mxu0 %v615
  %1833 = vmatprep.subr.mxu0 0.0
  %1834 = vmatpush1.msra.mxu0 %v618
  %1835 = vmatprep.subr.mxu0 0.0
  %1836 = vmatpush1.msra.mxu0 %v621
  %1837 = vmatprep.subr.mxu0 0.0
  %1838 = vmatpush1.msra.mxu0 0.0
  %1839 = vmatprep.subr.mxu0 0.0
  %1840 = vmatpush1.msra.mxu0 0.0
  %1841 = vmatprep.subr.mxu0 0.0
  %1842 = vmatpush1.msra.mxu0 0.0
  %1843 = vmatprep.subr.mxu0 0.0
  %1844 = vmatpush1.msra.mxu0 0.0
  %1845 = vmatprep.subr.mxu0 0.0
  %1846 = vmatpush1.msra.mxu0 0.0
  %1847 = vmatprep.subr.mxu0 0.0
  %1848 = vmatpush1.msra.mxu0 0.0
  %1849 = vmatprep.subr.mxu0 0.0
  %1850 = vmatpush1.msra.mxu0 0.0
  %1851 = vmatprep.subr.mxu0 0.0
  %1852 = vmatpush1.msra.mxu0 0.0
  %1853 = vmatprep.subr.mxu0 0.0
  %1854 = vmatpush1.msra.mxu0 0.0
  %1855 = vmatprep.subr.mxu0 0.0
  %1856 = vmatpush1.msra.mxu0 0.0
  %1857 = vmatprep.subr.mxu0 0.0
  %1858 = vmatpush1.msra.mxu0 0.0
  %1859 = vmatprep.subr.mxu0 0.0
  %1860 = vmatpush1.msra.mxu0 0.0
  %1861 = vmatprep.subr.mxu0 0.0
  %1862 = vmatpush1.msra.mxu0 0.0
  %1863 = vmatprep.subr.mxu0 0.0
  %1864 = vmatpush1.msra.mxu0 0.0
  %1865 = vmatprep.subr.mxu0 0.0
  %1866 = vmatpush1.msra.mxu0 0.0
  %1867 = vmatprep.subr.mxu0 0.0
  %1868 = vmatpush1.msra.mxu0 0.0
  %1869 = vmatprep.mubr.f32.mxu0 0.0
  %1870 = vmatmul.mubr.f32.gmra.mrb[0].mxu0 %v1568
  %v1871 = vpop.f32.mrb[0].mxu0
  %v1872 = vadd.f32 0.0, %v1871
  %v1873 = vpop.f32.mrb[0].mxu0
  %1874 = vdwg.mxu0
  %v1875 = vadd.f32 %v1731, %v1801
  %v1876 = vxor.u32 %v1875, 2147483648
  %v1877 = vmul.f32 %v1876, 1.442695
  %v1878 = vpow.pop %v1877
  %v1879 = vadd.f32 %v1878, 1.0
  %v1880 = vrcp.pop %v1879
  %v1881 = vmul.f32 1.0, %v1880
  %v1882 = vadd.f32 %v1732, %v1803
  %v1883 = vxor.u32 %v1882, 2147483648
  %v1884 = vmul.f32 %v1883, 1.442695
  %v1885 = vpow.pop %v1884
  %v1886 = vadd.f32 %v1885, 1.0
  %v1887 = vrcp.pop %v1886
  %v1888 = vmul.f32 1.0, %v1887
  %v1889 = vadd.f32 %v1872, %v545
  %v1890 = vmul.f32 %v1881, %v1889
  %v1891 = vadd.f32 %v1733, %v1890
  %v1892 = vtanh.pop %v1891
  %v1893 = vsub.f32 1.0, %v1888
  %v1894 = vmul.f32 %v1893, %v1892
  %v1895 = vmul.f32 %v1888, %v1568
  %v1896 = vadd.f32 %v1894, %v1895
  %1897 = vmatprep.subr.mxu0 %v786
  %1898 = vmatpush1.msra.mxu0 %v785
  %1899 = vmatprep.subr.mxu0 %v790
  %1900 = vmatpush1.msra.mxu0 %v789
  %1901 = vmatprep.subr.mxu0 %v794
  %1902 = vmatpush1.msra.mxu0 %v793
  %1903 = vmatprep.subr.mxu0 %v798
  %1904 = vmatpush1.msra.mxu0 %v797
  %1905 = vmatprep.subr.mxu0 %v802
  %1906 = vmatpush1.msra.mxu0 %v801
  %1907 = vmatprep.subr.mxu0 %v806
  %1908 = vmatpush1.msra.mxu0 %v805
  %1909 = vmatprep.subr.mxu0 %v810
  %1910 = vmatpush1.msra.mxu0 %v809
  %1911 = vmatprep.subr.mxu0 %v814
  %1912 = vmatpush1.msra.mxu0 %v813
  %1913 = vmatprep.subr.mxu0 %v818
  %1914 = vmatpush1.msra.mxu0 %v817
  %1915 = vmatprep.subr.mxu0 %v822
  %1916 = vmatpush1.msra.mxu0 %v821
  %1917 = vmatprep.subr.mxu0 %v826
  %1918 = vmatpush1.msra.mxu0 %v825
  %1919 = vmatprep.subr.mxu0 %v830
  %1920 = vmatpush1.msra.mxu0 %v829
  %1921 = vmatprep.subr.mxu0 %v834
  %1922 = vmatpush1.msra.mxu0 %v833
  %1923 = vmatprep.subr.mxu0 %v838
  %1924 = vmatpush1.msra.mxu0 %v837
  %1925 = vmatprep.subr.mxu0 %v842
  %1926 = vmatpush1.msra.mxu0 %v841
  %1927 = vmatprep.subr.mxu0 %v846
  %1928 = vmatpush1.msra.mxu0 %v845
  %1929 = vmatprep.subr.mxu0 %v850
  %1930 = vmatpush1.msra.mxu0 %v849
  %1931 = vmatprep.subr.mxu0 %v854
  %1932 = vmatpush1.msra.mxu0 %v853
  %1933 = vmatprep.subr.mxu0 %v858
  %1934 = vmatpush1.msra.mxu0 %v857
  %1935 = vmatprep.subr.mxu0 %v862
  %1936 = vmatpush1.msra.mxu0 %v861
  %1937 = vmatprep.subr.mxu0 %v866
  %1938 = vmatpush1.msra.mxu0 %v865
  %1939 = vmatprep.subr.mxu0 %v870
  %1940 = vmatpush1.msra.mxu0 %v869
  %1941 = vmatprep.subr.mxu0 %v874
  %1942 = vmatpush1.msra.mxu0 %v873
  %1943 = vmatprep.subr.mxu0 %v878
  %1944 = vmatpush1.msra.mxu0 %v877
  %1945 = vmatprep.subr.mxu0 %v882
  %1946 = vmatpush1.msra.mxu0 %v881
  %1947 = vmatprep.subr.mxu0 %v886
  %1948 = vmatpush1.msra.mxu0 %v885
  %1949 = vmatprep.subr.mxu0 %v890
  %1950 = vmatpush1.msra.mxu0 %v889
  %1951 = vmatprep.subr.mxu0 %v894
  %1952 = vmatpush1.msra.mxu0 %v893
  %1953 = vmatprep.subr.mxu0 %v898
  %1954 = vmatpush1.msra.mxu0 %v897
  %1955 = vmatprep.subr.mxu0 %v902
  %1956 = vmatpush1.msra.mxu0 %v901
  %1957 = vmatprep.subr.mxu0 %v906
  %1958 = vmatpush1.msra.mxu0 %v905
  %1959 = vmatprep.subr.mxu0 %v910
  %1960 = vmatpush1.msra.mxu0 %v909
  %1961 = vmatprep.mubr.f32.mxu0 %v1729
  %1962 = vmatmul.mubr.f32.gmra.mrb[0].mxu0 %v1896
  %v1963 = vpop.f32.mrb[0].mxu0
  %v1964 = vadd.f32 %v552, %v1963
  %v1965 = vpop.f32.mrb[0].mxu0
  %v1966 = vadd.f32 %v556, %v1965
  %1967 = vdwg.mxu0
  %1968 = vmatprep.subr.mxu0 %v788
  %1969 = vmatpush1.msra.mxu0 %v787
  %1970 = vmatprep.subr.mxu0 %v792
  %1971 = vmatpush1.msra.mxu0 %v791
  %1972 = vmatprep.subr.mxu0 %v796
  %1973 = vmatpush1.msra.mxu0 %v795
  %1974 = vmatprep.subr.mxu0 %v800
  %1975 = vmatpush1.msra.mxu0 %v799
  %1976 = vmatprep.subr.mxu0 %v804
  %1977 = vmatpush1.msra.mxu0 %v803
  %1978 = vmatprep.subr.mxu0 %v808
  %1979 = vmatpush1.msra.mxu0 %v807
  %1980 = vmatprep.subr.mxu0 %v812
  %1981 = vmatpush1.msra.mxu0 %v811
  %1982 = vmatprep.subr.mxu0 %v816
  %1983 = vmatpush1.msra.mxu0 %v815
  %1984 = vmatprep.subr.mxu0 %v820
  %1985 = vmatpush1.msra.mxu0 %v819
  %1986 = vmatprep.subr.mxu0 %v824
  %1987 = vmatpush1.msra.mxu0 %v823
  %1988 = vmatprep.subr.mxu0 %v828
  %1989 = vmatpush1.msra.mxu0 %v827
  %1990 = vmatprep.subr.mxu0 %v832
  %1991 = vmatpush1.msra.mxu0 %v831
  %1992 = vmatprep.subr.mxu0 %v836
  %1993 = vmatpush1.msra.mxu0 %v835
  %1994 = vmatprep.subr.mxu0 %v840
  %1995 = vmatpush1.msra.mxu0 %v839
  %1996 = vmatprep.subr.mxu0 %v844
  %1997 = vmatpush1.msra.mxu0 %v843
  %1998 = vmatprep.subr.mxu0 %v848
  %1999 = vmatpush1.msra.mxu0 %v847
  %2000 = vmatprep.subr.mxu0 %v852
  %2001 = vmatpush1.msra.mxu0 %v851
  %2002 = vmatprep.subr.mxu0 %v856
  %2003 = vmatpush1.msra.mxu0 %v855
  %2004 = vmatprep.subr.mxu0 %v860
  %2005 = vmatpush1.msra.mxu0 %v859
  %2006 = vmatprep.subr.mxu0 %v864
  %2007 = vmatpush1.msra.mxu0 %v863
  %2008 = vmatprep.subr.mxu0 %v868
  %2009 = vmatpush1.msra.mxu0 %v867
  %2010 = vmatprep.subr.mxu0 %v872
  %2011 = vmatpush1.msra.mxu0 %v871
  %2012 = vmatprep.subr.mxu0 %v876
  %2013 = vmatpush1.msra.mxu0 %v875
  %2014 = vmatprep.subr.mxu0 %v880
  %2015 = vmatpush1.msra.mxu0 %v879
  %2016 = vmatprep.subr.mxu0 %v884
  %2017 = vmatpush1.msra.mxu0 %v883
  %2018 = vmatprep.subr.mxu0 %v888
  %2019 = vmatpush1.msra.mxu0 %v887
  %2020 = vmatprep.subr.mxu0 %v892
  %2021 = vmatpush1.msra.mxu0 %v891
  %2022 = vmatprep.subr.mxu0 %v896
  %2023 = vmatpush1.msra.mxu0 %v895
  %2024 = vmatprep.subr.mxu0 %v900
  %2025 = vmatpush1.msra.mxu0 %v899
  %2026 = vmatprep.subr.mxu0 %v904
  %2027 = vmatpush1.msra.mxu0 %v903
  %2028 = vmatprep.subr.mxu0 %v908
  %2029 = vmatpush1.msra.mxu0 %v907
  %2030 = vmatprep.subr.mxu0 %v912
  %2031 = vmatpush1.msra.mxu0 %v911
  %2032 = vmatprep.mubr.f32.mxu0 %v1729
  %2033 = vmatmul.mubr.f32.gmra.mrb[0].mxu0 %v1896
  %v2034 = vpop.f32.mrb[0].mxu0
  %v2035 = vadd.f32 %v560, %v2034
  %v2036 = vpop.f32.mrb[0].mxu0
  %v2037 = vadd.f32 %v564, %v2036
  %2038 = vdwg.mxu0
  %v2039 = vxor.u32 %v1964, 2147483648
  %v2040 = vmul.f32 %v2039, 1.442695
  %v2041 = vpow.pop %v2040
  %v2042 = vadd.f32 %v2041, 1.0
  %v2043 = vrcp.pop %v2042
  %v2044 = vmul.f32 1.0, %v2043
  %v2045 = vxor.u32 %v1966, 2147483648
  %v2046 = vmul.f32 %v2045, 1.442695
  %v2047 = vpow.pop %v2046
  %v2048 = vadd.f32 %v2047, 1.0
  %v2049 = vrcp.pop %v2048
  %v2050 = vmul.f32 1.0, %v2049
  %v2051 = vmul.f32 %v2044, %v2037
  %v2052 = vadd.f32 %v2035, %v2051
  %v2053 = vtanh.pop %v2052
  %v2054 = vsub.f32 1.0, %v2050
  %v2055 = vmul.f32 %v2054, %v2053
  %v2056 = vmul.f32 %v2050, %v1729
  %v2057 = vadd.f32 %v2055, %v2056
  %s2058 = scalar_lea.vmem %s0, 96
  %v2059 = vld [vmem:[%s2058] sm:$0xff]
  %v2060 = vld [vmem:[%s2058 + $0x8] sm:$0xff]
  %v2061 = vld [vmem:[%s2058 + $0x10] sm:$0xff]
  %2062 = vmatprep.subr.mxu0 %v575
  %2063 = vmatpush1.msra.mxu0 %v574
  %2064 = vmatprep.subr.mxu0 %v578
  %2065 = vmatpush1.msra.mxu0 %v577
  %2066 = vmatprep.subr.mxu0 %v581
  %2067 = vmatpush1.msra.mxu0 %v580
  %2068 = vmatprep.subr.mxu0 %v584
  %2069 = vmatpush1.msra.mxu0 %v583
  %2070 = vmatprep.subr.mxu0 %v587
  %2071 = vmatpush1.msra.mxu0 %v586
  %2072 = vmatprep.subr.mxu0 %v590
  %2073 = vmatpush1.msra.mxu0 %v589
  %2074 = vmatprep.subr.mxu0 %v593
  %2075 = vmatpush1.msra.mxu0 %v592
  %2076 = vmatprep.subr.mxu0 %v596
  %2077 = vmatpush1.msra.mxu0 %v595
  %2078 = vmatprep.subr.mxu0 %v599
  %2079 = vmatpush1.msra.mxu0 %v598
  %2080 = vmatprep.subr.mxu0 %v602
  %2081 = vmatpush1.msra.mxu0 %v601
  %2082 = vmatprep.subr.mxu0 %v605
  %2083 = vmatpush1.msra.mxu0 %v604
  %2084 = vmatprep.subr.mxu0 %v608
  %2085 = vmatpush1.msra.mxu0 %v607
  %2086 = vmatprep.subr.mxu0 %v611
  %2087 = vmatpush1.msra.mxu0 %v610
  %2088 = vmatprep.subr.mxu0 %v614
  %2089 = vmatpush1.msra.mxu0 %v613
  %2090 = vmatprep.subr.mxu0 %v617
  %2091 = vmatpush1.msra.mxu0 %v616
  %2092 = vmatprep.subr.mxu0 %v620
  %2093 = vmatpush1.msra.mxu0 %v619
  %2094 = vmatprep.subr.mxu0 0.0
  %2095 = vmatpush1.msra.mxu0 0.0
  %2096 = vmatprep.subr.mxu0 0.0
  %2097 = vmatpush1.msra.mxu0 0.0
  %2098 = vmatprep.subr.mxu0 0.0
  %2099 = vmatpush1.msra.mxu0 0.0
  %2100 = vmatprep.subr.mxu0 0.0
  %2101 = vmatpush1.msra.mxu0 0.0
  %2102 = vmatprep.subr.mxu0 0.0
  %2103 = vmatpush1.msra.mxu0 0.0
  %2104 = vmatprep.subr.mxu0 0.0
  %2105 = vmatpush1.msra.mxu0 0.0
  %2106 = vmatprep.subr.mxu0 0.0
  %2107 = vmatpush1.msra.mxu0 0.0
  %2108 = vmatprep.subr.mxu0 0.0
  %2109 = vmatpush1.msra.mxu0 0.0
  %2110 = vmatprep.subr.mxu0 0.0
  %2111 = vmatpush1.msra.mxu0 0.0
  %2112 = vmatprep.subr.mxu0 0.0
  %2113 = vmatpush1.msra.mxu0 0.0
  %2114 = vmatprep.subr.mxu0 0.0
  %2115 = vmatpush1.msra.mxu0 0.0
  %2116 = vmatprep.subr.mxu0 0.0
  %2117 = vmatpush1.msra.mxu0 0.0
  %2118 = vmatprep.subr.mxu0 0.0
  %2119 = vmatpush1.msra.mxu0 0.0
  %2120 = vmatprep.subr.mxu0 0.0
  %2121 = vmatpush1.msra.mxu0 0.0
  %2122 = vmatprep.subr.mxu0 0.0
  %2123 = vmatpush1.msra.mxu0 0.0
  %2124 = vmatprep.subr.mxu0 0.0
  %2125 = vmatpush1.msra.mxu0 0.0
  %2126 = vmatprep.mubr.f32.mxu0 0.0
  %2127 = vmatmul.mubr.f32.gmra.mrb[0].mxu0 %v1896
  %v2128 = vpop.f32.mrb[0].mxu0
  %v2129 = vadd.f32 0.0, %v2128
  %v2130 = vpop.f32.mrb[0].mxu0
  %v2131 = vadd.f32 0.0, %v2130
  %2132 = vdwg.mxu0
  %2133 = vmatprep.subr.mxu0 0.0
  %2134 = vmatpush1.msra.mxu0 %v576
  %2135 = vmatprep.subr.mxu0 0.0
  %2136 = vmatpush1.msra.mxu0 %v579
  %2137 = vmatprep.subr.mxu0 0.0
  %2138 = vmatpush1.msra.mxu0 %v582
  %2139 = vmatprep.subr.mxu0 0.0
  %2140 = vmatpush1.msra.mxu0 %v585
  %2141 = vmatprep.subr.mxu0 0.0
  %2142 = vmatpush1.msra.mxu0 %v588
  %2143 = vmatprep.subr.mxu0 0.0
  %2144 = vmatpush1.msra.mxu0 %v591
  %2145 = vmatprep.subr.mxu0 0.0
  %2146 = vmatpush1.msra.mxu0 %v594
  %2147 = vmatprep.subr.mxu0 0.0
  %2148 = vmatpush1.msra.mxu0 %v597
  %2149 = vmatprep.subr.mxu0 0.0
  %2150 = vmatpush1.msra.mxu0 %v600
  %2151 = vmatprep.subr.mxu0 0.0
  %2152 = vmatpush1.msra.mxu0 %v603
  %2153 = vmatprep.subr.mxu0 0.0
  %2154 = vmatpush1.msra.mxu0 %v606
  %2155 = vmatprep.subr.mxu0 0.0
  %2156 = vmatpush1.msra.mxu0 %v609
  %2157 = vmatprep.subr.mxu0 0.0
  %2158 = vmatpush1.msra.mxu0 %v612
  %2159 = vmatprep.subr.mxu0 0.0
  %2160 = vmatpush1.msra.mxu0 %v615
  %2161 = vmatprep.subr.mxu0 0.0
  %2162 = vmatpush1.msra.mxu0 %v618
  %2163 = vmatprep.subr.mxu0 0.0
  %2164 = vmatpush1.msra.mxu0 %v621
  %2165 = vmatprep.subr.mxu0 0.0
  %2166 = vmatpush1.msra.mxu0 0.0
  %2167 = vmatprep.subr.mxu0 0.0
  %2168 = vmatpush1.msra.mxu0 0.0
  %2169 = vmatprep.subr.mxu0 0.0
  %2170 = vmatpush1.msra.mxu0 0.0
  %2171 = vmatprep.subr.mxu0 0.0
  %2172 = vmatpush1.msra.mxu0 0.0
  %2173 = vmatprep.subr.mxu0 0.0
  %2174 = vmatpush1.msra.mxu0 0.0
  %2175 = vmatprep.subr.mxu0 0.0
  %2176 = vmatpush1.msra.mxu0 0.0
  %2177 = vmatprep.subr.mxu0 0.0
  %2178 = vmatpush1.msra.mxu0 0.0
  %2179 = vmatprep.subr.mxu0 0.0
  %2180 = vmatpush1.msra.mxu0 0.0
  %2181 = vmatprep.subr.mxu0 0.0
  %2182 = vmatpush1.msra.mxu0 0.0
  %2183 = vmatprep.subr.mxu0 0.0
  %2184 = vmatpush1.msra.mxu0 0.0
  %2185 = vmatprep.subr.mxu0 0.0
  %2186 = vmatpush1.msra.mxu0 0.0
  %2187 = vmatprep.subr.mxu0 0.0
  %2188 = vmatpush1.msra.mxu0 0.0
  %2189 = vmatprep.subr.mxu0 0.0
  %2190 = vmatpush1.msra.mxu0 0.0
  %2191 = vmatprep.subr.mxu0 0.0
  %2192 = vmatpush1.msra.mxu0 0.0
  %2193 = vmatprep.subr.mxu0 0.0
  %2194 = vmatpush1.msra.mxu0 0.0
  %2195 = vmatprep.subr.mxu0 0.0
  %2196 = vmatpush1.msra.mxu0 0.0
  %2197 = vmatprep.mubr.f32.mxu0 0.0
  %2198 = vmatmul.mubr.f32.gmra.mrb[0].mxu0 %v1896
  %v2199 = vpop.f32.mrb[0].mxu0
  %v2200 = vadd.f32 0.0, %v2199
  %v2201 = vpop.f32.mrb[0].mxu0
  %2202 = vdwg.mxu0
  %v2203 = vadd.f32 %v2059, %v2129
  %v2204 = vxor.u32 %v2203, 2147483648
  %v2205 = vmul.f32 %v2204, 1.442695
  %v2206 = vpow.pop %v2205
  %v2207 = vadd.f32 %v2206, 1.0
  %v2208 = vrcp.pop %v2207
  %v2209 = vmul.f32 1.0, %v2208
  %v2210 = vadd.f32 %v2060, %v2131
  %v2211 = vxor.u32 %v2210, 2147483648
  %v2212 = vmul.f32 %v2211, 1.442695
  %v2213 = vpow.pop %v2212
  %v2214 = vadd.f32 %v2213, 1.0
  %v2215 = vrcp.pop %v2214
  %v2216 = vmul.f32 1.0, %v2215
  %v2217 = vadd.f32 %v2200, %v545
  %v2218 = vmul.f32 %v2209, %v2217
  %v2219 = vadd.f32 %v2061, %v2218
  %v2220 = vtanh.pop %v2219
  %v2221 = vsub.f32 1.0, %v2216
  %v2222 = vmul.f32 %v2221, %v2220
  %v2223 = vmul.f32 %v2216, %v1896
  %v2224 = vadd.f32 %v2222, %v2223
  %2225 = vmatprep.subr.mxu0 %v786
  %2226 = vmatpush1.msra.mxu0 %v785
  %2227 = vmatprep.subr.mxu0 %v790
  %2228 = vmatpush1.msra.mxu0 %v789
  %2229 = vmatprep.subr.mxu0 %v794
  %2230 = vmatpush1.msra.mxu0 %v793
  %2231 = vmatprep.subr.mxu0 %v798
  %2232 = vmatpush1.msra.mxu0 %v797
  %2233 = vmatprep.subr.mxu0 %v802
  %2234 = vmatpush1.msra.mxu0 %v801
  %2235 = vmatprep.subr.mxu0 %v806
  %2236 = vmatpush1.msra.mxu0 %v805
  %2237 = vmatprep.subr.mxu0 %v810
  %2238 = vmatpush1.msra.mxu0 %v809
  %2239 = vmatprep.subr.mxu0 %v814
  %2240 = vmatpush1.msra.mxu0 %v813
  %2241 = vmatprep.subr.mxu0 %v818
  %2242 = vmatpush1.msra.mxu0 %v817
  %2243 = vmatprep.subr.mxu0 %v822
  %2244 = vmatpush1.msra.mxu0 %v821
  %2245 = vmatprep.subr.mxu0 %v826
  %2246 = vmatpush1.msra.mxu0 %v825
  %2247 = vmatprep.subr.mxu0 %v830
  %2248 = vmatpush1.msra.mxu0 %v829
  %2249 = vmatprep.subr.mxu0 %v834
  %2250 = vmatpush1.msra.mxu0 %v833
  %2251 = vmatprep.subr.mxu0 %v838
  %2252 = vmatpush1.msra.mxu0 %v837
  %2253 = vmatprep.subr.mxu0 %v842
  %2254 = vmatpush1.msra.mxu0 %v841
  %2255 = vmatprep.subr.mxu0 %v846
  %2256 = vmatpush1.msra.mxu0 %v845
  %2257 = vmatprep.subr.mxu0 %v850
  %2258 = vmatpush1.msra.mxu0 %v849
  %2259 = vmatprep.subr.mxu0 %v854
  %2260 = vmatpush1.msra.mxu0 %v853
  %2261 = vmatprep.subr.mxu0 %v858
  %2262 = vmatpush1.msra.mxu0 %v857
  %2263 = vmatprep.subr.mxu0 %v862
  %2264 = vmatpush1.msra.mxu0 %v861
  %2265 = vmatprep.subr.mxu0 %v866
  %2266 = vmatpush1.msra.mxu0 %v865
  %2267 = vmatprep.subr.mxu0 %v870
  %2268 = vmatpush1.msra.mxu0 %v869
  %2269 = vmatprep.subr.mxu0 %v874
  %2270 = vmatpush1.msra.mxu0 %v873
  %2271 = vmatprep.subr.mxu0 %v878
  %2272 = vmatpush1.msra.mxu0 %v877
  %2273 = vmatprep.subr.mxu0 %v882
  %2274 = vmatpush1.msra.mxu0 %v881
  %2275 = vmatprep.subr.mxu0 %v886
  %2276 = vmatpush1.msra.mxu0 %v885
  %2277 = vmatprep.subr.mxu0 %v890
  %2278 = vmatpush1.msra.mxu0 %v889
  %2279 = vmatprep.subr.mxu0 %v894
  %2280 = vmatpush1.msra.mxu0 %v893
  %2281 = vmatprep.subr.mxu0 %v898
  %2282 = vmatpush1.msra.mxu0 %v897
  %2283 = vmatprep.subr.mxu0 %v902
  %2284 = vmatpush1.msra.mxu0 %v901
  %2285 = vmatprep.subr.mxu0 %v906
  %2286 = vmatpush1.msra.mxu0 %v905
  %2287 = vmatprep.subr.mxu0 %v910
  %2288 = vmatpush1.msra.mxu0 %v909
  %2289 = vmatprep.mubr.f32.mxu0 %v2057
  %2290 = vmatmul.mubr.f32.gmra.mrb[0].mxu0 %v2224
  %v2291 = vpop.f32.mrb[0].mxu0
  %v2292 = vadd.f32 %v552, %v2291
  %v2293 = vpop.f32.mrb[0].mxu0
  %v2294 = vadd.f32 %v556, %v2293
  %2295 = vdwg.mxu0
  %2296 = vmatprep.subr.mxu0 %v788
  %2297 = vmatpush1.msra.mxu0 %v787
  %2298 = vmatprep.subr.mxu0 %v792
  %2299 = vmatpush1.msra.mxu0 %v791
  %2300 = vmatprep.subr.mxu0 %v796
  %2301 = vmatpush1.msra.mxu0 %v795
  %2302 = vmatprep.subr.mxu0 %v800
  %2303 = vmatpush1.msra.mxu0 %v799
  %2304 = vmatprep.subr.mxu0 %v804
  %2305 = vmatpush1.msra.mxu0 %v803
  %2306 = vmatprep.subr.mxu0 %v808
  %2307 = vmatpush1.msra.mxu0 %v807
  %2308 = vmatprep.subr.mxu0 %v812
  %2309 = vmatpush1.msra.mxu0 %v811
  %2310 = vmatprep.subr.mxu0 %v816
  %2311 = vmatpush1.msra.mxu0 %v815
  %2312 = vmatprep.subr.mxu0 %v820
  %2313 = vmatpush1.msra.mxu0 %v819
  %2314 = vmatprep.subr.mxu0 %v824
  %2315 = vmatpush1.msra.mxu0 %v823
  %2316 = vmatprep.subr.mxu0 %v828
  %2317 = vmatpush1.msra.mxu0 %v827
  %2318 = vmatprep.subr.mxu0 %v832
  %2319 = vmatpush1.msra.mxu0 %v831
  %2320 = vmatprep.subr.mxu0 %v836
  %2321 = vmatpush1.msra.mxu0 %v835
  %2322 = vmatprep.subr.mxu0 %v840
  %2323 = vmatpush1.msra.mxu0 %v839
  %2324 = vmatprep.subr.mxu0 %v844
  %2325 = vmatpush1.msra.mxu0 %v843
  %2326 = vmatprep.subr.mxu0 %v848
  %2327 = vmatpush1.msra.mxu0 %v847
  %2328 = vmatprep.subr.mxu0 %v852
  %2329 = vmatpush1.msra.mxu0 %v851
  %2330 = vmatprep.subr.mxu0 %v856
  %2331 = vmatpush1.msra.mxu0 %v855
  %2332 = vmatprep.subr.mxu0 %v860
  %2333 = vmatpush1.msra.mxu0 %v859
  %2334 = vmatprep.subr.mxu0 %v864
  %2335 = vmatpush1.msra.mxu0 %v863
  %2336 = vmatprep.subr.mxu0 %v868
  %2337 = vmatpush1.msra.mxu0 %v867
  %2338 = vmatprep.subr.mxu0 %v872
  %2339 = vmatpush1.msra.mxu0 %v871
  %2340 = vmatprep.subr.mxu0 %v876
  %2341 = vmatpush1.msra.mxu0 %v875
  %2342 = vmatprep.subr.mxu0 %v880
  %2343 = vmatpush1.msra.mxu0 %v879
  %2344 = vmatprep.subr.mxu0 %v884
  %2345 = vmatpush1.msra.mxu0 %v883
  %2346 = vmatprep.subr.mxu0 %v888
  %2347 = vmatpush1.msra.mxu0 %v887
  %2348 = vmatprep.subr.mxu0 %v892
  %2349 = vmatpush1.msra.mxu0 %v891
  %2350 = vmatprep.subr.mxu0 %v896
  %2351 = vmatpush1.msra.mxu0 %v895
  %2352 = vmatprep.subr.mxu0 %v900
  %2353 = vmatpush1.msra.mxu0 %v899
  %2354 = vmatprep.subr.mxu0 %v904
  %2355 = vmatpush1.msra.mxu0 %v903
  %2356 = vmatprep.subr.mxu0 %v908
  %2357 = vmatpush1.msra.mxu0 %v907
  %2358 = vmatprep.subr.mxu0 %v912
  %2359 = vmatpush1.msra.mxu0 %v911
  %2360 = vmatprep.mubr.f32.mxu0 %v2057
  %2361 = vmatmul.mubr.f32.gmra.mrb[0].mxu0 %v2224
  %v2362 = vpop.f32.mrb[0].mxu0
  %v2363 = vadd.f32 %v560, %v2362
  %v2364 = vpop.f32.mrb[0].mxu0
  %v2365 = vadd.f32 %v564, %v2364
  %2366 = vdwg.mxu0
  %v2367 = vxor.u32 %v2292, 2147483648
  %v2368 = vmul.f32 %v2367, 1.442695
  %v2369 = vpow.pop %v2368
  %v2370 = vadd.f32 %v2369, 1.0
  %v2371 = vrcp.pop %v2370
  %v2372 = vmul.f32 1.0, %v2371
  %v2373 = vxor.u32 %v2294, 2147483648
  %v2374 = vmul.f32 %v2373, 1.442695
  %v2375 = vpow.pop %v2374
  %v2376 = vadd.f32 %v2375, 1.0
  %v2377 = vrcp.pop %v2376
  %v2378 = vmul.f32 1.0, %v2377
  %v2379 = vmul.f32 %v2372, %v2365
  %v2380 = vadd.f32 %v2363, %v2379
  %v2381 = vtanh.pop %v2380
  %v2382 = vsub.f32 1.0, %v2378
  %v2383 = vmul.f32 %v2382, %v2381
  %v2384 = vmul.f32 %v2378, %v2057
  %v2385 = vadd.f32 %v2383, %v2384
  %s2386 = scalar_lea.vmem %s0, 120
  %v2387 = vld [vmem:[%s2386] sm:$0xff]
  %v2388 = vld [vmem:[%s2386 + $0x8] sm:$0xff]
  %v2389 = vld [vmem:[%s2386 + $0x10] sm:$0xff]
  %2390 = vmatprep.subr.mxu0 %v575
  %2391 = vmatpush1.msra.mxu0 %v574
  %2392 = vmatprep.subr.mxu0 %v578
  %2393 = vmatpush1.msra.mxu0 %v577
  %2394 = vmatprep.subr.mxu0 %v581
  %2395 = vmatpush1.msra.mxu0 %v580
  %2396 = vmatprep.subr.mxu0 %v584
  %2397 = vmatpush1.msra.mxu0 %v583
  %2398 = vmatprep.subr.mxu0 %v587
  %2399 = vmatpush1.msra.mxu0 %v586
  %2400 = vmatprep.subr.mxu0 %v590
  %2401 = vmatpush1.msra.mxu0 %v589
  %2402 = vmatprep.subr.mxu0 %v593
  %2403 = vmatpush1.msra.mxu0 %v592
  %2404 = vmatprep.subr.mxu0 %v596
  %2405 = vmatpush1.msra.mxu0 %v595
  %2406 = vmatprep.subr.mxu0 %v599
  %2407 = vmatpush1.msra.mxu0 %v598
  %2408 = vmatprep.subr.mxu0 %v602
  %2409 = vmatpush1.msra.mxu0 %v601
  %2410 = vmatprep.subr.mxu0 %v605
  %2411 = vmatpush1.msra.mxu0 %v604
  %2412 = vmatprep.subr.mxu0 %v608
  %2413 = vmatpush1.msra.mxu0 %v607
  %2414 = vmatprep.subr.mxu0 %v611
  %2415 = vmatpush1.msra.mxu0 %v610
  %2416 = vmatprep.subr.mxu0 %v614
  %2417 = vmatpush1.msra.mxu0 %v613
  %2418 = vmatprep.subr.mxu0 %v617
  %2419 = vmatpush1.msra.mxu0 %v616
  %2420 = vmatprep.subr.mxu0 %v620
  %2421 = vmatpush1.msra.mxu0 %v619
  %2422 = vmatprep.subr.mxu0 0.0
  %2423 = vmatpush1.msra.mxu0 0.0
  %2424 = vmatprep.subr.mxu0 0.0
  %2425 = vmatpush1.msra.mxu0 0.0
  %2426 = vmatprep.subr.mxu0 0.0
  %2427 = vmatpush1.msra.mxu0 0.0
  %2428 = vmatprep.subr.mxu0 0.0
  %2429 = vmatpush1.msra.mxu0 0.0
  %2430 = vmatprep.subr.mxu0 0.0
  %2431 = vmatpush1.msra.mxu0 0.0
  %2432 = vmatprep.subr.mxu0 0.0
  %2433 = vmatpush1.msra.mxu0 0.0
  %2434 = vmatprep.subr.mxu0 0.0
  %2435 = vmatpush1.msra.mxu0 0.0
  %2436 = vmatprep.subr.mxu0 0.0
  %2437 = vmatpush1.msra.mxu0 0.0
  %2438 = vmatprep.subr.mxu0 0.0
  %2439 = vmatpush1.msra.mxu0 0.0
  %2440 = vmatprep.subr.mxu0 0.0
  %2441 = vmatpush1.msra.mxu0 0.0
  %2442 = vmatprep.subr.mxu0 0.0
  %2443 = vmatpush1.msra.mxu0 0.0
  %2444 = vmatprep.subr.mxu0 0.0
  %2445 = vmatpush1.msra.mxu0 0.0
  %2446 = vmatprep.subr.mxu0 0.0
  %2447 = vmatpush1.msra.mxu0 0.0
  %2448 = vmatprep.subr.mxu0 0.0
  %2449 = vmatpush1.msra.mxu0 0.0
  %2450 = vmatprep.subr.mxu0 0.0
  %2451 = vmatpush1.msra.mxu0 0.0
  %2452 = vmatprep.subr.mxu0 0.0
  %2453 = vmatpush1.msra.mxu0 0.0
  %2454 = vmatprep.mubr.f32.mxu0 0.0
  %2455 = vmatmul.mubr.f32.gmra.mrb[0].mxu0 %v2224
  %v2456 = vpop.f32.mrb[0].mxu0
  %v2457 = vadd.f32 0.0, %v2456
  %v2458 = vpop.f32.mrb[0].mxu0
  %v2459 = vadd.f32 0.0, %v2458
  %2460 = vdwg.mxu0
  %2461 = vmatprep.subr.mxu0 0.0
  %2462 = vmatpush1.msra.mxu0 %v576
  %2463 = vmatprep.subr.mxu0 0.0
  %2464 = vmatpush1.msra.mxu0 %v579
  %2465 = vmatprep.subr.mxu0 0.0
  %2466 = vmatpush1.msra.mxu0 %v582
  %2467 = vmatprep.subr.mxu0 0.0
  %2468 = vmatpush1.msra.mxu0 %v585
  %2469 = vmatprep.subr.mxu0 0.0
  %2470 = vmatpush1.msra.mxu0 %v588
  %2471 = vmatprep.subr.mxu0 0.0
  %2472 = vmatpush1.msra.mxu0 %v591
  %2473 = vmatprep.subr.mxu0 0.0
  %2474 = vmatpush1.msra.mxu0 %v594
  %2475 = vmatprep.subr.mxu0 0.0
  %2476 = vmatpush1.msra.mxu0 %v597
  %2477 = vmatprep.subr.mxu0 0.0
  %2478 = vmatpush1.msra.mxu0 %v600
  %2479 = vmatprep.subr.mxu0 0.0
  %2480 = vmatpush1.msra.mxu0 %v603
  %2481 = vmatprep.subr.mxu0 0.0
  %2482 = vmatpush1.msra.mxu0 %v606
  %2483 = vmatprep.subr.mxu0 0.0
  %2484 = vmatpush1.msra.mxu0 %v609
  %2485 = vmatprep.subr.mxu0 0.0
  %2486 = vmatpush1.msra.mxu0 %v612
  %2487 = vmatprep.subr.mxu0 0.0
  %2488 = vmatpush1.msra.mxu0 %v615
  %2489 = vmatprep.subr.mxu0 0.0
  %2490 = vmatpush1.msra.mxu0 %v618
  %2491 = vmatprep.subr.mxu0 0.0
  %2492 = vmatpush1.msra.mxu0 %v621
  %2493 = vmatprep.subr.mxu0 0.0
  %2494 = vmatpush1.msra.mxu0 0.0
  %2495 = vmatprep.subr.mxu0 0.0
  %2496 = vmatpush1.msra.mxu0 0.0
  %2497 = vmatprep.subr.mxu0 0.0
  %2498 = vmatpush1.msra.mxu0 0.0
  %2499 = vmatprep.subr.mxu0 0.0
  %2500 = vmatpush1.msra.mxu0 0.0
  %2501 = vmatprep.subr.mxu0 0.0
  %2502 = vmatpush1.msra.mxu0 0.0
  %2503 = vmatprep.subr.mxu0 0.0
  %2504 = vmatpush1.msra.mxu0 0.0
  %2505 = vmatprep.subr.mxu0 0.0
  %2506 = vmatpush1.msra.mxu0 0.0
  %2507 = vmatprep.subr.mxu0 0.0
  %2508 = vmatpush1.msra.mxu0 0.0
  %2509 = vmatprep.subr.mxu0 0.0
  %2510 = vmatpush1.msra.mxu0 0.0
  %2511 = vmatprep.subr.mxu0 0.0
  %2512 = vmatpush1.msra.mxu0 0.0
  %2513 = vmatprep.subr.mxu0 0.0
  %2514 = vmatpush1.msra.mxu0 0.0
  %2515 = vmatprep.subr.mxu0 0.0
  %2516 = vmatpush1.msra.mxu0 0.0
  %2517 = vmatprep.subr.mxu0 0.0
  %2518 = vmatpush1.msra.mxu0 0.0
  %2519 = vmatprep.subr.mxu0 0.0
  %2520 = vmatpush1.msra.mxu0 0.0
  %2521 = vmatprep.subr.mxu0 0.0
  %2522 = vmatpush1.msra.mxu0 0.0
  %2523 = vmatprep.subr.mxu0 0.0
  %2524 = vmatpush1.msra.mxu0 0.0
  %2525 = vmatprep.mubr.f32.mxu0 0.0
  %2526 = vmatmul.mubr.f32.gmra.mrb[0].mxu0 %v2224
  %v2527 = vpop.f32.mrb[0].mxu0
  %v2528 = vadd.f32 0.0, %v2527
  %v2529 = vpop.f32.mrb[0].mxu0
  %2530 = vdwg.mxu0
  %v2531 = vadd.f32 %v2387, %v2457
  %v2532 = vxor.u32 %v2531, 2147483648
  %v2533 = vmul.f32 %v2532, 1.442695
  %v2534 = vpow.pop %v2533
  %v2535 = vadd.f32 %v2534, 1.0
  %v2536 = vrcp.pop %v2535
  %v2537 = vmul.f32 1.0, %v2536
  %v2538 = vadd.f32 %v2388, %v2459
  %v2539 = vxor.u32 %v2538, 2147483648
  %v2540 = vmul.f32 %v2539, 1.442695
  %v2541 = vpow.pop %v2540
  %v2542 = vadd.f32 %v2541, 1.0
  %v2543 = vrcp.pop %v2542
  %v2544 = vmul.f32 1.0, %v2543
  %v2545 = vadd.f32 %v2528, %v545
  %v2546 = vmul.f32 %v2537, %v2545
  %v2547 = vadd.f32 %v2389, %v2546
  %v2548 = vtanh.pop %v2547
  %v2549 = vsub.f32 1.0, %v2544
  %v2550 = vmul.f32 %v2549, %v2548
  %v2551 = vmul.f32 %v2544, %v2224
  %v2552 = vadd.f32 %v2550, %v2551
  %2553 = vmatprep.subr.mxu0 %v786
  %2554 = vmatpush1.msra.mxu0 %v785
  %2555 = vmatprep.subr.mxu0 %v790
  %2556 = vmatpush1.msra.mxu0 %v789
  %2557 = vmatprep.subr.mxu0 %v794
  %2558 = vmatpush1.msra.mxu0 %v793
  %2559 = vmatprep.subr.mxu0 %v798
  %2560 = vmatpush1.msra.mxu0 %v797
  %2561 = vmatprep.subr.mxu0 %v802
  %2562 = vmatpush1.msra.mxu0 %v801
  %2563 = vmatprep.subr.mxu0 %v806
  %2564 = vmatpush1.msra.mxu0 %v805
  %2565 = vmatprep.subr.mxu0 %v810
  %2566 = vmatpush1.msra.mxu0 %v809
  %2567 = vmatprep.subr.mxu0 %v814
  %2568 = vmatpush1.msra.mxu0 %v813
  %2569 = vmatprep.subr.mxu0 %v818
  %2570 = vmatpush1.msra.mxu0 %v817
  %2571 = vmatprep.subr.mxu0 %v822
  %2572 = vmatpush1.msra.mxu0 %v821
  %2573 = vmatprep.subr.mxu0 %v826
  %2574 = vmatpush1.msra.mxu0 %v825
  %2575 = vmatprep.subr.mxu0 %v830
  %2576 = vmatpush1.msra.mxu0 %v829
  %2577 = vmatprep.subr.mxu0 %v834
  %2578 = vmatpush1.msra.mxu0 %v833
  %2579 = vmatprep.subr.mxu0 %v838
  %2580 = vmatpush1.msra.mxu0 %v837
  %2581 = vmatprep.subr.mxu0 %v842
  %2582 = vmatpush1.msra.mxu0 %v841
  %2583 = vmatprep.subr.mxu0 %v846
  %2584 = vmatpush1.msra.mxu0 %v845
  %2585 = vmatprep.subr.mxu0 %v850
  %2586 = vmatpush1.msra.mxu0 %v849
  %2587 = vmatprep.subr.mxu0 %v854
  %2588 = vmatpush1.msra.mxu0 %v853
  %2589 = vmatprep.subr.mxu0 %v858
  %2590 = vmatpush1.msra.mxu0 %v857
  %2591 = vmatprep.subr.mxu0 %v862
  %2592 = vmatpush1.msra.mxu0 %v861
  %2593 = vmatprep.subr.mxu0 %v866
  %2594 = vmatpush1.msra.mxu0 %v865
  %2595 = vmatprep.subr.mxu0 %v870
  %2596 = vmatpush1.msra.mxu0 %v869
  %2597 = vmatprep.subr.mxu0 %v874
  %2598 = vmatpush1.msra.mxu0 %v873
  %2599 = vmatprep.subr.mxu0 %v878
  %2600 = vmatpush1.msra.mxu0 %v877
  %2601 = vmatprep.subr.mxu0 %v882
  %2602 = vmatpush1.msra.mxu0 %v881
  %2603 = vmatprep.subr.mxu0 %v886
  %2604 = vmatpush1.msra.mxu0 %v885
  %2605 = vmatprep.subr.mxu0 %v890
  %2606 = vmatpush1.msra.mxu0 %v889
  %2607 = vmatprep.subr.mxu0 %v894
  %2608 = vmatpush1.msra.mxu0 %v893
  %2609 = vmatprep.subr.mxu0 %v898
  %2610 = vmatpush1.msra.mxu0 %v897
  %2611 = vmatprep.subr.mxu0 %v902
  %2612 = vmatpush1.msra.mxu0 %v901
  %2613 = vmatprep.subr.mxu0 %v906
  %2614 = vmatpush1.msra.mxu0 %v905
  %2615 = vmatprep.subr.mxu0 %v910
  %2616 = vmatpush1.msra.mxu0 %v909
  %2617 = vmatprep.mubr.f32.mxu0 %v2385
  %2618 = vmatmul.mubr.f32.gmra.mrb[0].mxu0 %v2552
  %v2619 = vpop.f32.mrb[0].mxu0
  %v2620 = vadd.f32 %v552, %v2619
  %v2621 = vpop.f32.mrb[0].mxu0
  %v2622 = vadd.f32 %v556, %v2621
  %2623 = vdwg.mxu0
  %2624 = vmatprep.subr.mxu0 %v788
  %2625 = vmatpush1.msra.mxu0 %v787
  %2626 = vmatprep.subr.mxu0 %v792
  %2627 = vmatpush1.msra.mxu0 %v791
  %2628 = vmatprep.subr.mxu0 %v796
  %2629 = vmatpush1.msra.mxu0 %v795
  %2630 = vmatprep.subr.mxu0 %v800
  %2631 = vmatpush1.msra.mxu0 %v799
  %2632 = vmatprep.subr.mxu0 %v804
  %2633 = vmatpush1.msra.mxu0 %v803
  %2634 = vmatprep.subr.mxu0 %v808
  %2635 = vmatpush1.msra.mxu0 %v807
  %2636 = vmatprep.subr.mxu0 %v812
  %2637 = vmatpush1.msra.mxu0 %v811
  %2638 = vmatprep.subr.mxu0 %v816
  %2639 = vmatpush1.msra.mxu0 %v815
  %2640 = vmatprep.subr.mxu0 %v820
  %2641 = vmatpush1.msra.mxu0 %v819
  %2642 = vmatprep.subr.mxu0 %v824
  %2643 = vmatpush1.msra.mxu0 %v823
  %2644 = vmatprep.subr.mxu0 %v828
  %2645 = vmatpush1.msra.mxu0 %v827
  %2646 = vmatprep.subr.mxu0 %v832
  %2647 = vmatpush1.msra.mxu0 %v831
  %2648 = vmatprep.subr.mxu0 %v836
  %2649 = vmatpush1.msra.mxu0 %v835
  %2650 = vmatprep.subr.mxu0 %v840
  %2651 = vmatpush1.msra.mxu0 %v839
  %2652 = vmatprep.subr.mxu0 %v844
  %2653 = vmatpush1.msra.mxu0 %v843
  %2654 = vmatprep.subr.mxu0 %v848
  %2655 = vmatpush1.msra.mxu0 %v847
  %2656 = vmatprep.subr.mxu0 %v852
  %2657 = vmatpush1.msra.mxu0 %v851
  %2658 = vmatprep.subr.mxu0 %v856
  %2659 = vmatpush1.msra.mxu0 %v855
  %2660 = vmatprep.subr.mxu0 %v860
  %2661 = vmatpush1.msra.mxu0 %v859
  %2662 = vmatprep.subr.mxu0 %v864
  %2663 = vmatpush1.msra.mxu0 %v863
  %2664 = vmatprep.subr.mxu0 %v868
  %2665 = vmatpush1.msra.mxu0 %v867
  %2666 = vmatprep.subr.mxu0 %v872
  %2667 = vmatpush1.msra.mxu0 %v871
  %2668 = vmatprep.subr.mxu0 %v876
  %2669 = vmatpush1.msra.mxu0 %v875
  %2670 = vmatprep.subr.mxu0 %v880
  %2671 = vmatpush1.msra.mxu0 %v879
  %2672 = vmatprep.subr.mxu0 %v884
  %2673 = vmatpush1.msra.mxu0 %v883
  %2674 = vmatprep.subr.mxu0 %v888
  %2675 = vmatpush1.msra.mxu0 %v887
  %2676 = vmatprep.subr.mxu0 %v892
  %2677 = vmatpush1.msra.mxu0 %v891
  %2678 = vmatprep.subr.mxu0 %v896
  %2679 = vmatpush1.msra.mxu0 %v895
  %2680 = vmatprep.subr.mxu0 %v900
  %2681 = vmatpush1.msra.mxu0 %v899
  %2682 = vmatprep.subr.mxu0 %v904
  %2683 = vmatpush1.msra.mxu0 %v903
  %2684 = vmatprep.subr.mxu0 %v908
  %2685 = vmatpush1.msra.mxu0 %v907
  %2686 = vmatprep.subr.mxu0 %v912
  %2687 = vmatpush1.msra.mxu0 %v911
  %2688 = vmatprep.mubr.f32.mxu0 %v2385
  %2689 = vmatmul.mubr.f32.gmra.mrb[0].mxu0 %v2552
  %v2690 = vpop.f32.mrb[0].mxu0
  %v2691 = vadd.f32 %v560, %v2690
  %v2692 = vpop.f32.mrb[0].mxu0
  %v2693 = vadd.f32 %v564, %v2692
  %2694 = vdwg.mxu0
  %v2695 = vxor.u32 %v2620, 2147483648
  %v2696 = vmul.f32 %v2695, 1.442695
  %v2697 = vpow.pop %v2696
  %v2698 = vadd.f32 %v2697, 1.0
  %v2699 = vrcp.pop %v2698
  %v2700 = vmul.f32 1.0, %v2699
  %v2701 = vxor.u32 %v2622, 2147483648
  %v2702 = vmul.f32 %v2701, 1.442695
  %v2703 = vpow.pop %v2702
  %v2704 = vadd.f32 %v2703, 1.0
  %v2705 = vrcp.pop %v2704
  %v2706 = vmul.f32 1.0, %v2705
  %v2707 = vmul.f32 %v2700, %v2693
  %v2708 = vadd.f32 %v2691, %v2707
  %v2709 = vtanh.pop %v2708
  %v2710 = vsub.f32 1.0, %v2706
  %v2711 = vmul.f32 %v2710, %v2709
  %v2712 = vmul.f32 %v2706, %v2385
  %v2713 = vadd.f32 %v2711, %v2712
  %s2714 = scalar_lea.vmem %s0, 144
  %v2715 = vld [vmem:[%s2714] sm:$0xff]
  %v2716 = vld [vmem:[%s2714 + $0x8] sm:$0xff]
  %v2717 = vld [vmem:[%s2714 + $0x10] sm:$0xff]
  %2718 = vmatprep.subr.mxu0 %v575
  %2719 = vmatpush1.msra.mxu0 %v574
  %2720 = vmatprep.subr.mxu0 %v578
  %2721 = vmatpush1.msra.mxu0 %v577
  %2722 = vmatprep.subr.mxu0 %v581
  %2723 = vmatpush1.msra.mxu0 %v580
  %2724 = vmatprep.subr.mxu0 %v584
  %2725 = vmatpush1.msra.mxu0 %v583
  %2726 = vmatprep.subr.mxu0 %v587
  %2727 = vmatpush1.msra.mxu0 %v586
  %2728 = vmatprep.subr.mxu0 %v590
  %2729 = vmatpush1.msra.mxu0 %v589
  %2730 = vmatprep.subr.mxu0 %v593
  %2731 = vmatpush1.msra.mxu0 %v592
  %2732 = vmatprep.subr.mxu0 %v596
  %2733 = vmatpush1.msra.mxu0 %v595
  %2734 = vmatprep.subr.mxu0 %v599
  %2735 = vmatpush1.msra.mxu0 %v598
  %2736 = vmatprep.subr.mxu0 %v602
  %2737 = vmatpush1.msra.mxu0 %v601
  %2738 = vmatprep.subr.mxu0 %v605
  %2739 = vmatpush1.msra.mxu0 %v604
  %2740 = vmatprep.subr.mxu0 %v608
  %2741 = vmatpush1.msra.mxu0 %v607
  %2742 = vmatprep.subr.mxu0 %v611
  %2743 = vmatpush1.msra.mxu0 %v610
  %2744 = vmatprep.subr.mxu0 %v614
  %2745 = vmatpush1.msra.mxu0 %v613
  %2746 = vmatprep.subr.mxu0 %v617
  %2747 = vmatpush1.msra.mxu0 %v616
  %2748 = vmatprep.subr.mxu0 %v620
  %2749 = vmatpush1.msra.mxu0 %v619
  %2750 = vmatprep.subr.mxu0 0.0
  %2751 = vmatpush1.msra.mxu0 0.0
  %2752 = vmatprep.subr.mxu0 0.0
  %2753 = vmatpush1.msra.mxu0 0.0
  %2754 = vmatprep.subr.mxu0 0.0
  %2755 = vmatpush1.msra.mxu0 0.0
  %2756 = vmatprep.subr.mxu0 0.0
  %2757 = vmatpush1.msra.mxu0 0.0
  %2758 = vmatprep.subr.mxu0 0.0
  %2759 = vmatpush1.msra.mxu0 0.0
  %2760 = vmatprep.subr.mxu0 0.0
  %2761 = vmatpush1.msra.mxu0 0.0
  %2762 = vmatprep.subr.mxu0 0.0
  %2763 = vmatpush1.msra.mxu0 0.0
  %2764 = vmatprep.subr.mxu0 0.0
  %2765 = vmatpush1.msra.mxu0 0.0
  %2766 = vmatprep.subr.mxu0 0.0
  %2767 = vmatpush1.msra.mxu0 0.0
  %2768 = vmatprep.subr.mxu0 0.0
  %2769 = vmatpush1.msra.mxu0 0.0
  %2770 = vmatprep.subr.mxu0 0.0
  %2771 = vmatpush1.msra.mxu0 0.0
  %2772 = vmatprep.subr.mxu0 0.0
  %2773 = vmatpush1.msra.mxu0 0.0
  %2774 = vmatprep.subr.mxu0 0.0
  %2775 = vmatpush1.msra.mxu0 0.0
  %2776 = vmatprep.subr.mxu0 0.0
  %2777 = vmatpush1.msra.mxu0 0.0
  %2778 = vmatprep.subr.mxu0 0.0
  %2779 = vmatpush1.msra.mxu0 0.0
  %2780 = vmatprep.subr.mxu0 0.0
  %2781 = vmatpush1.msra.mxu0 0.0
  %2782 = vmatprep.mubr.f32.mxu0 0.0
  %2783 = vmatmul.mubr.f32.gmra.mrb[0].mxu0 %v2552
  %v2784 = vpop.f32.mrb[0].mxu0
  %v2785 = vadd.f32 0.0, %v2784
  %v2786 = vpop.f32.mrb[0].mxu0
  %v2787 = vadd.f32 0.0, %v2786
  %2788 = vdwg.mxu0
  %2789 = vmatprep.subr.mxu0 0.0
  %2790 = vmatpush1.msra.mxu0 %v576
  %2791 = vmatprep.subr.mxu0 0.0
  %2792 = vmatpush1.msra.mxu0 %v579
  %2793 = vmatprep.subr.mxu0 0.0
  %2794 = vmatpush1.msra.mxu0 %v582
  %2795 = vmatprep.subr.mxu0 0.0
  %2796 = vmatpush1.msra.mxu0 %v585
  %2797 = vmatprep.subr.mxu0 0.0
  %2798 = vmatpush1.msra.mxu0 %v588
  %2799 = vmatprep.subr.mxu0 0.0
  %2800 = vmatpush1.msra.mxu0 %v591
  %2801 = vmatprep.subr.mxu0 0.0
  %2802 = vmatpush1.msra.mxu0 %v594
  %2803 = vmatprep.subr.mxu0 0.0
  %2804 = vmatpush1.msra.mxu0 %v597
  %2805 = vmatprep.subr.mxu0 0.0
  %2806 = vmatpush1.msra.mxu0 %v600
  %2807 = vmatprep.subr.mxu0 0.0
  %2808 = vmatpush1.msra.mxu0 %v603
  %2809 = vmatprep.subr.mxu0 0.0
  %2810 = vmatpush1.msra.mxu0 %v606
  %2811 = vmatprep.subr.mxu0 0.0
  %2812 = vmatpush1.msra.mxu0 %v609
  %2813 = vmatprep.subr.mxu0 0.0
  %2814 = vmatpush1.msra.mxu0 %v612
  %2815 = vmatprep.subr.mxu0 0.0
  %2816 = vmatpush1.msra.mxu0 %v615
  %2817 = vmatprep.subr.mxu0 0.0
  %2818 = vmatpush1.msra.mxu0 %v618
  %2819 = vmatprep.subr.mxu0 0.0
  %2820 = vmatpush1.msra.mxu0 %v621
  %2821 = vmatprep.subr.mxu0 0.0
  %2822 = vmatpush1.msra.mxu0 0.0
  %2823 = vmatprep.subr.mxu0 0.0
  %2824 = vmatpush1.msra.mxu0 0.0
  %2825 = vmatprep.subr.mxu0 0.0
  %2826 = vmatpush1.msra.mxu0 0.0
  %2827 = vmatprep.subr.mxu0 0.0
  %2828 = vmatpush1.msra.mxu0 0.0
  %2829 = vmatprep.subr.mxu0 0.0
  %2830 = vmatpush1.msra.mxu0 0.0
  %2831 = vmatprep.subr.mxu0 0.0
  %2832 = vmatpush1.msra.mxu0 0.0
  %2833 = vmatprep.subr.mxu0 0.0
  %2834 = vmatpush1.msra.mxu0 0.0
  %2835 = vmatprep.subr.mxu0 0.0
  %2836 = vmatpush1.msra.mxu0 0.0
  %2837 = vmatprep.subr.mxu0 0.0
  %2838 = vmatpush1.msra.mxu0 0.0
  %2839 = vmatprep.subr.mxu0 0.0
  %2840 = vmatpush1.msra.mxu0 0.0
  %2841 = vmatprep.subr.mxu0 0.0
  %2842 = vmatpush1.msra.mxu0 0.0
  %2843 = vmatprep.subr.mxu0 0.0
  %2844 = vmatpush1.msra.mxu0 0.0
  %2845 = vmatprep.subr.mxu0 0.0
  %2846 = vmatpush1.msra.mxu0 0.0
  %2847 = vmatprep.subr.mxu0 0.0
  %2848 = vmatpush1.msra.mxu0 0.0
  %2849 = vmatprep.subr.mxu0 0.0
  %2850 = vmatpush1.msra.mxu0 0.0
  %2851 = vmatprep.subr.mxu0 0.0
  %2852 = vmatpush1.msra.mxu0 0.0
  %2853 = vmatprep.mubr.f32.mxu0 0.0
  %2854 = vmatmul.mubr.f32.gmra.mrb[0].mxu0 %v2552
  %v2855 = vpop.f32.mrb[0].mxu0
  %v2856 = vadd.f32 0.0, %v2855
  %v2857 = vpop.f32.mrb[0].mxu0
  %2858 = vdwg.mxu0
  %v2859 = vadd.f32 %v2715, %v2785
  %v2860 = vxor.u32 %v2859, 2147483648
  %v2861 = vmul.f32 %v2860, 1.442695
  %v2862 = vpow.pop %v2861
  %v2863 = vadd.f32 %v2862, 1.0
  %v2864 = vrcp.pop %v2863
  %v2865 = vmul.f32 1.0, %v2864
  %v2866 = vadd.f32 %v2716, %v2787
  %v2867 = vxor.u32 %v2866, 2147483648
  %v2868 = vmul.f32 %v2867, 1.442695
  %v2869 = vpow.pop %v2868
  %v2870 = vadd.f32 %v2869, 1.0
  %v2871 = vrcp.pop %v2870
  %v2872 = vmul.f32 1.0, %v2871
  %v2873 = vadd.f32 %v2856, %v545
  %v2874 = vmul.f32 %v2865, %v2873
  %v2875 = vadd.f32 %v2717, %v2874
  %v2876 = vtanh.pop %v2875
  %v2877 = vsub.f32 1.0, %v2872
  %v2878 = vmul.f32 %v2877, %v2876
  %v2879 = vmul.f32 %v2872, %v2552
  %v2880 = vadd.f32 %v2878, %v2879
  %2881 = vmatprep.subr.mxu0 %v786
  %2882 = vmatpush1.msra.mxu0 %v785
  %2883 = vmatprep.subr.mxu0 %v790
  %2884 = vmatpush1.msra.mxu0 %v789
  %2885 = vmatprep.subr.mxu0 %v794
  %2886 = vmatpush1.msra.mxu0 %v793
  %2887 = vmatprep.subr.mxu0 %v798
  %2888 = vmatpush1.msra.mxu0 %v797
  %2889 = vmatprep.subr.mxu0 %v802
  %2890 = vmatpush1.msra.mxu0 %v801
  %2891 = vmatprep.subr.mxu0 %v806
  %2892 = vmatpush1.msra.mxu0 %v805
  %2893 = vmatprep.subr.mxu0 %v810
  %2894 = vmatpush1.msra.mxu0 %v809
  %2895 = vmatprep.subr.mxu0 %v814
  %2896 = vmatpush1.msra.mxu0 %v813
  %2897 = vmatprep.subr.mxu0 %v818
  %2898 = vmatpush1.msra.mxu0 %v817
  %2899 = vmatprep.subr.mxu0 %v822
  %2900 = vmatpush1.msra.mxu0 %v821
  %2901 = vmatprep.subr.mxu0 %v826
  %2902 = vmatpush1.msra.mxu0 %v825
  %2903 = vmatprep.subr.mxu0 %v830
  %2904 = vmatpush1.msra.mxu0 %v829
  %2905 = vmatprep.subr.mxu0 %v834
  %2906 = vmatpush1.msra.mxu0 %v833
  %2907 = vmatprep.subr.mxu0 %v838
  %2908 = vmatpush1.msra.mxu0 %v837
  %2909 = vmatprep.subr.mxu0 %v842
  %2910 = vmatpush1.msra.mxu0 %v841
  %2911 = vmatprep.subr.mxu0 %v846
  %2912 = vmatpush1.msra.mxu0 %v845
  %2913 = vmatprep.subr.mxu0 %v850
  %2914 = vmatpush1.msra.mxu0 %v849
  %2915 = vmatprep.subr.mxu0 %v854
  %2916 = vmatpush1.msra.mxu0 %v853
  %2917 = vmatprep.subr.mxu0 %v858
  %2918 = vmatpush1.msra.mxu0 %v857
  %2919 = vmatprep.subr.mxu0 %v862
  %2920 = vmatpush1.msra.mxu0 %v861
  %2921 = vmatprep.subr.mxu0 %v866
  %2922 = vmatpush1.msra.mxu0 %v865
  %2923 = vmatprep.subr.mxu0 %v870
  %2924 = vmatpush1.msra.mxu0 %v869
  %2925 = vmatprep.subr.mxu0 %v874
  %2926 = vmatpush1.msra.mxu0 %v873
  %2927 = vmatprep.subr.mxu0 %v878
  %2928 = vmatpush1.msra.mxu0 %v877
  %2929 = vmatprep.subr.mxu0 %v882
  %2930 = vmatpush1.msra.mxu0 %v881
  %2931 = vmatprep.subr.mxu0 %v886
  %2932 = vmatpush1.msra.mxu0 %v885
  %2933 = vmatprep.subr.mxu0 %v890
  %2934 = vmatpush1.msra.mxu0 %v889
  %2935 = vmatprep.subr.mxu0 %v894
  %2936 = vmatpush1.msra.mxu0 %v893
  %2937 = vmatprep.subr.mxu0 %v898
  %2938 = vmatpush1.msra.mxu0 %v897
  %2939 = vmatprep.subr.mxu0 %v902
  %2940 = vmatpush1.msra.mxu0 %v901
  %2941 = vmatprep.subr.mxu0 %v906
  %2942 = vmatpush1.msra.mxu0 %v905
  %2943 = vmatprep.subr.mxu0 %v910
  %2944 = vmatpush1.msra.mxu0 %v909
  %2945 = vmatprep.mubr.f32.mxu0 %v2713
  %2946 = vmatmul.mubr.f32.gmra.mrb[0].mxu0 %v2880
  %v2947 = vpop.f32.mrb[0].mxu0
  %v2948 = vadd.f32 %v552, %v2947
  %v2949 = vpop.f32.mrb[0].mxu0
  %v2950 = vadd.f32 %v556, %v2949
  %2951 = vdwg.mxu0
  %2952 = vmatprep.subr.mxu0 %v788
  %2953 = vmatpush1.msra.mxu0 %v787
  %2954 = vmatprep.subr.mxu0 %v792
  %2955 = vmatpush1.msra.mxu0 %v791
  %2956 = vmatprep.subr.mxu0 %v796
  %2957 = vmatpush1.msra.mxu0 %v795
  %2958 = vmatprep.subr.mxu0 %v800
  %2959 = vmatpush1.msra.mxu0 %v799
  %2960 = vmatprep.subr.mxu0 %v804
  %2961 = vmatpush1.msra.mxu0 %v803
  %2962 = vmatprep.subr.mxu0 %v808
  %2963 = vmatpush1.msra.mxu0 %v807
  %2964 = vmatprep.subr.mxu0 %v812
  %2965 = vmatpush1.msra.mxu0 %v811
  %2966 = vmatprep.subr.mxu0 %v816
  %2967 = vmatpush1.msra.mxu0 %v815
  %2968 = vmatprep.subr.mxu0 %v820
  %2969 = vmatpush1.msra.mxu0 %v819
  %2970 = vmatprep.subr.mxu0 %v824
  %2971 = vmatpush1.msra.mxu0 %v823
  %2972 = vmatprep.subr.mxu0 %v828
  %2973 = vmatpush1.msra.mxu0 %v827
  %2974 = vmatprep.subr.mxu0 %v832
  %2975 = vmatpush1.msra.mxu0 %v831
  %2976 = vmatprep.subr.mxu0 %v836
  %2977 = vmatpush1.msra.mxu0 %v835
  %2978 = vmatprep.subr.mxu0 %v840
  %2979 = vmatpush1.msra.mxu0 %v839
  %2980 = vmatprep.subr.mxu0 %v844
  %2981 = vmatpush1.msra.mxu0 %v843
  %2982 = vmatprep.subr.mxu0 %v848
  %2983 = vmatpush1.msra.mxu0 %v847
  %2984 = vmatprep.subr.mxu0 %v852
  %2985 = vmatpush1.msra.mxu0 %v851
  %2986 = vmatprep.subr.mxu0 %v856
  %2987 = vmatpush1.msra.mxu0 %v855
  %2988 = vmatprep.subr.mxu0 %v860
  %2989 = vmatpush1.msra.mxu0 %v859
  %2990 = vmatprep.subr.mxu0 %v864
  %2991 = vmatpush1.msra.mxu0 %v863
  %2992 = vmatprep.subr.mxu0 %v868
  %2993 = vmatpush1.msra.mxu0 %v867
  %2994 = vmatprep.subr.mxu0 %v872
  %2995 = vmatpush1.msra.mxu0 %v871
  %2996 = vmatprep.subr.mxu0 %v876
  %2997 = vmatpush1.msra.mxu0 %v875
  %2998 = vmatprep.subr.mxu0 %v880
  %2999 = vmatpush1.msra.mxu0 %v879
  %3000 = vmatprep.subr.mxu0 %v884
  %3001 = vmatpush1.msra.mxu0 %v883
  %3002 = vmatprep.subr.mxu0 %v888
  %3003 = vmatpush1.msra.mxu0 %v887
  %3004 = vmatprep.subr.mxu0 %v892
  %3005 = vmatpush1.msra.mxu0 %v891
  %3006 = vmatprep.subr.mxu0 %v896
  %3007 = vmatpush1.msra.mxu0 %v895
  %3008 = vmatprep.subr.mxu0 %v900
  %3009 = vmatpush1.msra.mxu0 %v899
  %3010 = vmatprep.subr.mxu0 %v904
  %3011 = vmatpush1.msra.mxu0 %v903
  %3012 = vmatprep.subr.mxu0 %v908
  %3013 = vmatpush1.msra.mxu0 %v907
  %3014 = vmatprep.subr.mxu0 %v912
  %3015 = vmatpush1.msra.mxu0 %v911
  %3016 = vmatprep.mubr.f32.mxu0 %v2713
  %3017 = vmatmul.mubr.f32.gmra.mrb[0].mxu0 %v2880
  %v3018 = vpop.f32.mrb[0].mxu0
  %v3019 = vadd.f32 %v560, %v3018
  %v3020 = vpop.f32.mrb[0].mxu0
  %v3021 = vadd.f32 %v564, %v3020
  %3022 = vdwg.mxu0
  %v3023 = vxor.u32 %v2948, 2147483648
  %v3024 = vmul.f32 %v3023, 1.442695
  %v3025 = vpow.pop %v3024
  %v3026 = vadd.f32 %v3025, 1.0
  %v3027 = vrcp.pop %v3026
  %v3028 = vmul.f32 1.0, %v3027
  %v3029 = vxor.u32 %v2950, 2147483648
  %v3030 = vmul.f32 %v3029, 1.442695
  %v3031 = vpow.pop %v3030
  %v3032 = vadd.f32 %v3031, 1.0
  %v3033 = vrcp.pop %v3032
  %v3034 = vmul.f32 1.0, %v3033
  %v3035 = vmul.f32 %v3028, %v3021
  %v3036 = vadd.f32 %v3019, %v3035
  %v3037 = vtanh.pop %v3036
  %v3038 = vsub.f32 1.0, %v3034
  %v3039 = vmul.f32 %v3038, %v3037
  %v3040 = vmul.f32 %v3034, %v2713
  %v3041 = vadd.f32 %v3039, %v3040
  %s3042 = scalar_lea.vmem %s0, 168
  %v3043 = vld [vmem:[%s3042] sm:$0xff]
  %v3044 = vld [vmem:[%s3042 + $0x8] sm:$0xff]
  %v3045 = vld [vmem:[%s3042 + $0x10] sm:$0xff]
  %3046 = vmatprep.subr.mxu0 %v575
  %3047 = vmatpush1.msra.mxu0 %v574
  %3048 = vmatprep.subr.mxu0 %v578
  %3049 = vmatpush1.msra.mxu0 %v577
  %3050 = vmatprep.subr.mxu0 %v581
  %3051 = vmatpush1.msra.mxu0 %v580
  %3052 = vmatprep.subr.mxu0 %v584
  %3053 = vmatpush1.msra.mxu0 %v583
  %3054 = vmatprep.subr.mxu0 %v587
  %3055 = vmatpush1.msra.mxu0 %v586
  %3056 = vmatprep.subr.mxu0 %v590
  %3057 = vmatpush1.msra.mxu0 %v589
  %3058 = vmatprep.subr.mxu0 %v593
  %3059 = vmatpush1.msra.mxu0 %v592
  %3060 = vmatprep.subr.mxu0 %v596
  %3061 = vmatpush1.msra.mxu0 %v595
  %3062 = vmatprep.subr.mxu0 %v599
  %3063 = vmatpush1.msra.mxu0 %v598
  %3064 = vmatprep.subr.mxu0 %v602
  %3065 = vmatpush1.msra.mxu0 %v601
  %3066 = vmatprep.subr.mxu0 %v605
  %3067 = vmatpush1.msra.mxu0 %v604
  %3068 = vmatprep.subr.mxu0 %v608
  %3069 = vmatpush1.msra.mxu0 %v607
  %3070 = vmatprep.subr.mxu0 %v611
  %3071 = vmatpush1.msra.mxu0 %v610
  %3072 = vmatprep.subr.mxu0 %v614
  %3073 = vmatpush1.msra.mxu0 %v613
  %3074 = vmatprep.subr.mxu0 %v617
  %3075 = vmatpush1.msra.mxu0 %v616
  %3076 = vmatprep.subr.mxu0 %v620
  %3077 = vmatpush1.msra.mxu0 %v619
  %3078 = vmatprep.subr.mxu0 0.0
  %3079 = vmatpush1.msra.mxu0 0.0
  %3080 = vmatprep.subr.mxu0 0.0
  %3081 = vmatpush1.msra.mxu0 0.0
  %3082 = vmatprep.subr.mxu0 0.0
  %3083 = vmatpush1.msra.mxu0 0.0
  %3084 = vmatprep.subr.mxu0 0.0
  %3085 = vmatpush1.msra.mxu0 0.0
  %3086 = vmatprep.subr.mxu0 0.0
  %3087 = vmatpush1.msra.mxu0 0.0
  %3088 = vmatprep.subr.mxu0 0.0
  %3089 = vmatpush1.msra.mxu0 0.0
  %3090 = vmatprep.subr.mxu0 0.0
  %3091 = vmatpush1.msra.mxu0 0.0
  %3092 = vmatprep.subr.mxu0 0.0
  %3093 = vmatpush1.msra.mxu0 0.0
  %3094 = vmatprep.subr.mxu0 0.0
  %3095 = vmatpush1.msra.mxu0 0.0
  %3096 = vmatprep.subr.mxu0 0.0
  %3097 = vmatpush1.msra.mxu0 0.0
  %3098 = vmatprep.subr.mxu0 0.0
  %3099 = vmatpush1.msra.mxu0 0.0
  %3100 = vmatprep.subr.mxu0 0.0
  %3101 = vmatpush1.msra.mxu0 0.0
  %3102 = vmatprep.subr.mxu0 0.0
  %3103 = vmatpush1.msra.mxu0 0.0
  %3104 = vmatprep.subr.mxu0 0.0
  %3105 = vmatpush1.msra.mxu0 0.0
  %3106 = vmatprep.subr.mxu0 0.0
  %3107 = vmatpush1.msra.mxu0 0.0
  %3108 = vmatprep.subr.mxu0 0.0
  %3109 = vmatpush1.msra.mxu0 0.0
  %3110 = vmatprep.mubr.f32.mxu0 0.0
  %3111 = vmatmul.mubr.f32.gmra.mrb[0].mxu0 %v2880
  %v3112 = vpop.f32.mrb[0].mxu0
  %v3113 = vadd.f32 0.0, %v3112
  %v3114 = vpop.f32.mrb[0].mxu0
  %v3115 = vadd.f32 0.0, %v3114
  %3116 = vdwg.mxu0
  %3117 = vmatprep.subr.mxu0 0.0
  %3118 = vmatpush1.msra.mxu0 %v576
  %3119 = vmatprep.subr.mxu0 0.0
  %3120 = vmatpush1.msra.mxu0 %v579
  %3121 = vmatprep.subr.mxu0 0.0
  %3122 = vmatpush1.msra.mxu0 %v582
  %3123 = vmatprep.subr.mxu0 0.0
  %3124 = vmatpush1.msra.mxu0 %v585
  %3125 = vmatprep.subr.mxu0 0.0
  %3126 = vmatpush1.msra.mxu0 %v588
  %3127 = vmatprep.subr.mxu0 0.0
  %3128 = vmatpush1.msra.mxu0 %v591
  %3129 = vmatprep.subr.mxu0 0.0
  %3130 = vmatpush1.msra.mxu0 %v594
  %3131 = vmatprep.subr.mxu0 0.0
  %3132 = vmatpush1.msra.mxu0 %v597
  %3133 = vmatprep.subr.mxu0 0.0
  %3134 = vmatpush1.msra.mxu0 %v600
  %3135 = vmatprep.subr.mxu0 0.0
  %3136 = vmatpush1.msra.mxu0 %v603
  %3137 = vmatprep.subr.mxu0 0.0
  %3138 = vmatpush1.msra.mxu0 %v606
  %3139 = vmatprep.subr.mxu0 0.0
  %3140 = vmatpush1.msra.mxu0 %v609
  %3141 = vmatprep.subr.mxu0 0.0
  %3142 = vmatpush1.msra.mxu0 %v612
  %3143 = vmatprep.subr.mxu0 0.0
  %3144 = vmatpush1.msra.mxu0 %v615
  %3145 = vmatprep.subr.mxu0 0.0
  %3146 = vmatpush1.msra.mxu0 %v618
  %3147 = vmatprep.subr.mxu0 0.0
  %3148 = vmatpush1.msra.mxu0 %v621
  %3149 = vmatprep.subr.mxu0 0.0
  %3150 = vmatpush1.msra.mxu0 0.0
  %3151 = vmatprep.subr.mxu0 0.0
  %3152 = vmatpush1.msra.mxu0 0.0
  %3153 = vmatprep.subr.mxu0 0.0
  %3154 = vmatpush1.msra.mxu0 0.0
  %3155 = vmatprep.subr.mxu0 0.0
  %3156 = vmatpush1.msra.mxu0 0.0
  %3157 = vmatprep.subr.mxu0 0.0
  %3158 = vmatpush1.msra.mxu0 0.0
  %3159 = vmatprep.subr.mxu0 0.0
  %3160 = vmatpush1.msra.mxu0 0.0
  %3161 = vmatprep.subr.mxu0 0.0
  %3162 = vmatpush1.msra.mxu0 0.0
  %3163 = vmatprep.subr.mxu0 0.0
  %3164 = vmatpush1.msra.mxu0 0.0
  %3165 = vmatprep.subr.mxu0 0.0
  %3166 = vmatpush1.msra.mxu0 0.0
  %3167 = vmatprep.subr.mxu0 0.0
  %3168 = vmatpush1.msra.mxu0 0.0
  %3169 = vmatprep.subr.mxu0 0.0
  %3170 = vmatpush1.msra.mxu0 0.0
  %3171 = vmatprep.subr.mxu0 0.0
  %3172 = vmatpush1.msra.mxu0 0.0
  %3173 = vmatprep.subr.mxu0 0.0
  %3174 = vmatpush1.msra.mxu0 0.0
  %3175 = vmatprep.subr.mxu0 0.0
  %3176 = vmatpush1.msra.mxu0 0.0
  %3177 = vmatprep.subr.mxu0 0.0
  %3178 = vmatpush1.msra.mxu0 0.0
  %3179 = vmatprep.subr.mxu0 0.0
  %3180 = vmatpush1.msra.mxu0 0.0
  %3181 = vmatprep.mubr.f32.mxu0 0.0
  %3182 = vmatmul.mubr.f32.gmra.mrb[0].mxu0 %v2880
  %v3183 = vpop.f32.mrb[0].mxu0
  %v3184 = vadd.f32 0.0, %v3183
  %v3185 = vpop.f32.mrb[0].mxu0
  %3186 = vdwg.mxu0
  %v3187 = vadd.f32 %v3043, %v3113
  %v3188 = vxor.u32 %v3187, 2147483648
  %v3189 = vmul.f32 %v3188, 1.442695
  %v3190 = vpow.pop %v3189
  %v3191 = vadd.f32 %v3190, 1.0
  %v3192 = vrcp.pop %v3191
  %v3193 = vmul.f32 1.0, %v3192
  %v3194 = vadd.f32 %v3044, %v3115
  %v3195 = vxor.u32 %v3194, 2147483648
  %v3196 = vmul.f32 %v3195, 1.442695
  %v3197 = vpow.pop %v3196
  %v3198 = vadd.f32 %v3197, 1.0
  %v3199 = vrcp.pop %v3198
  %v3200 = vmul.f32 1.0, %v3199
  %v3201 = vadd.f32 %v3184, %v545
  %v3202 = vmul.f32 %v3193, %v3201
  %v3203 = vadd.f32 %v3045, %v3202
  %v3204 = vtanh.pop %v3203
  %v3205 = vsub.f32 1.0, %v3200
  %v3206 = vmul.f32 %v3205, %v3204
  %v3207 = vmul.f32 %v3200, %v2880
  %v3208 = vadd.f32 %v3206, %v3207
  %3209 = vmatprep.subr.mxu0 %v786
  %3210 = vmatpush1.msra.mxu0 %v785
  %3211 = vmatprep.subr.mxu0 %v790
  %3212 = vmatpush1.msra.mxu0 %v789
  %3213 = vmatprep.subr.mxu0 %v794
  %3214 = vmatpush1.msra.mxu0 %v793
  %3215 = vmatprep.subr.mxu0 %v798
  %3216 = vmatpush1.msra.mxu0 %v797
  %3217 = vmatprep.subr.mxu0 %v802
  %3218 = vmatpush1.msra.mxu0 %v801
  %3219 = vmatprep.subr.mxu0 %v806
  %3220 = vmatpush1.msra.mxu0 %v805
  %3221 = vmatprep.subr.mxu0 %v810
  %3222 = vmatpush1.msra.mxu0 %v809
  %3223 = vmatprep.subr.mxu0 %v814
  %3224 = vmatpush1.msra.mxu0 %v813
  %3225 = vmatprep.subr.mxu0 %v818
  %3226 = vmatpush1.msra.mxu0 %v817
  %3227 = vmatprep.subr.mxu0 %v822
  %3228 = vmatpush1.msra.mxu0 %v821
  %3229 = vmatprep.subr.mxu0 %v826
  %3230 = vmatpush1.msra.mxu0 %v825
  %3231 = vmatprep.subr.mxu0 %v830
  %3232 = vmatpush1.msra.mxu0 %v829
  %3233 = vmatprep.subr.mxu0 %v834
  %3234 = vmatpush1.msra.mxu0 %v833
  %3235 = vmatprep.subr.mxu0 %v838
  %3236 = vmatpush1.msra.mxu0 %v837
  %3237 = vmatprep.subr.mxu0 %v842
  %3238 = vmatpush1.msra.mxu0 %v841
  %3239 = vmatprep.subr.mxu0 %v846
  %3240 = vmatpush1.msra.mxu0 %v845
  %3241 = vmatprep.subr.mxu0 %v850
  %3242 = vmatpush1.msra.mxu0 %v849
  %3243 = vmatprep.subr.mxu0 %v854
  %3244 = vmatpush1.msra.mxu0 %v853
  %3245 = vmatprep.subr.mxu0 %v858
  %3246 = vmatpush1.msra.mxu0 %v857
  %3247 = vmatprep.subr.mxu0 %v862
  %3248 = vmatpush1.msra.mxu0 %v861
  %3249 = vmatprep.subr.mxu0 %v866
  %3250 = vmatpush1.msra.mxu0 %v865
  %3251 = vmatprep.subr.mxu0 %v870
  %3252 = vmatpush1.msra.mxu0 %v869
  %3253 = vmatprep.subr.mxu0 %v874
  %3254 = vmatpush1.msra.mxu0 %v873
  %3255 = vmatprep.subr.mxu0 %v878
  %3256 = vmatpush1.msra.mxu0 %v877
  %3257 = vmatprep.subr.mxu0 %v882
  %3258 = vmatpush1.msra.mxu0 %v881
  %3259 = vmatprep.subr.mxu0 %v886
  %3260 = vmatpush1.msra.mxu0 %v885
  %3261 = vmatprep.subr.mxu0 %v890
  %3262 = vmatpush1.msra.mxu0 %v889
  %3263 = vmatprep.subr.mxu0 %v894
  %3264 = vmatpush1.msra.mxu0 %v893
  %3265 = vmatprep.subr.mxu0 %v898
  %3266 = vmatpush1.msra.mxu0 %v897
  %3267 = vmatprep.subr.mxu0 %v902
  %3268 = vmatpush1.msra.mxu0 %v901
  %3269 = vmatprep.subr.mxu0 %v906
  %3270 = vmatpush1.msra.mxu0 %v905
  %3271 = vmatprep.subr.mxu0 %v910
  %3272 = vmatpush1.msra.mxu0 %v909
  %3273 = vmatprep.mubr.f32.mxu0 %v3041
  %3274 = vmatmul.mubr.f32.gmra.mrb[0].mxu0 %v3208
  %v3275 = vpop.f32.mrb[0].mxu0
  %v3276 = vadd.f32 %v552, %v3275
  %v3277 = vpop.f32.mrb[0].mxu0
  %v3278 = vadd.f32 %v556, %v3277
  %3279 = vdwg.mxu0
  %3280 = vmatprep.subr.mxu0 %v788
  %3281 = vmatpush1.msra.mxu0 %v787
  %3282 = vmatprep.subr.mxu0 %v792
  %3283 = vmatpush1.msra.mxu0 %v791
  %3284 = vmatprep.subr.mxu0 %v796
  %3285 = vmatpush1.msra.mxu0 %v795
  %3286 = vmatprep.subr.mxu0 %v800
  %3287 = vmatpush1.msra.mxu0 %v799
  %3288 = vmatprep.subr.mxu0 %v804
  %3289 = vmatpush1.msra.mxu0 %v803
  %3290 = vmatprep.subr.mxu0 %v808
  %3291 = vmatpush1.msra.mxu0 %v807
  %3292 = vmatprep.subr.mxu0 %v812
  %3293 = vmatpush1.msra.mxu0 %v811
  %3294 = vmatprep.subr.mxu0 %v816
  %3295 = vmatpush1.msra.mxu0 %v815
  %3296 = vmatprep.subr.mxu0 %v820
  %3297 = vmatpush1.msra.mxu0 %v819
  %3298 = vmatprep.subr.mxu0 %v824
  %3299 = vmatpush1.msra.mxu0 %v823
  %3300 = vmatprep.subr.mxu0 %v828
  %3301 = vmatpush1.msra.mxu0 %v827
  %3302 = vmatprep.subr.mxu0 %v832
  %3303 = vmatpush1.msra.mxu0 %v831
  %3304 = vmatprep.subr.mxu0 %v836
  %3305 = vmatpush1.msra.mxu0 %v835
  %3306 = vmatprep.subr.mxu0 %v840
  %3307 = vmatpush1.msra.mxu0 %v839
  %3308 = vmatprep.subr.mxu0 %v844
  %3309 = vmatpush1.msra.mxu0 %v843
  %3310 = vmatprep.subr.mxu0 %v848
  %3311 = vmatpush1.msra.mxu0 %v847
  %3312 = vmatprep.subr.mxu0 %v852
  %3313 = vmatpush1.msra.mxu0 %v851
  %3314 = vmatprep.subr.mxu0 %v856
  %3315 = vmatpush1.msra.mxu0 %v855
  %3316 = vmatprep.subr.mxu0 %v860
  %3317 = vmatpush1.msra.mxu0 %v859
  %3318 = vmatprep.subr.mxu0 %v864
  %3319 = vmatpush1.msra.mxu0 %v863
  %3320 = vmatprep.subr.mxu0 %v868
  %3321 = vmatpush1.msra.mxu0 %v867
  %3322 = vmatprep.subr.mxu0 %v872
  %3323 = vmatpush1.msra.mxu0 %v871
  %3324 = vmatprep.subr.mxu0 %v876
  %3325 = vmatpush1.msra.mxu0 %v875
  %3326 = vmatprep.subr.mxu0 %v880
  %3327 = vmatpush1.msra.mxu0 %v879
  %3328 = vmatprep.subr.mxu0 %v884
  %3329 = vmatpush1.msra.mxu0 %v883
  %3330 = vmatprep.subr.mxu0 %v888
  %3331 = vmatpush1.msra.mxu0 %v887
  %3332 = vmatprep.subr.mxu0 %v892
  %3333 = vmatpush1.msra.mxu0 %v891
  %3334 = vmatprep.subr.mxu0 %v896
  %3335 = vmatpush1.msra.mxu0 %v895
  %3336 = vmatprep.subr.mxu0 %v900
  %3337 = vmatpush1.msra.mxu0 %v899
  %3338 = vmatprep.subr.mxu0 %v904
  %3339 = vmatpush1.msra.mxu0 %v903
  %3340 = vmatprep.subr.mxu0 %v908
  %3341 = vmatpush1.msra.mxu0 %v907
  %3342 = vmatprep.subr.mxu0 %v912
  %3343 = vmatpush1.msra.mxu0 %v911
  %3344 = vmatprep.mubr.f32.mxu0 %v3041
  %3345 = vmatmul.mubr.f32.gmra.mrb[0].mxu0 %v3208
  %v3346 = vpop.f32.mrb[0].mxu0
  %v3347 = vadd.f32 %v560, %v3346
  %v3348 = vpop.f32.mrb[0].mxu0
  %v3349 = vadd.f32 %v564, %v3348
  %3350 = vdwg.mxu0
  %v3351 = vxor.u32 %v3276, 2147483648
  %v3352 = vmul.f32 %v3351, 1.442695
  %v3353 = vpow.pop %v3352
  %v3354 = vadd.f32 %v3353, 1.0
  %v3355 = vrcp.pop %v3354
  %v3356 = vmul.f32 1.0, %v3355
  %v3357 = vxor.u32 %v3278, 2147483648
  %v3358 = vmul.f32 %v3357, 1.442695
  %v3359 = vpow.pop %v3358
  %v3360 = vadd.f32 %v3359, 1.0
  %v3361 = vrcp.pop %v3360
  %v3362 = vmul.f32 1.0, %v3361
  %v3363 = vmul.f32 %v3356, %v3349
  %v3364 = vadd.f32 %v3347, %v3363
  %v3365 = vtanh.pop %v3364
  %v3366 = vsub.f32 1.0, %v3362
  %v3367 = vmul.f32 %v3366, %v3365
  %v3368 = vmul.f32 %v3362, %v3041
  %v3369 = vadd.f32 %v3367, %v3368
  %3370 = vst [vmem:[#allocation2] sm:$0xff] %v3208
  %3371 = vst [vmem:[#allocation3] sm:$0xff] %v3369
  // Predicated region
  $region124: #{gru_encoder_forward.1} parent=0 // pred_check
    %p3372 = pneg %p20
  $region125: #{gru_encoder_forward.1} parent=0 // pred_check_branch
    %3374 = sbr.rel (%p3372) target = $region127
  $region126: #{gru_encoder_forward.1} parent=0 // pred_region
    %s3375 = scalar_lea.sflag [#allocation7], 2
    %s3376 = smul.u32 128, 1
    %s3377 = sshll.u32 %s3376, 4
    %3378 = dma.done %s3375, %s3377
    %v3379 = vld [vmem:[#allocation6] sm:$0xff]
    %v3380 = vld [vmem:[#allocation6 + $0x8] sm:$0xff]
    %v3381 = vld [vmem:[#allocation6 + $0x10] sm:$0xff]
    %v3382 = vld [vmem:[#allocation6 + $0x18] sm:$0xff]
    %v3383 = vld [vmem:[#allocation6 + $0x20] sm:$0xff]
    %v3384 = vld [vmem:[#allocation6 + $0x28] sm:$0xff]
    %v3385 = vld [vmem:[#allocation6 + $0x30] sm:$0xff]
    %v3386 = vld [vmem:[#allocation6 + $0x38] sm:$0xff]
    %v3387 = vld [vmem:[#allocation6 + $0x40] sm:$0xff]
    %v3388 = vld [vmem:[#allocation6 + $0x48] sm:$0xff]
    %v3389 = vld [vmem:[#allocation6 + $0x50] sm:$0xff]
    %v3390 = vld [vmem:[#allocation6 + $0x58] sm:$0xff]
    %v3391 = vld [vmem:[#allocation6 + $0x60] sm:$0xff]
    %v3392 = vld [vmem:[#allocation6 + $0x68] sm:$0xff]
    %v3393 = vld [vmem:[#allocation6 + $0x70] sm:$0xff]
    %v3394 = vld [vmem:[#allocation6 + $0x78] sm:$0xff]
    %v3395 = vld [vmem:[%s6] sm:$0x1]
    %v3397 = vlaneseq
    %v3398 = vshrl.u32 %v3397, 7
    %v3399 = vsub.s32 0, %v3398
    %v3400 = vrot.slane %v3395, %v3399
    %3402 = vmatprep.subr.mxu0 0.0
    %3403 = vmatpush1.msra.mxu0 %v3379
    %3404 = vmatprep.subr.mxu0 0.0
    %3405 = vmatpush1.msra.mxu0 %v3380
    %3406 = vmatprep.subr.mxu0 0.0
    %3407 = vmatpush1.msra.mxu0 %v3381
    %3408 = vmatprep.subr.mxu0 0.0
    %3409 = vmatpush1.msra.mxu0 %v3382
    %3410 = vmatprep.subr.mxu0 0.0
    %3411 = vmatpush1.msra.mxu0 %v3383
    %3412 = vmatprep.subr.mxu0 0.0
    %3413 = vmatpush1.msra.mxu0 %v3384
    %3414 = vmatprep.subr.mxu0 0.0
    %3415 = vmatpush1.msra.mxu0 %v3385
    %3416 = vmatprep.subr.mxu0 0.0
    %3417 = vmatpush1.msra.mxu0 %v3386
    %3418 = vmatprep.subr.mxu0 0.0
    %3419 = vmatpush1.msra.mxu0 %v3387
    %3420 = vmatprep.subr.mxu0 0.0
    %3421 = vmatpush1.msra.mxu0 %v3388
    %3422 = vmatprep.subr.mxu0 0.0
    %3423 = vmatpush1.msra.mxu0 %v3389
    %3424 = vmatprep.subr.mxu0 0.0
    %3425 = vmatpush1.msra.mxu0 %v3390
    %3426 = vmatprep.subr.mxu0 0.0
    %3427 = vmatpush1.msra.mxu0 %v3391
    %3428 = vmatprep.subr.mxu0 0.0
    %3429 = vmatpush1.msra.mxu0 %v3392
    %3430 = vmatprep.subr.mxu0 0.0
    %3431 = vmatpush1.msra.mxu0 %v3393
    %3432 = vmatprep.subr.mxu0 0.0
    %3433 = vmatpush1.msra.mxu0 %v3394
    %3434 = vmatprep.subr.mxu0 0.0
    %3435 = vmatpush1.msra.mxu0 0.0
    %3436 = vmatprep.subr.mxu0 0.0
    %3437 = vmatpush1.msra.mxu0 0.0
    %3438 = vmatprep.subr.mxu0 0.0
    %3439 = vmatpush1.msra.mxu0 0.0
    %3440 = vmatprep.subr.mxu0 0.0
    %3441 = vmatpush1.msra.mxu0 0.0
    %3442 = vmatprep.subr.mxu0 0.0
    %3443 = vmatpush1.msra.mxu0 0.0
    %3444 = vmatprep.subr.mxu0 0.0
    %3445 = vmatpush1.msra.mxu0 0.0
    %3446 = vmatprep.subr.mxu0 0.0
    %3447 = vmatpush1.msra.mxu0 0.0
    %3448 = vmatprep.subr.mxu0 0.0
    %3449 = vmatpush1.msra.mxu0 0.0
    %3450 = vmatprep.subr.mxu0 0.0
    %3451 = vmatpush1.msra.mxu0 0.0
    %3452 = vmatprep.subr.mxu0 0.0
    %3453 = vmatpush1.msra.mxu0 0.0
    %3454 = vmatprep.subr.mxu0 0.0
    %3455 = vmatpush1.msra.mxu0 0.0
    %3456 = vmatprep.subr.mxu0 0.0
    %3457 = vmatpush1.msra.mxu0 0.0
    %3458 = vmatprep.subr.mxu0 0.0
    %3459 = vmatpush1.msra.mxu0 0.0
    %3460 = vmatprep.subr.mxu0 0.0
    %3461 = vmatpush1.msra.mxu0 0.0
    %3462 = vmatprep.subr.mxu0 0.0
    %3463 = vmatpush1.msra.mxu0 0.0
    %3464 = vmatprep.subr.mxu0 0.0
    %3465 = vmatpush1.msra.mxu0 0.0
    %3466 = vmatprep.mubr.f32.mxu0 0.0
    %3467 = vmatmul.mubr.f32.gmra.mrb[0].mxu0 %v3369
    %v3468 = vpop.f32.mrb[0].mxu0
    %v3469 = vadd.f32 %v3400, %v3468
    %v3470 = vpop.f32.mrb[0].mxu0
    %3471 = vdwg.mxu0
    %vm3472 = vcmask 31744
    %3473 = vst.msk [vmem:[%s7] sm:$0xff] %vm3472, %v3469
  $region127: #{gru_encoder_forward.1} parent=0 // pred_fallthru
    _
  // Predicated region
  $region128: #{gru_encoder_forward.1} parent=0 // pred_check
    _
  $region129: #{gru_encoder_forward.1} parent=0 // pred_check_branch
    %3475 = sbr.rel (0) target = $region131
  $region130: #{gru_encoder_forward.1} parent=0 // pred_region
    _
  $region131: #{gru_encoder_forward.1} parent=0 // pred_fallthru
    _
  // Predicated region
  $region132: #{gru_encoder_forward.1} parent=0 // pred_check
    _
  $region133: #{gru_encoder_forward.1} parent=0 // pred_check_branch
    %3477 = sbr.rel (0) target = $region135
  $region134: #{gru_encoder_forward.1} parent=0 // pred_region
    _
  $region135: #{gru_encoder_forward.1} parent=0 // pred_fallthru
    _
  %3478 = vsyncmov [#allocation7]
  %s3479 = vpop.sfrf %3478
  %p3480 = scmp.eq.s32.totalorder %s3479, 0
  %p3481 = pneg %p3480
  %3483 = shalt.err (%p3481)
  %s3484 = scalar_lea.sflag [#allocation7], 1
  %3485 = vsyncmov %s3484
  %s3486 = vpop.sfrf %3485
  %p3487 = scmp.eq.s32.totalorder %s3486, 0
  %p3488 = pneg %p3487
  %3490 = shalt.err (%p3488)
  %s3491 = scalar_lea.sflag [#allocation7], 2
  %3492 = vsyncmov %s3491
  %s3493 = vpop.sfrf %3492
  %p3494 = scmp.eq.s32.totalorder %s3493, 0
  %p3495 = pneg %p3494
  %3497 = shalt.err (%p3495)

</llo_original>
